<compile_context>
chip_gen: v7x
topology: tpu7x:2x2x1
jax: 0.10.0
libtpu: 0.0.40
codegen_flags: <defaults>
</compile_context>

<pallas_src>
import jax
import jax.numpy as jnp
from jax.experimental import pallas as pl
from jax.experimental.pallas import tpu as pltpu

NUM_FEATS = 4
HIDDEN = 32
BATCH = 2
SEQ = 8


# ---------------------------------------------------------------------------
# Pallas kernel: whole forward pass in one invocation (grid = ())
# ---------------------------------------------------------------------------
def crnn_disc_kernel(x_ref, hc0_ref, wx_ref, wh_ref, bfc_ref,
                     out_ref, lstm_ref, hc_ref):
    TB, F = x_ref.shape
    _, B, H = hc0_ref.shape
    T = TB // B

    # TODO(synk): nn.Dropout on the input and the inter-layer LSTM dropout
    #             (p=0.6) are training-mode only; eval mode is identity.

    # Block-diagonal placement mask for the fused fwd/rev hidden state:
    # rows 0:B -> [h_fwd | 0], rows B:2B -> [0 | h_rev].
    rows = jax.lax.broadcasted_iota(jnp.int32, (2 * B, 2 * H), 0)
    cols = jax.lax.broadcasted_iota(jnp.int32, (2 * B, 2 * H), 1)
    rsel = (rows < B).astype(jnp.float32)
    csel = (cols < H).astype(jnp.float32)
    dir_mask = rsel * csel + (1.0 - rsel) * (1.0 - csel)

    def to_block(h2b):                                      # (2B, H) -> (2B, 2H)
        return jnp.concatenate([h2b, h2b], axis=1) * dir_mask

    def fused_layer(prex, wh, h0f, h0r, c0f, c0r):
        # prex: (T*B, 8H) = x @ Wx + b, lanes [fwd gates 4H | rev gates 4H]
        # wh:   (2H, 4H) = [Wh_fwd ; Wh_rev], gate columns ordered i|f|o|g
        h2b = jnp.concatenate([h0f, h0r], axis=0)           # (2B, H)
        c2b = jnp.concatenate([c0f, c0r], axis=0)           # (2B, H)
        hblk = to_block(h2b)
        hs = []
        for s in range(T):
            fwd_x = prex[s * B:(s + 1) * B, 0:4 * H]                    # (B, 4H)
            rev_x = prex[(T - 1 - s) * B:(T - s) * B, 4 * H:8 * H]      # (B, 4H)
            pre = (jnp.concatenate([fwd_x, rev_x], axis=0)
                   + jnp.dot(hblk, wh, preferred_element_type=jnp.float32))
            sig = jax.nn.sigmoid(pre[:, 0:3 * H])           # one pass for i|f|o
            i = sig[:, 0:H]
            f = sig[:, H:2 * H]
            o = sig[:, 2 * H:3 * H]
            g = jnp.tanh(pre[:, 3 * H:4 * H])
            c2b = f * c2b + i * g
            h2b = o * jnp.tanh(c2b)
            hblk = to_block(h2b)
            hs.append(h2b)
        # Bidirectional output at time t: [fwd(t) | rev(t)].
        outs = [jnp.concatenate([hs[t][0:B], hs[T - 1 - t][B:2 * B]], axis=1)
                for t in range(T)]                          # each (B, 2H)
        return outs, hs[T - 1], c2b

    # -------- layer 0 (weights loaded just before use) --------
    x_all = x_ref[...]                                      # (T*B, F)
    wx0 = wx_ref[0:F, :]                                    # (F, 8H)
    prex0 = (jnp.dot(x_all, wx0, preferred_element_type=jnp.float32)
             + bfc_ref[0:1, :])                             # (T*B, 8H)
    wh0 = wh_ref[0:2 * H, :]                                # (2H, 4H)
    outs0, hn0, cn0 = fused_layer(prex0, wh0,
                                  hc0_ref[0], hc0_ref[1], hc0_ref[4], hc0_ref[5])
    out0_all = jnp.concatenate(outs0, axis=0)               # (T*B, 2H)

    # -------- layer 1 --------
    wx1 = wx_ref[8:8 + 2 * H, :]                            # (2H, 8H)
    prex1 = (jnp.dot(out0_all, wx1, preferred_element_type=jnp.float32)
             + bfc_ref[1:2, :])                             # (T*B, 8H)
    wh1 = wh_ref[2 * H:4 * H, :]                            # (2H, 4H)
    outs1, hn1, cn1 = fused_layer(prex1, wh1,
                                  hc0_ref[2], hc0_ref[3], hc0_ref[6], hc0_ref[7])

    # -------- lane-dense lstm_out slab: (T, B*2H) = (8, 128) --------
    lstm2d = jnp.concatenate(
        [jnp.concatenate([outs1[t][b:b + 1, :] for b in range(B)], axis=1)
         for t in range(T)], axis=0)
    lstm_ref[...] = lstm2d

    # -------- fc head: sigmoid(lstm @ fc_w + fc_b), mean over (time, feat) -----
    fcw = bfc_ref[2:3, 0:2 * H]                             # (1, 2H)
    fcb = bfc_ref[2:3, 2 * H:2 * H + 1]                     # (1, 1)
    fcw_tiled = jnp.concatenate([fcw] * B, axis=1)          # (1, B*2H)
    prod = lstm2d * fcw_tiled
    scores = jnp.concatenate(
        [jnp.sum(prod[:, b * 2 * H:(b + 1) * 2 * H], axis=1, keepdims=True)
         for b in range(B)], axis=1) + fcb                  # (T, B)
    probs = jax.nn.sigmoid(scores)
    out_ref[...] = jnp.sum(probs, axis=0, keepdims=True) * (1.0 / T)   # (1, B)

    # -------- packed h_n / c_n: row d = [h_n[d] (B*H) | c_n[d] (B*H)] ----------
    def flat_bh(m):                                         # (B, H) -> (1, B*H)
        return jnp.concatenate([m[b:b + 1, :] for b in range(B)], axis=1)

    hc_ref[...] = jnp.concatenate([
        jnp.concatenate([flat_bh(hn0[0:B]), flat_bh(cn0[0:B])], axis=1),
        jnp.concatenate([flat_bh(hn0[B:2 * B]), flat_bh(cn0[B:2 * B])], axis=1),
        jnp.concatenate([flat_bh(hn1[0:B]), flat_bh(cn1[0:B])], axis=1),
        jnp.concatenate([flat_bh(hn1[B:2 * B]), flat_bh(cn1[B:2 * B])], axis=1),
    ], axis=0)                                              # (4, 2*B*H)


# ---------------------------------------------------------------------------
# Wrapper: packs PyTorch-layout weights into 5 lane-dense slabs, one pallas_call.
# ---------------------------------------------------------------------------
@jax.jit
def discriminator_crnn_forward(note_seq, h0, c0, params):
    B, T, F = note_seq.shape
    H = HIDDEN

    x_flat = jnp.transpose(note_seq, (1, 0, 2)).reshape(T * B, F)   # (T*B, F)

    def reorder_cols(w):          # (in, 4H): PyTorch gate cols i,f,g,o -> i,f,o,g
        return jnp.concatenate(
            [w[:, 0:H], w[:, H:2 * H], w[:, 3 * H:4 * H], w[:, 2 * H:3 * H]], axis=1)

    def pack_dir(w_ih, w_hh, b_ih, b_hh):
        wx = reorder_cols(w_ih.T)                           # (in, 4H)
        wh = reorder_cols(w_hh.T)                           # (H, 4H)
        b = b_ih + b_hh
        b = jnp.concatenate([b[0:H], b[H:2 * H], b[3 * H:4 * H], b[2 * H:3 * H]])
        return wx, wh, b

    w0fx, w0fh, b0f = pack_dir(params["w_ih_l0"], params["w_hh_l0"],
                               params["b_ih_l0"], params["b_hh_l0"])
    w0bx, w0bh, b0b = pack_dir(params["w_ih_l0r"], params["w_hh_l0r"],
                               params["b_ih_l0r"], params["b_hh_l0r"])
    w1fx, w1fh, b1f = pack_dir(params["w_ih_l1"], params["w_hh_l1"],
                               params["b_ih_l1"], params["b_hh_l1"])
    w1bx, w1bh, b1b = pack_dir(params["w_ih_l1r"], params["w_hh_l1r"],
                               params["b_ih_l1r"], params["b_hh_l1r"])

    # Wx slab: rows 0:F = layer-0 [fwd|rev] (F, 8H); rows 8:8+2H = layer-1 (2H, 8H).
    wx_slab = jnp.zeros((8 + 2 * H, 8 * H), jnp.float32)
    wx_slab = wx_slab.at[0:F, :].set(jnp.concatenate([w0fx, w0bx], axis=1))
    wx_slab = wx_slab.at[8:8 + 2 * H, :].set(jnp.concatenate([w1fx, w1bx], axis=1))

    # Wh slab (block-diag per layer): rows 0:2H = layer-0 [Wh_f; Wh_b], rows 2H:4H = layer-1.
    wh_slab = jnp.concatenate([w0fh, w0bh, w1fh, w1bh], axis=0)     # (4H, 4H)

    # bias + fc slab (3, 8H): row0 = layer-0 bias [fwd|rev], row1 = layer-1 bias,
    # row2 = [fc_w (2H) | fc_b | 0...].
    fc_row = jnp.zeros((8 * H,), jnp.float32)
    fc_row = fc_row.at[0:2 * H].set(params["fc_w"].reshape(2 * H))
    fc_row = fc_row.at[2 * H].set(params["fc_b"][0])
    bfc_slab = jnp.stack([jnp.concatenate([b0f, b0b]),
                          jnp.concatenate([b1f, b1b]),
                          fc_row], axis=0)

    # h0 / c0 packed: rows 0:4 = h0 per (layer, direction), rows 4:8 = c0.
    hc0 = jnp.concatenate([h0, c0], axis=0)                 # (8, B, H)

    vspec = pl.BlockSpec(memory_space=pltpu.MemorySpace.VMEM)
    out, lstm_slab, hc = pl.pallas_call(
        crnn_disc_kernel,
        out_shape=(
            jax.ShapeDtypeStruct((1, B), jnp.float32),             # mean score
            jax.ShapeDtypeStruct((T, B * 2 * H), jnp.float32),     # lstm_out slab
            jax.ShapeDtypeStruct((4, 2 * B * H), jnp.float32),     # [h_n | c_n]
        ),
        in_specs=[vspec] * 5,
        out_specs=[vspec] * 3,
    )(x_flat, hc0, wx_slab, wh_slab, bfc_slab)

    lstm_out = lstm_slab.reshape(T, B, 2 * H).transpose(1, 0, 2)   # (B, T, 2H)
    hn = hc[:, 0:B * H].reshape(4, B, H)
    cn = hc[:, B * H:2 * B * H].reshape(4, B, H)
    return out.reshape(B), lstm_out, (hn, cn)


# ---------------------------------------------------------------------------
# Parameter init (deterministic; mimics PyTorch default uniform ranges)
# ---------------------------------------------------------------------------
def init_params(key, num_feats=NUM_FEATS, hidden=HIDDEN):
    ks = jax.random.split(key, 18)

    def u(k, shape, fan):
        b = 1.0 / jnp.sqrt(jnp.float32(fan))
        return jax.random.uniform(k, shape, jnp.float32, -b, b)

    H = hidden
    return {
        # layer 0 (input size F), forward / reverse
        "w_ih_l0": u(ks[0], (4 * H, num_feats), H), "w_hh_l0": u(ks[1], (4 * H, H), H),
        "b_ih_l0": u(ks[2], (4 * H,), H), "b_hh_l0": u(ks[3], (4 * H,), H),
        "w_ih_l0r": u(ks[4], (4 * H, num_feats), H), "w_hh_l0r": u(ks[5], (4 * H, H), H),
        "b_ih_l0r": u(ks[6], (4 * H,), H), "b_hh_l0r": u(ks[7], (4 * H,), H),
        # layer 1 (input size 2H), forward / reverse
        "w_ih_l1": u(ks[8], (4 * H, 2 * H), H), "w_hh_l1": u(ks[9], (4 * H, H), H),
        "b_ih_l1": u(ks[10], (4 * H,), H), "b_hh_l1": u(ks[11], (4 * H,), H),
        "w_ih_l1r": u(ks[12], (4 * H, 2 * H), H), "w_hh_l1r": u(ks[13], (4 * H, H), H),
        "b_ih_l1r": u(ks[14], (4 * H,), H), "b_hh_l1r": u(ks[15], (4 * H,), H),
        # fc_layer: Linear(2H -> 1)
        "fc_w": u(ks[16], (1, 2 * H), 2 * H), "fc_b": u(ks[17], (1,), 2 * H),
    }


# ---------------------------------------------------------------------------
# Pure-JAX reference (unpacked PyTorch-layout weights) for correctness check
# ---------------------------------------------------------------------------
def reference_forward(note_seq, h0, c0, params):
    B, T, F = note_seq.shape
    H = HIDDEN

    def cell(x_t, h, c, w_ih, w_hh, b_ih, b_hh):
        g = x_t @ w_ih.T + h @ w_hh.T + b_ih + b_hh
        i = jax.nn.sigmoid(g[:, 0 * H:1 * H])
        f = jax.nn.sigmoid(g[:, 1 * H:2 * H])
        gg = jnp.tanh(g[:, 2 * H:3 * H])
        o = jax.nn.sigmoid(g[:, 3 * H:4 * H])
        c_new = f * c + i * gg
        return o * jnp.tanh(c_new), c_new

    def bidir_layer(seq, h0f, c0f, h0b, c0b, pf, pb):
        outs_f = []
        h, c = h0f, c0f
        for t in range(T):
            h, c = cell(seq[t], h, c, *pf)
            outs_f.append(h)
        hf, cf = h, c
        outs_b = [None] * T
        h, c = h0b, c0b
        for t in range(T - 1, -1, -1):
            h, c = cell(seq[t], h, c, *pb)
            outs_b[t] = h
        hb, cb = h, c
        outs = [jnp.concatenate([outs_f[t], outs_b[t]], axis=-1) for t in range(T)]
        return outs, (hf, cf), (hb, cb)

    seq0 = [note_seq[:, t, :] for t in range(T)]
    p0f = (params["w_ih_l0"], params["w_hh_l0"], params["b_ih_l0"], params["b_hh_l0"])
    p0b = (params["w_ih_l0r"], params["w_hh_l0r"], params["b_ih_l0r"], params["b_hh_l0r"])
    p1f = (params["w_ih_l1"], params["w_hh_l1"], params["b_ih_l1"], params["b_hh_l1"])
    p1b = (params["w_ih_l1r"], params["w_hh_l1r"], params["b_ih_l1r"], params["b_hh_l1r"])

    out0, (hf0, cf0), (hb0, cb0) = bidir_layer(seq0, h0[0], c0[0], h0[1], c0[1], p0f, p0b)
    out1, (hf1, cf1), (hb1, cb1) = bidir_layer(out0, h0[2], c0[2], h0[3], c0[3], p1f, p1b)

    lstm_out = jnp.stack(out1, axis=1)                                    # (B, T, 2H)
    probs = jax.nn.sigmoid(lstm_out @ params["fc_w"].T + params["fc_b"])  # (B, T, 1)
    out = jnp.mean(probs, axis=(1, 2))                                    # (B,)
    hn = jnp.stack([hf0, hb0, hf1, hb1], axis=0)
    cn = jnp.stack([cf0, cb0, cf1, cb1], axis=0)
    return out, lstm_out, (hn, cn)


# ---------------------------------------------------------------------------
if __name__ == "__main__":
    key = jax.random.PRNGKey(0)
    k_param, k_x = jax.random.split(key)

    params = init_params(k_param)
    note_seq = jax.random.normal(k_x, (BATCH, SEQ, NUM_FEATS), jnp.float32)

    # init_hidden: zeros, shape (num_layers * num_directions, B, H)
    h0 = jnp.zeros((4, BATCH, HIDDEN), jnp.float32)
    c0 = jnp.zeros((4, BATCH, HIDDEN), jnp.float32)

    out, lstm_out, (hn, cn) = discriminator_crnn_forward(note_seq, h0, c0, params)
    jax.block_until_ready(out)
    jax.block_until_ready(lstm_out)

    r_out, r_lstm, (r_hn, r_cn) = reference_forward(note_seq, h0, c0, params)

    assert out.shape == (BATCH,)
    assert lstm_out.shape == (BATCH, SEQ, 2 * HIDDEN)
    assert hn.shape == (4, BATCH, HIDDEN) and cn.shape == (4, BATCH, HIDDEN)

    tol = dict(rtol=2e-4, atol=2e-4)
    assert jnp.allclose(out, r_out, **tol)
    assert jnp.allclose(lstm_out, r_lstm, **tol)
    assert jnp.allclose(hn, r_hn, **tol)
    assert jnp.allclose(cn, r_cn, **tol)

    print("KERNEL_OK")
</pallas_src>

<mosaic_0001>
module attributes {stable_mosaic.version = 11 : i64} {
  func.func @crnn_disc_kernel(%arg0: memref<16x4xf32, #tpu.memory_space<vmem>>, %arg1: memref<8x2x32xf32, #tpu.memory_space<vmem>>, %arg2: memref<72x256xf32, #tpu.memory_space<vmem>>, %arg3: memref<128x128xf32, #tpu.memory_space<vmem>>, %arg4: memref<3x256xf32, #tpu.memory_space<vmem>>, %arg5: memref<1x2xf32, #tpu.memory_space<vmem>>, %arg6: memref<8x128xf32, #tpu.memory_space<vmem>>, %arg7: memref<4x128xf32, #tpu.memory_space<vmem>>) attributes {dimension_semantics = [], scalar_prefetch = 0 : i64, scratch_operands = 0 : i64, tpu.core_type = #tpu.core_type<tc>} {
    %0 = tpu.iota {dimensions = array<i32: 0>} : vector<4x64xi32>
    %1 = tpu.iota {dimensions = array<i32: 1>} : vector<4x64xi32>
    %c2_i32 = arith.constant 2 : i32
    %2 = vector.broadcast %c2_i32 : i32 to vector<4x64xi32>
    %3 = arith.cmpi slt, %0, %2 : vector<4x64xi32>
    %4 = arith.extui %3 : vector<4x64xi1> to vector<4x64xi32>
    %5 = arith.sitofp %4 : vector<4x64xi32> to vector<4x64xf32>
    %c32_i32 = arith.constant 32 : i32
    %6 = vector.broadcast %c32_i32 : i32 to vector<4x64xi32>
    %7 = arith.cmpi slt, %1, %6 : vector<4x64xi32>
    %8 = arith.extui %7 : vector<4x64xi1> to vector<4x64xi32>
    %9 = arith.sitofp %8 : vector<4x64xi32> to vector<4x64xf32>
    %10 = arith.mulf %5, %9 : vector<4x64xf32>
    %cst = arith.constant 1.000000e+00 : f32
    %11 = vector.broadcast %cst : f32 to vector<4x64xf32>
    %12 = arith.subf %11, %5 : vector<4x64xf32>
    %cst_0 = arith.constant 1.000000e+00 : f32
    %13 = vector.broadcast %cst_0 : f32 to vector<4x64xf32>
    %14 = arith.subf %13, %9 : vector<4x64xf32>
    %15 = arith.mulf %12, %14 : vector<4x64xf32>
    %16 = arith.addf %10, %15 : vector<4x64xf32>
    %c0 = arith.constant 0 : index
    %c0_1 = arith.constant 0 : index
    %17 = vector.load %arg0[%c0, %c0_1] : memref<16x4xf32, #tpu.memory_space<vmem>>, vector<16x4xf32>
    %c0_2 = arith.constant 0 : index
    %c0_3 = arith.constant 0 : index
    %18 = vector.load %arg2[%c0_2, %c0_3] : memref<72x256xf32, #tpu.memory_space<vmem>>, vector<4x256xf32>
    %cst_4 = arith.constant dense<0.000000e+00> : vector<16x256xf32>
    %19 = tpu.matmul %17, %18, %cst_4 {dimension_numbers = #tpu.dot_dimension_numbers<[1], [0], [0], [1], [0, 0, 1, 1], [], []>} : vector<16x4xf32>, vector<4x256xf32>, vector<16x256xf32> -> vector<16x256xf32>
    %c0_5 = arith.constant 0 : index
    %c0_6 = arith.constant 0 : index
    %20 = vector.load %arg4[%c0_5, %c0_6] : memref<3x256xf32, #tpu.memory_space<vmem>>, vector<1x256xf32>
    %21 = vector.broadcast %20 : vector<1x256xf32> to vector<16x256xf32>
    %22 = arith.addf %19, %21 : vector<16x256xf32>
    %c0_7 = arith.constant 0 : index
    %c0_8 = arith.constant 0 : index
    %23 = vector.load %arg3[%c0_7, %c0_8] : memref<128x128xf32, #tpu.memory_space<vmem>>, vector<64x128xf32>
    %c0_9 = arith.constant 0 : index
    %c0_10 = arith.constant 0 : index
    %c0_11 = arith.constant 0 : index
    %24 = vector.load %arg1[%c0_9, %c0_10, %c0_11] : memref<8x2x32xf32, #tpu.memory_space<vmem>>, vector<1x2x32xf32>
    %25 = vector.shape_cast %24 : vector<1x2x32xf32> to vector<2x32xf32>
    %c1 = arith.constant 1 : index
    %c0_12 = arith.constant 0 : index
    %c0_13 = arith.constant 0 : index
    %26 = vector.load %arg1[%c1, %c0_12, %c0_13] : memref<8x2x32xf32, #tpu.memory_space<vmem>>, vector<1x2x32xf32>
    %27 = vector.shape_cast %26 : vector<1x2x32xf32> to vector<2x32xf32>
    %c4 = arith.constant 4 : index
    %c0_14 = arith.constant 0 : index
    %c0_15 = arith.constant 0 : index
    %28 = vector.load %arg1[%c4, %c0_14, %c0_15] : memref<8x2x32xf32, #tpu.memory_space<vmem>>, vector<1x2x32xf32>
    %29 = vector.shape_cast %28 : vector<1x2x32xf32> to vector<2x32xf32>
    %c5 = arith.constant 5 : index
    %c0_16 = arith.constant 0 : index
    %c0_17 = arith.constant 0 : index
    %30 = vector.load %arg1[%c5, %c0_16, %c0_17] : memref<8x2x32xf32, #tpu.memory_space<vmem>>, vector<1x2x32xf32>
    %31 = vector.shape_cast %30 : vector<1x2x32xf32> to vector<2x32xf32>
    %32 = tpu.concatenate %25, %27 in 0 : vector<2x32xf32>, vector<2x32xf32> -> vector<4x32xf32>
    %33 = tpu.concatenate %29, %31 in 0 : vector<2x32xf32>, vector<2x32xf32> -> vector<4x32xf32>
    %34 = tpu.concatenate %32, %32 in 1 : vector<4x32xf32>, vector<4x32xf32> -> vector<4x64xf32>
    %35 = arith.mulf %34, %16 : vector<4x64xf32>
    %36 = vector.extract_strided_slice %22 {offsets = [0, 0], sizes = [2, 128], strides = [1, 1]} : vector<16x256xf32> to vector<2x128xf32>
    %37 = vector.extract_strided_slice %22 {offsets = [14, 128], sizes = [2, 128], strides = [1, 1]} : vector<16x256xf32> to vector<2x128xf32>
    %38 = tpu.concatenate %36, %37 in 0 : vector<2x128xf32>, vector<2x128xf32> -> vector<4x128xf32>
    %cst_18 = arith.constant dense<0.000000e+00> : vector<4x128xf32>
    %39 = tpu.matmul %35, %23, %cst_18 {dimension_numbers = #tpu.dot_dimension_numbers<[1], [0], [0], [1], [0, 0, 1, 1], [], []>} : vector<4x64xf32>, vector<64x128xf32>, vector<4x128xf32> -> vector<4x128xf32>
    %40 = arith.addf %38, %39 : vector<4x128xf32>
    %41 = vector.extract_strided_slice %40 {offsets = [0, 0], sizes = [4, 96], strides = [1, 1]} : vector<4x128xf32> to vector<4x96xf32>
    %42 = arith.negf %41 : vector<4x96xf32>
    %43 = math.exp %42 : vector<4x96xf32>
    %cst_19 = arith.constant 1.000000e+00 : f32
    %44 = vector.broadcast %cst_19 : f32 to vector<4x96xf32>
    %45 = arith.addf %44, %43 : vector<4x96xf32>
    %46 = arith.divf %44, %45 : vector<4x96xf32>
    %47 = vector.extract_strided_slice %46 {offsets = [0, 0], sizes = [4, 32], strides = [1, 1]} : vector<4x96xf32> to vector<4x32xf32>
    %48 = vector.extract_strided_slice %46 {offsets = [0, 32], sizes = [4, 32], strides = [1, 1]} : vector<4x96xf32> to vector<4x32xf32>
    %49 = vector.extract_strided_slice %46 {offsets = [0, 64], sizes = [4, 32], strides = [1, 1]} : vector<4x96xf32> to vector<4x32xf32>
    %50 = vector.extract_strided_slice %40 {offsets = [0, 96], sizes = [4, 32], strides = [1, 1]} : vector<4x128xf32> to vector<4x32xf32>
    %51 = math.tanh %50 : vector<4x32xf32>
    %52 = arith.mulf %48, %33 : vector<4x32xf32>
    %53 = arith.mulf %47, %51 : vector<4x32xf32>
    %54 = arith.addf %52, %53 : vector<4x32xf32>
    %55 = math.tanh %54 : vector<4x32xf32>
    %56 = arith.mulf %49, %55 : vector<4x32xf32>
    %57 = tpu.concatenate %56, %56 in 1 : vector<4x32xf32>, vector<4x32xf32> -> vector<4x64xf32>
    %58 = arith.mulf %57, %16 : vector<4x64xf32>
    %59 = vector.extract_strided_slice %22 {offsets = [2, 0], sizes = [2, 128], strides = [1, 1]} : vector<16x256xf32> to vector<2x128xf32>
    %60 = vector.extract_strided_slice %22 {offsets = [12, 128], sizes = [2, 128], strides = [1, 1]} : vector<16x256xf32> to vector<2x128xf32>
    %61 = tpu.concatenate %59, %60 in 0 : vector<2x128xf32>, vector<2x128xf32> -> vector<4x128xf32>
    %cst_20 = arith.constant dense<0.000000e+00> : vector<4x128xf32>
    %62 = tpu.matmul %58, %23, %cst_20 {dimension_numbers = #tpu.dot_dimension_numbers<[1], [0], [0], [1], [0, 0, 1, 1], [], []>} : vector<4x64xf32>, vector<64x128xf32>, vector<4x128xf32> -> vector<4x128xf32>
    %63 = arith.addf %61, %62 : vector<4x128xf32>
    %64 = vector.extract_strided_slice %63 {offsets = [0, 0], sizes = [4, 96], strides = [1, 1]} : vector<4x128xf32> to vector<4x96xf32>
    %65 = arith.negf %64 : vector<4x96xf32>
    %66 = math.exp %65 : vector<4x96xf32>
    %cst_21 = arith.constant 1.000000e+00 : f32
    %67 = vector.broadcast %cst_21 : f32 to vector<4x96xf32>
    %68 = arith.addf %67, %66 : vector<4x96xf32>
    %69 = arith.divf %67, %68 : vector<4x96xf32>
    %70 = vector.extract_strided_slice %69 {offsets = [0, 0], sizes = [4, 32], strides = [1, 1]} : vector<4x96xf32> to vector<4x32xf32>
    %71 = vector.extract_strided_slice %69 {offsets = [0, 32], sizes = [4, 32], strides = [1, 1]} : vector<4x96xf32> to vector<4x32xf32>
    %72 = vector.extract_strided_slice %69 {offsets = [0, 64], sizes = [4, 32], strides = [1, 1]} : vector<4x96xf32> to vector<4x32xf32>
    %73 = vector.extract_strided_slice %63 {offsets = [0, 96], sizes = [4, 32], strides = [1, 1]} : vector<4x128xf32> to vector<4x32xf32>
    %74 = math.tanh %73 : vector<4x32xf32>
    %75 = arith.mulf %71, %54 : vector<4x32xf32>
    %76 = arith.mulf %70, %74 : vector<4x32xf32>
    %77 = arith.addf %75, %76 : vector<4x32xf32>
    %78 = math.tanh %77 : vector<4x32xf32>
    %79 = arith.mulf %72, %78 : vector<4x32xf32>
    %80 = tpu.concatenate %79, %79 in 1 : vector<4x32xf32>, vector<4x32xf32> -> vector<4x64xf32>
    %81 = arith.mulf %80, %16 : vector<4x64xf32>
    %82 = vector.extract_strided_slice %22 {offsets = [4, 0], sizes = [2, 128], strides = [1, 1]} : vector<16x256xf32> to vector<2x128xf32>
    %83 = vector.extract_strided_slice %22 {offsets = [10, 128], sizes = [2, 128], strides = [1, 1]} : vector<16x256xf32> to vector<2x128xf32>
    %84 = tpu.concatenate %82, %83 in 0 : vector<2x128xf32>, vector<2x128xf32> -> vector<4x128xf32>
    %cst_22 = arith.constant dense<0.000000e+00> : vector<4x128xf32>
    %85 = tpu.matmul %81, %23, %cst_22 {dimension_numbers = #tpu.dot_dimension_numbers<[1], [0], [0], [1], [0, 0, 1, 1], [], []>} : vector<4x64xf32>, vector<64x128xf32>, vector<4x128xf32> -> vector<4x128xf32>
    %86 = arith.addf %84, %85 : vector<4x128xf32>
    %87 = vector.extract_strided_slice %86 {offsets = [0, 0], sizes = [4, 96], strides = [1, 1]} : vector<4x128xf32> to vector<4x96xf32>
    %88 = arith.negf %87 : vector<4x96xf32>
    %89 = math.exp %88 : vector<4x96xf32>
    %cst_23 = arith.constant 1.000000e+00 : f32
    %90 = vector.broadcast %cst_23 : f32 to vector<4x96xf32>
    %91 = arith.addf %90, %89 : vector<4x96xf32>
    %92 = arith.divf %90, %91 : vector<4x96xf32>
    %93 = vector.extract_strided_slice %92 {offsets = [0, 0], sizes = [4, 32], strides = [1, 1]} : vector<4x96xf32> to vector<4x32xf32>
    %94 = vector.extract_strided_slice %92 {offsets = [0, 32], sizes = [4, 32], strides = [1, 1]} : vector<4x96xf32> to vector<4x32xf32>
    %95 = vector.extract_strided_slice %92 {offsets = [0, 64], sizes = [4, 32], strides = [1, 1]} : vector<4x96xf32> to vector<4x32xf32>
    %96 = vector.extract_strided_slice %86 {offsets = [0, 96], sizes = [4, 32], strides = [1, 1]} : vector<4x128xf32> to vector<4x32xf32>
    %97 = math.tanh %96 : vector<4x32xf32>
    %98 = arith.mulf %94, %77 : vector<4x32xf32>
    %99 = arith.mulf %93, %97 : vector<4x32xf32>
    %100 = arith.addf %98, %99 : vector<4x32xf32>
    %101 = math.tanh %100 : vector<4x32xf32>
    %102 = arith.mulf %95, %101 : vector<4x32xf32>
    %103 = tpu.concatenate %102, %102 in 1 : vector<4x32xf32>, vector<4x32xf32> -> vector<4x64xf32>
    %104 = arith.mulf %103, %16 : vector<4x64xf32>
    %105 = vector.extract_strided_slice %22 {offsets = [6, 0], sizes = [2, 128], strides = [1, 1]} : vector<16x256xf32> to vector<2x128xf32>
    %106 = vector.extract_strided_slice %22 {offsets = [8, 128], sizes = [2, 128], strides = [1, 1]} : vector<16x256xf32> to vector<2x128xf32>
    %107 = tpu.concatenate %105, %106 in 0 : vector<2x128xf32>, vector<2x128xf32> -> vector<4x128xf32>
    %cst_24 = arith.constant dense<0.000000e+00> : vector<4x128xf32>
    %108 = tpu.matmul %104, %23, %cst_24 {dimension_numbers = #tpu.dot_dimension_numbers<[1], [0], [0], [1], [0, 0, 1, 1], [], []>} : vector<4x64xf32>, vector<64x128xf32>, vector<4x128xf32> -> vector<4x128xf32>
    %109 = arith.addf %107, %108 : vector<4x128xf32>
    %110 = vector.extract_strided_slice %109 {offsets = [0, 0], sizes = [4, 96], strides = [1, 1]} : vector<4x128xf32> to vector<4x96xf32>
    %111 = arith.negf %110 : vector<4x96xf32>
    %112 = math.exp %111 : vector<4x96xf32>
    %cst_25 = arith.constant 1.000000e+00 : f32
    %113 = vector.broadcast %cst_25 : f32 to vector<4x96xf32>
    %114 = arith.addf %113, %112 : vector<4x96xf32>
    %115 = arith.divf %113, %114 : vector<4x96xf32>
    %116 = vector.extract_strided_slice %115 {offsets = [0, 0], sizes = [4, 32], strides = [1, 1]} : vector<4x96xf32> to vector<4x32xf32>
    %117 = vector.extract_strided_slice %115 {offsets = [0, 32], sizes = [4, 32], strides = [1, 1]} : vector<4x96xf32> to vector<4x32xf32>
    %118 = vector.extract_strided_slice %115 {offsets = [0, 64], sizes = [4, 32], strides = [1, 1]} : vector<4x96xf32> to vector<4x32xf32>
    %119 = vector.extract_strided_slice %109 {offsets = [0, 96], sizes = [4, 32], strides = [1, 1]} : vector<4x128xf32> to vector<4x32xf32>
    %120 = math.tanh %119 : vector<4x32xf32>
    %121 = arith.mulf %117, %100 : vector<4x32xf32>
    %122 = arith.mulf %116, %120 : vector<4x32xf32>
    %123 = arith.addf %121, %122 : vector<4x32xf32>
    %124 = math.tanh %123 : vector<4x32xf32>
    %125 = arith.mulf %118, %124 : vector<4x32xf32>
    %126 = tpu.concatenate %125, %125 in 1 : vector<4x32xf32>, vector<4x32xf32> -> vector<4x64xf32>
    %127 = arith.mulf %126, %16 : vector<4x64xf32>
    %128 = vector.extract_strided_slice %22 {offsets = [8, 0], sizes = [2, 128], strides = [1, 1]} : vector<16x256xf32> to vector<2x128xf32>
    %129 = vector.extract_strided_slice %22 {offsets = [6, 128], sizes = [2, 128], strides = [1, 1]} : vector<16x256xf32> to vector<2x128xf32>
    %130 = tpu.concatenate %128, %129 in 0 : vector<2x128xf32>, vector<2x128xf32> -> vector<4x128xf32>
    %cst_26 = arith.constant dense<0.000000e+00> : vector<4x128xf32>
    %131 = tpu.matmul %127, %23, %cst_26 {dimension_numbers = #tpu.dot_dimension_numbers<[1], [0], [0], [1], [0, 0, 1, 1], [], []>} : vector<4x64xf32>, vector<64x128xf32>, vector<4x128xf32> -> vector<4x128xf32>
    %132 = arith.addf %130, %131 : vector<4x128xf32>
    %133 = vector.extract_strided_slice %132 {offsets = [0, 0], sizes = [4, 96], strides = [1, 1]} : vector<4x128xf32> to vector<4x96xf32>
    %134 = arith.negf %133 : vector<4x96xf32>
    %135 = math.exp %134 : vector<4x96xf32>
    %cst_27 = arith.constant 1.000000e+00 : f32
    %136 = vector.broadcast %cst_27 : f32 to vector<4x96xf32>
    %137 = arith.addf %136, %135 : vector<4x96xf32>
    %138 = arith.divf %136, %137 : vector<4x96xf32>
    %139 = vector.extract_strided_slice %138 {offsets = [0, 0], sizes = [4, 32], strides = [1, 1]} : vector<4x96xf32> to vector<4x32xf32>
    %140 = vector.extract_strided_slice %138 {offsets = [0, 32], sizes = [4, 32], strides = [1, 1]} : vector<4x96xf32> to vector<4x32xf32>
    %141 = vector.extract_strided_slice %138 {offsets = [0, 64], sizes = [4, 32], strides = [1, 1]} : vector<4x96xf32> to vector<4x32xf32>
    %142 = vector.extract_strided_slice %132 {offsets = [0, 96], sizes = [4, 32], strides = [1, 1]} : vector<4x128xf32> to vector<4x32xf32>
    %143 = math.tanh %142 : vector<4x32xf32>
    %144 = arith.mulf %140, %123 : vector<4x32xf32>
    %145 = arith.mulf %139, %143 : vector<4x32xf32>
    %146 = arith.addf %144, %145 : vector<4x32xf32>
    %147 = math.tanh %146 : vector<4x32xf32>
    %148 = arith.mulf %141, %147 : vector<4x32xf32>
    %149 = tpu.concatenate %148, %148 in 1 : vector<4x32xf32>, vector<4x32xf32> -> vector<4x64xf32>
    %150 = arith.mulf %149, %16 : vector<4x64xf32>
    %151 = vector.extract_strided_slice %22 {offsets = [10, 0], sizes = [2, 128], strides = [1, 1]} : vector<16x256xf32> to vector<2x128xf32>
    %152 = vector.extract_strided_slice %22 {offsets = [4, 128], sizes = [2, 128], strides = [1, 1]} : vector<16x256xf32> to vector<2x128xf32>
    %153 = tpu.concatenate %151, %152 in 0 : vector<2x128xf32>, vector<2x128xf32> -> vector<4x128xf32>
    %cst_28 = arith.constant dense<0.000000e+00> : vector<4x128xf32>
    %154 = tpu.matmul %150, %23, %cst_28 {dimension_numbers = #tpu.dot_dimension_numbers<[1], [0], [0], [1], [0, 0, 1, 1], [], []>} : vector<4x64xf32>, vector<64x128xf32>, vector<4x128xf32> -> vector<4x128xf32>
    %155 = arith.addf %153, %154 : vector<4x128xf32>
    %156 = vector.extract_strided_slice %155 {offsets = [0, 0], sizes = [4, 96], strides = [1, 1]} : vector<4x128xf32> to vector<4x96xf32>
    %157 = arith.negf %156 : vector<4x96xf32>
    %158 = math.exp %157 : vector<4x96xf32>
    %cst_29 = arith.constant 1.000000e+00 : f32
    %159 = vector.broadcast %cst_29 : f32 to vector<4x96xf32>
    %160 = arith.addf %159, %158 : vector<4x96xf32>
    %161 = arith.divf %159, %160 : vector<4x96xf32>
    %162 = vector.extract_strided_slice %161 {offsets = [0, 0], sizes = [4, 32], strides = [1, 1]} : vector<4x96xf32> to vector<4x32xf32>
    %163 = vector.extract_strided_slice %161 {offsets = [0, 32], sizes = [4, 32], strides = [1, 1]} : vector<4x96xf32> to vector<4x32xf32>
    %164 = vector.extract_strided_slice %161 {offsets = [0, 64], sizes = [4, 32], strides = [1, 1]} : vector<4x96xf32> to vector<4x32xf32>
    %165 = vector.extract_strided_slice %155 {offsets = [0, 96], sizes = [4, 32], strides = [1, 1]} : vector<4x128xf32> to vector<4x32xf32>
    %166 = math.tanh %165 : vector<4x32xf32>
    %167 = arith.mulf %163, %146 : vector<4x32xf32>
    %168 = arith.mulf %162, %166 : vector<4x32xf32>
    %169 = arith.addf %167, %168 : vector<4x32xf32>
    %170 = math.tanh %169 : vector<4x32xf32>
    %171 = arith.mulf %164, %170 : vector<4x32xf32>
    %172 = tpu.concatenate %171, %171 in 1 : vector<4x32xf32>, vector<4x32xf32> -> vector<4x64xf32>
    %173 = arith.mulf %172, %16 : vector<4x64xf32>
    %174 = vector.extract_strided_slice %22 {offsets = [12, 0], sizes = [2, 128], strides = [1, 1]} : vector<16x256xf32> to vector<2x128xf32>
    %175 = vector.extract_strided_slice %22 {offsets = [2, 128], sizes = [2, 128], strides = [1, 1]} : vector<16x256xf32> to vector<2x128xf32>
    %176 = tpu.concatenate %174, %175 in 0 : vector<2x128xf32>, vector<2x128xf32> -> vector<4x128xf32>
    %cst_30 = arith.constant dense<0.000000e+00> : vector<4x128xf32>
    %177 = tpu.matmul %173, %23, %cst_30 {dimension_numbers = #tpu.dot_dimension_numbers<[1], [0], [0], [1], [0, 0, 1, 1], [], []>} : vector<4x64xf32>, vector<64x128xf32>, vector<4x128xf32> -> vector<4x128xf32>
    %178 = arith.addf %176, %177 : vector<4x128xf32>
    %179 = vector.extract_strided_slice %178 {offsets = [0, 0], sizes = [4, 96], strides = [1, 1]} : vector<4x128xf32> to vector<4x96xf32>
    %180 = arith.negf %179 : vector<4x96xf32>
    %181 = math.exp %180 : vector<4x96xf32>
    %cst_31 = arith.constant 1.000000e+00 : f32
    %182 = vector.broadcast %cst_31 : f32 to vector<4x96xf32>
    %183 = arith.addf %182, %181 : vector<4x96xf32>
    %184 = arith.divf %182, %183 : vector<4x96xf32>
    %185 = vector.extract_strided_slice %184 {offsets = [0, 0], sizes = [4, 32], strides = [1, 1]} : vector<4x96xf32> to vector<4x32xf32>
    %186 = vector.extract_strided_slice %184 {offsets = [0, 32], sizes = [4, 32], strides = [1, 1]} : vector<4x96xf32> to vector<4x32xf32>
    %187 = vector.extract_strided_slice %184 {offsets = [0, 64], sizes = [4, 32], strides = [1, 1]} : vector<4x96xf32> to vector<4x32xf32>
    %188 = vector.extract_strided_slice %178 {offsets = [0, 96], sizes = [4, 32], strides = [1, 1]} : vector<4x128xf32> to vector<4x32xf32>
    %189 = math.tanh %188 : vector<4x32xf32>
    %190 = arith.mulf %186, %169 : vector<4x32xf32>
    %191 = arith.mulf %185, %189 : vector<4x32xf32>
    %192 = arith.addf %190, %191 : vector<4x32xf32>
    %193 = math.tanh %192 : vector<4x32xf32>
    %194 = arith.mulf %187, %193 : vector<4x32xf32>
    %195 = tpu.concatenate %194, %194 in 1 : vector<4x32xf32>, vector<4x32xf32> -> vector<4x64xf32>
    %196 = arith.mulf %195, %16 : vector<4x64xf32>
    %197 = vector.extract_strided_slice %22 {offsets = [14, 0], sizes = [2, 128], strides = [1, 1]} : vector<16x256xf32> to vector<2x128xf32>
    %198 = vector.extract_strided_slice %22 {offsets = [0, 128], sizes = [2, 128], strides = [1, 1]} : vector<16x256xf32> to vector<2x128xf32>
    %199 = tpu.concatenate %197, %198 in 0 : vector<2x128xf32>, vector<2x128xf32> -> vector<4x128xf32>
    %cst_32 = arith.constant dense<0.000000e+00> : vector<4x128xf32>
    %200 = tpu.matmul %196, %23, %cst_32 {dimension_numbers = #tpu.dot_dimension_numbers<[1], [0], [0], [1], [0, 0, 1, 1], [], []>} : vector<4x64xf32>, vector<64x128xf32>, vector<4x128xf32> -> vector<4x128xf32>
    %201 = arith.addf %199, %200 : vector<4x128xf32>
    %202 = vector.extract_strided_slice %201 {offsets = [0, 0], sizes = [4, 96], strides = [1, 1]} : vector<4x128xf32> to vector<4x96xf32>
    %203 = arith.negf %202 : vector<4x96xf32>
    %204 = math.exp %203 : vector<4x96xf32>
    %cst_33 = arith.constant 1.000000e+00 : f32
    %205 = vector.broadcast %cst_33 : f32 to vector<4x96xf32>
    %206 = arith.addf %205, %204 : vector<4x96xf32>
    %207 = arith.divf %205, %206 : vector<4x96xf32>
    %208 = vector.extract_strided_slice %207 {offsets = [0, 0], sizes = [4, 32], strides = [1, 1]} : vector<4x96xf32> to vector<4x32xf32>
    %209 = vector.extract_strided_slice %207 {offsets = [0, 32], sizes = [4, 32], strides = [1, 1]} : vector<4x96xf32> to vector<4x32xf32>
    %210 = vector.extract_strided_slice %207 {offsets = [0, 64], sizes = [4, 32], strides = [1, 1]} : vector<4x96xf32> to vector<4x32xf32>
    %211 = vector.extract_strided_slice %201 {offsets = [0, 96], sizes = [4, 32], strides = [1, 1]} : vector<4x128xf32> to vector<4x32xf32>
    %212 = math.tanh %211 : vector<4x32xf32>
    %213 = arith.mulf %209, %192 : vector<4x32xf32>
    %214 = arith.mulf %208, %212 : vector<4x32xf32>
    %215 = arith.addf %213, %214 : vector<4x32xf32>
    %216 = math.tanh %215 : vector<4x32xf32>
    %217 = arith.mulf %210, %216 : vector<4x32xf32>
    %218 = vector.extract_strided_slice %56 {offsets = [0, 0], sizes = [2, 32], strides = [1, 1]} : vector<4x32xf32> to vector<2x32xf32>
    %219 = vector.extract_strided_slice %217 {offsets = [2, 0], sizes = [2, 32], strides = [1, 1]} : vector<4x32xf32> to vector<2x32xf32>
    %220 = tpu.concatenate %218, %219 in 1 : vector<2x32xf32>, vector<2x32xf32> -> vector<2x64xf32>
    %221 = vector.extract_strided_slice %79 {offsets = [0, 0], sizes = [2, 32], strides = [1, 1]} : vector<4x32xf32> to vector<2x32xf32>
    %222 = vector.extract_strided_slice %194 {offsets = [2, 0], sizes = [2, 32], strides = [1, 1]} : vector<4x32xf32> to vector<2x32xf32>
    %223 = tpu.concatenate %221, %222 in 1 : vector<2x32xf32>, vector<2x32xf32> -> vector<2x64xf32>
    %224 = vector.extract_strided_slice %102 {offsets = [0, 0], sizes = [2, 32], strides = [1, 1]} : vector<4x32xf32> to vector<2x32xf32>
    %225 = vector.extract_strided_slice %171 {offsets = [2, 0], sizes = [2, 32], strides = [1, 1]} : vector<4x32xf32> to vector<2x32xf32>
    %226 = tpu.concatenate %224, %225 in 1 : vector<2x32xf32>, vector<2x32xf32> -> vector<2x64xf32>
    %227 = vector.extract_strided_slice %125 {offsets = [0, 0], sizes = [2, 32], strides = [1, 1]} : vector<4x32xf32> to vector<2x32xf32>
    %228 = vector.extract_strided_slice %148 {offsets = [2, 0], sizes = [2, 32], strides = [1, 1]} : vector<4x32xf32> to vector<2x32xf32>
    %229 = tpu.concatenate %227, %228 in 1 : vector<2x32xf32>, vector<2x32xf32> -> vector<2x64xf32>
    %230 = vector.extract_strided_slice %148 {offsets = [0, 0], sizes = [2, 32], strides = [1, 1]} : vector<4x32xf32> to vector<2x32xf32>
    %231 = vector.extract_strided_slice %125 {offsets = [2, 0], sizes = [2, 32], strides = [1, 1]} : vector<4x32xf32> to vector<2x32xf32>
    %232 = tpu.concatenate %230, %231 in 1 : vector<2x32xf32>, vector<2x32xf32> -> vector<2x64xf32>
    %233 = vector.extract_strided_slice %171 {offsets = [0, 0], sizes = [2, 32], strides = [1, 1]} : vector<4x32xf32> to vector<2x32xf32>
    %234 = vector.extract_strided_slice %102 {offsets = [2, 0], sizes = [2, 32], strides = [1, 1]} : vector<4x32xf32> to vector<2x32xf32>
    %235 = tpu.concatenate %233, %234 in 1 : vector<2x32xf32>, vector<2x32xf32> -> vector<2x64xf32>
    %236 = vector.extract_strided_slice %194 {offsets = [0, 0], sizes = [2, 32], strides = [1, 1]} : vector<4x32xf32> to vector<2x32xf32>
    %237 = vector.extract_strided_slice %79 {offsets = [2, 0], sizes = [2, 32], strides = [1, 1]} : vector<4x32xf32> to vector<2x32xf32>
    %238 = tpu.concatenate %236, %237 in 1 : vector<2x32xf32>, vector<2x32xf32> -> vector<2x64xf32>
    %239 = vector.extract_strided_slice %217 {offsets = [0, 0], sizes = [2, 32], strides = [1, 1]} : vector<4x32xf32> to vector<2x32xf32>
    %240 = vector.extract_strided_slice %56 {offsets = [2, 0], sizes = [2, 32], strides = [1, 1]} : vector<4x32xf32> to vector<2x32xf32>
    %241 = tpu.concatenate %239, %240 in 1 : vector<2x32xf32>, vector<2x32xf32> -> vector<2x64xf32>
    %242 = tpu.concatenate %220, %223, %226, %229, %232, %235, %238, %241 in 0 : vector<2x64xf32>, vector<2x64xf32>, vector<2x64xf32>, vector<2x64xf32>, vector<2x64xf32>, vector<2x64xf32>, vector<2x64xf32>, vector<2x64xf32> -> vector<16x64xf32>
    %c8 = arith.constant 8 : index
    %c0_34 = arith.constant 0 : index
    %243 = vector.load %arg2[%c8, %c0_34] : memref<72x256xf32, #tpu.memory_space<vmem>>, vector<64x256xf32>
    %cst_35 = arith.constant dense<0.000000e+00> : vector<16x256xf32>
    %244 = tpu.matmul %242, %243, %cst_35 {dimension_numbers = #tpu.dot_dimension_numbers<[1], [0], [0], [1], [0, 0, 1, 1], [], []>} : vector<16x64xf32>, vector<64x256xf32>, vector<16x256xf32> -> vector<16x256xf32>
    %c1_36 = arith.constant 1 : index
    %c0_37 = arith.constant 0 : index
    %245 = vector.load %arg4[%c1_36, %c0_37] : memref<3x256xf32, #tpu.memory_space<vmem>>, vector<1x256xf32>
    %246 = vector.broadcast %245 : vector<1x256xf32> to vector<16x256xf32>
    %247 = arith.addf %244, %246 : vector<16x256xf32>
    %c64 = arith.constant 64 : index
    %c0_38 = arith.constant 0 : index
    %248 = vector.load %arg3[%c64, %c0_38] : memref<128x128xf32, #tpu.memory_space<vmem>>, vector<64x128xf32>
    %c2 = arith.constant 2 : index
    %c0_39 = arith.constant 0 : index
    %c0_40 = arith.constant 0 : index
    %249 = vector.load %arg1[%c2, %c0_39, %c0_40] : memref<8x2x32xf32, #tpu.memory_space<vmem>>, vector<1x2x32xf32>
    %250 = vector.shape_cast %249 : vector<1x2x32xf32> to vector<2x32xf32>
    %c3 = arith.constant 3 : index
    %c0_41 = arith.constant 0 : index
    %c0_42 = arith.constant 0 : index
    %251 = vector.load %arg1[%c3, %c0_41, %c0_42] : memref<8x2x32xf32, #tpu.memory_space<vmem>>, vector<1x2x32xf32>
    %252 = vector.shape_cast %251 : vector<1x2x32xf32> to vector<2x32xf32>
    %c6 = arith.constant 6 : index
    %c0_43 = arith.constant 0 : index
    %c0_44 = arith.constant 0 : index
    %253 = vector.load %arg1[%c6, %c0_43, %c0_44] : memref<8x2x32xf32, #tpu.memory_space<vmem>>, vector<1x2x32xf32>
    %254 = vector.shape_cast %253 : vector<1x2x32xf32> to vector<2x32xf32>
    %c7 = arith.constant 7 : index
    %c0_45 = arith.constant 0 : index
    %c0_46 = arith.constant 0 : index
    %255 = vector.load %arg1[%c7, %c0_45, %c0_46] : memref<8x2x32xf32, #tpu.memory_space<vmem>>, vector<1x2x32xf32>
    %256 = vector.shape_cast %255 : vector<1x2x32xf32> to vector<2x32xf32>
    %257 = tpu.concatenate %250, %252 in 0 : vector<2x32xf32>, vector<2x32xf32> -> vector<4x32xf32>
    %258 = tpu.concatenate %254, %256 in 0 : vector<2x32xf32>, vector<2x32xf32> -> vector<4x32xf32>
    %259 = tpu.concatenate %257, %257 in 1 : vector<4x32xf32>, vector<4x32xf32> -> vector<4x64xf32>
    %260 = arith.mulf %259, %16 : vector<4x64xf32>
    %261 = vector.extract_strided_slice %247 {offsets = [0, 0], sizes = [2, 128], strides = [1, 1]} : vector<16x256xf32> to vector<2x128xf32>
    %262 = vector.extract_strided_slice %247 {offsets = [14, 128], sizes = [2, 128], strides = [1, 1]} : vector<16x256xf32> to vector<2x128xf32>
    %263 = tpu.concatenate %261, %262 in 0 : vector<2x128xf32>, vector<2x128xf32> -> vector<4x128xf32>
    %cst_47 = arith.constant dense<0.000000e+00> : vector<4x128xf32>
    %264 = tpu.matmul %260, %248, %cst_47 {dimension_numbers = #tpu.dot_dimension_numbers<[1], [0], [0], [1], [0, 0, 1, 1], [], []>} : vector<4x64xf32>, vector<64x128xf32>, vector<4x128xf32> -> vector<4x128xf32>
    %265 = arith.addf %263, %264 : vector<4x128xf32>
    %266 = vector.extract_strided_slice %265 {offsets = [0, 0], sizes = [4, 96], strides = [1, 1]} : vector<4x128xf32> to vector<4x96xf32>
    %267 = arith.negf %266 : vector<4x96xf32>
    %268 = math.exp %267 : vector<4x96xf32>
    %cst_48 = arith.constant 1.000000e+00 : f32
    %269 = vector.broadcast %cst_48 : f32 to vector<4x96xf32>
    %270 = arith.addf %269, %268 : vector<4x96xf32>
    %271 = arith.divf %269, %270 : vector<4x96xf32>
    %272 = vector.extract_strided_slice %271 {offsets = [0, 0], sizes = [4, 32], strides = [1, 1]} : vector<4x96xf32> to vector<4x32xf32>
    %273 = vector.extract_strided_slice %271 {offsets = [0, 32], sizes = [4, 32], strides = [1, 1]} : vector<4x96xf32> to vector<4x32xf32>
    %274 = vector.extract_strided_slice %271 {offsets = [0, 64], sizes = [4, 32], strides = [1, 1]} : vector<4x96xf32> to vector<4x32xf32>
    %275 = vector.extract_strided_slice %265 {offsets = [0, 96], sizes = [4, 32], strides = [1, 1]} : vector<4x128xf32> to vector<4x32xf32>
    %276 = math.tanh %275 : vector<4x32xf32>
    %277 = arith.mulf %273, %258 : vector<4x32xf32>
    %278 = arith.mulf %272, %276 : vector<4x32xf32>
    %279 = arith.addf %277, %278 : vector<4x32xf32>
    %280 = math.tanh %279 : vector<4x32xf32>
    %281 = arith.mulf %274, %280 : vector<4x32xf32>
    %282 = tpu.concatenate %281, %281 in 1 : vector<4x32xf32>, vector<4x32xf32> -> vector<4x64xf32>
    %283 = arith.mulf %282, %16 : vector<4x64xf32>
    %284 = vector.extract_strided_slice %247 {offsets = [2, 0], sizes = [2, 128], strides = [1, 1]} : vector<16x256xf32> to vector<2x128xf32>
    %285 = vector.extract_strided_slice %247 {offsets = [12, 128], sizes = [2, 128], strides = [1, 1]} : vector<16x256xf32> to vector<2x128xf32>
    %286 = tpu.concatenate %284, %285 in 0 : vector<2x128xf32>, vector<2x128xf32> -> vector<4x128xf32>
    %cst_49 = arith.constant dense<0.000000e+00> : vector<4x128xf32>
    %287 = tpu.matmul %283, %248, %cst_49 {dimension_numbers = #tpu.dot_dimension_numbers<[1], [0], [0], [1], [0, 0, 1, 1], [], []>} : vector<4x64xf32>, vector<64x128xf32>, vector<4x128xf32> -> vector<4x128xf32>
    %288 = arith.addf %286, %287 : vector<4x128xf32>
    %289 = vector.extract_strided_slice %288 {offsets = [0, 0], sizes = [4, 96], strides = [1, 1]} : vector<4x128xf32> to vector<4x96xf32>
    %290 = arith.negf %289 : vector<4x96xf32>
    %291 = math.exp %290 : vector<4x96xf32>
    %cst_50 = arith.constant 1.000000e+00 : f32
    %292 = vector.broadcast %cst_50 : f32 to vector<4x96xf32>
    %293 = arith.addf %292, %291 : vector<4x96xf32>
    %294 = arith.divf %292, %293 : vector<4x96xf32>
    %295 = vector.extract_strided_slice %294 {offsets = [0, 0], sizes = [4, 32], strides = [1, 1]} : vector<4x96xf32> to vector<4x32xf32>
    %296 = vector.extract_strided_slice %294 {offsets = [0, 32], sizes = [4, 32], strides = [1, 1]} : vector<4x96xf32> to vector<4x32xf32>
    %297 = vector.extract_strided_slice %294 {offsets = [0, 64], sizes = [4, 32], strides = [1, 1]} : vector<4x96xf32> to vector<4x32xf32>
    %298 = vector.extract_strided_slice %288 {offsets = [0, 96], sizes = [4, 32], strides = [1, 1]} : vector<4x128xf32> to vector<4x32xf32>
    %299 = math.tanh %298 : vector<4x32xf32>
    %300 = arith.mulf %296, %279 : vector<4x32xf32>
    %301 = arith.mulf %295, %299 : vector<4x32xf32>
    %302 = arith.addf %300, %301 : vector<4x32xf32>
    %303 = math.tanh %302 : vector<4x32xf32>
    %304 = arith.mulf %297, %303 : vector<4x32xf32>
    %305 = tpu.concatenate %304, %304 in 1 : vector<4x32xf32>, vector<4x32xf32> -> vector<4x64xf32>
    %306 = arith.mulf %305, %16 : vector<4x64xf32>
    %307 = vector.extract_strided_slice %247 {offsets = [4, 0], sizes = [2, 128], strides = [1, 1]} : vector<16x256xf32> to vector<2x128xf32>
    %308 = vector.extract_strided_slice %247 {offsets = [10, 128], sizes = [2, 128], strides = [1, 1]} : vector<16x256xf32> to vector<2x128xf32>
    %309 = tpu.concatenate %307, %308 in 0 : vector<2x128xf32>, vector<2x128xf32> -> vector<4x128xf32>
    %cst_51 = arith.constant dense<0.000000e+00> : vector<4x128xf32>
    %310 = tpu.matmul %306, %248, %cst_51 {dimension_numbers = #tpu.dot_dimension_numbers<[1], [0], [0], [1], [0, 0, 1, 1], [], []>} : vector<4x64xf32>, vector<64x128xf32>, vector<4x128xf32> -> vector<4x128xf32>
    %311 = arith.addf %309, %310 : vector<4x128xf32>
    %312 = vector.extract_strided_slice %311 {offsets = [0, 0], sizes = [4, 96], strides = [1, 1]} : vector<4x128xf32> to vector<4x96xf32>
    %313 = arith.negf %312 : vector<4x96xf32>
    %314 = math.exp %313 : vector<4x96xf32>
    %cst_52 = arith.constant 1.000000e+00 : f32
    %315 = vector.broadcast %cst_52 : f32 to vector<4x96xf32>
    %316 = arith.addf %315, %314 : vector<4x96xf32>
    %317 = arith.divf %315, %316 : vector<4x96xf32>
    %318 = vector.extract_strided_slice %317 {offsets = [0, 0], sizes = [4, 32], strides = [1, 1]} : vector<4x96xf32> to vector<4x32xf32>
    %319 = vector.extract_strided_slice %317 {offsets = [0, 32], sizes = [4, 32], strides = [1, 1]} : vector<4x96xf32> to vector<4x32xf32>
    %320 = vector.extract_strided_slice %317 {offsets = [0, 64], sizes = [4, 32], strides = [1, 1]} : vector<4x96xf32> to vector<4x32xf32>
    %321 = vector.extract_strided_slice %311 {offsets = [0, 96], sizes = [4, 32], strides = [1, 1]} : vector<4x128xf32> to vector<4x32xf32>
    %322 = math.tanh %321 : vector<4x32xf32>
    %323 = arith.mulf %319, %302 : vector<4x32xf32>
    %324 = arith.mulf %318, %322 : vector<4x32xf32>
    %325 = arith.addf %323, %324 : vector<4x32xf32>
    %326 = math.tanh %325 : vector<4x32xf32>
    %327 = arith.mulf %320, %326 : vector<4x32xf32>
    %328 = tpu.concatenate %327, %327 in 1 : vector<4x32xf32>, vector<4x32xf32> -> vector<4x64xf32>
    %329 = arith.mulf %328, %16 : vector<4x64xf32>
    %330 = vector.extract_strided_slice %247 {offsets = [6, 0], sizes = [2, 128], strides = [1, 1]} : vector<16x256xf32> to vector<2x128xf32>
    %331 = vector.extract_strided_slice %247 {offsets = [8, 128], sizes = [2, 128], strides = [1, 1]} : vector<16x256xf32> to vector<2x128xf32>
    %332 = tpu.concatenate %330, %331 in 0 : vector<2x128xf32>, vector<2x128xf32> -> vector<4x128xf32>
    %cst_53 = arith.constant dense<0.000000e+00> : vector<4x128xf32>
    %333 = tpu.matmul %329, %248, %cst_53 {dimension_numbers = #tpu.dot_dimension_numbers<[1], [0], [0], [1], [0, 0, 1, 1], [], []>} : vector<4x64xf32>, vector<64x128xf32>, vector<4x128xf32> -> vector<4x128xf32>
    %334 = arith.addf %332, %333 : vector<4x128xf32>
    %335 = vector.extract_strided_slice %334 {offsets = [0, 0], sizes = [4, 96], strides = [1, 1]} : vector<4x128xf32> to vector<4x96xf32>
    %336 = arith.negf %335 : vector<4x96xf32>
    %337 = math.exp %336 : vector<4x96xf32>
    %cst_54 = arith.constant 1.000000e+00 : f32
    %338 = vector.broadcast %cst_54 : f32 to vector<4x96xf32>
    %339 = arith.addf %338, %337 : vector<4x96xf32>
    %340 = arith.divf %338, %339 : vector<4x96xf32>
    %341 = vector.extract_strided_slice %340 {offsets = [0, 0], sizes = [4, 32], strides = [1, 1]} : vector<4x96xf32> to vector<4x32xf32>
    %342 = vector.extract_strided_slice %340 {offsets = [0, 32], sizes = [4, 32], strides = [1, 1]} : vector<4x96xf32> to vector<4x32xf32>
    %343 = vector.extract_strided_slice %340 {offsets = [0, 64], sizes = [4, 32], strides = [1, 1]} : vector<4x96xf32> to vector<4x32xf32>
    %344 = vector.extract_strided_slice %334 {offsets = [0, 96], sizes = [4, 32], strides = [1, 1]} : vector<4x128xf32> to vector<4x32xf32>
    %345 = math.tanh %344 : vector<4x32xf32>
    %346 = arith.mulf %342, %325 : vector<4x32xf32>
    %347 = arith.mulf %341, %345 : vector<4x32xf32>
    %348 = arith.addf %346, %347 : vector<4x32xf32>
    %349 = math.tanh %348 : vector<4x32xf32>
    %350 = arith.mulf %343, %349 : vector<4x32xf32>
    %351 = tpu.concatenate %350, %350 in 1 : vector<4x32xf32>, vector<4x32xf32> -> vector<4x64xf32>
    %352 = arith.mulf %351, %16 : vector<4x64xf32>
    %353 = vector.extract_strided_slice %247 {offsets = [8, 0], sizes = [2, 128], strides = [1, 1]} : vector<16x256xf32> to vector<2x128xf32>
    %354 = vector.extract_strided_slice %247 {offsets = [6, 128], sizes = [2, 128], strides = [1, 1]} : vector<16x256xf32> to vector<2x128xf32>
    %355 = tpu.concatenate %353, %354 in 0 : vector<2x128xf32>, vector<2x128xf32> -> vector<4x128xf32>
    %cst_55 = arith.constant dense<0.000000e+00> : vector<4x128xf32>
    %356 = tpu.matmul %352, %248, %cst_55 {dimension_numbers = #tpu.dot_dimension_numbers<[1], [0], [0], [1], [0, 0, 1, 1], [], []>} : vector<4x64xf32>, vector<64x128xf32>, vector<4x128xf32> -> vector<4x128xf32>
    %357 = arith.addf %355, %356 : vector<4x128xf32>
    %358 = vector.extract_strided_slice %357 {offsets = [0, 0], sizes = [4, 96], strides = [1, 1]} : vector<4x128xf32> to vector<4x96xf32>
    %359 = arith.negf %358 : vector<4x96xf32>
    %360 = math.exp %359 : vector<4x96xf32>
    %cst_56 = arith.constant 1.000000e+00 : f32
    %361 = vector.broadcast %cst_56 : f32 to vector<4x96xf32>
    %362 = arith.addf %361, %360 : vector<4x96xf32>
    %363 = arith.divf %361, %362 : vector<4x96xf32>
    %364 = vector.extract_strided_slice %363 {offsets = [0, 0], sizes = [4, 32], strides = [1, 1]} : vector<4x96xf32> to vector<4x32xf32>
    %365 = vector.extract_strided_slice %363 {offsets = [0, 32], sizes = [4, 32], strides = [1, 1]} : vector<4x96xf32> to vector<4x32xf32>
    %366 = vector.extract_strided_slice %363 {offsets = [0, 64], sizes = [4, 32], strides = [1, 1]} : vector<4x96xf32> to vector<4x32xf32>
    %367 = vector.extract_strided_slice %357 {offsets = [0, 96], sizes = [4, 32], strides = [1, 1]} : vector<4x128xf32> to vector<4x32xf32>
    %368 = math.tanh %367 : vector<4x32xf32>
    %369 = arith.mulf %365, %348 : vector<4x32xf32>
    %370 = arith.mulf %364, %368 : vector<4x32xf32>
    %371 = arith.addf %369, %370 : vector<4x32xf32>
    %372 = math.tanh %371 : vector<4x32xf32>
    %373 = arith.mulf %366, %372 : vector<4x32xf32>
    %374 = tpu.concatenate %373, %373 in 1 : vector<4x32xf32>, vector<4x32xf32> -> vector<4x64xf32>
    %375 = arith.mulf %374, %16 : vector<4x64xf32>
    %376 = vector.extract_strided_slice %247 {offsets = [10, 0], sizes = [2, 128], strides = [1, 1]} : vector<16x256xf32> to vector<2x128xf32>
    %377 = vector.extract_strided_slice %247 {offsets = [4, 128], sizes = [2, 128], strides = [1, 1]} : vector<16x256xf32> to vector<2x128xf32>
    %378 = tpu.concatenate %376, %377 in 0 : vector<2x128xf32>, vector<2x128xf32> -> vector<4x128xf32>
    %cst_57 = arith.constant dense<0.000000e+00> : vector<4x128xf32>
    %379 = tpu.matmul %375, %248, %cst_57 {dimension_numbers = #tpu.dot_dimension_numbers<[1], [0], [0], [1], [0, 0, 1, 1], [], []>} : vector<4x64xf32>, vector<64x128xf32>, vector<4x128xf32> -> vector<4x128xf32>
    %380 = arith.addf %378, %379 : vector<4x128xf32>
    %381 = vector.extract_strided_slice %380 {offsets = [0, 0], sizes = [4, 96], strides = [1, 1]} : vector<4x128xf32> to vector<4x96xf32>
    %382 = arith.negf %381 : vector<4x96xf32>
    %383 = math.exp %382 : vector<4x96xf32>
    %cst_58 = arith.constant 1.000000e+00 : f32
    %384 = vector.broadcast %cst_58 : f32 to vector<4x96xf32>
    %385 = arith.addf %384, %383 : vector<4x96xf32>
    %386 = arith.divf %384, %385 : vector<4x96xf32>
    %387 = vector.extract_strided_slice %386 {offsets = [0, 0], sizes = [4, 32], strides = [1, 1]} : vector<4x96xf32> to vector<4x32xf32>
    %388 = vector.extract_strided_slice %386 {offsets = [0, 32], sizes = [4, 32], strides = [1, 1]} : vector<4x96xf32> to vector<4x32xf32>
    %389 = vector.extract_strided_slice %386 {offsets = [0, 64], sizes = [4, 32], strides = [1, 1]} : vector<4x96xf32> to vector<4x32xf32>
    %390 = vector.extract_strided_slice %380 {offsets = [0, 96], sizes = [4, 32], strides = [1, 1]} : vector<4x128xf32> to vector<4x32xf32>
    %391 = math.tanh %390 : vector<4x32xf32>
    %392 = arith.mulf %388, %371 : vector<4x32xf32>
    %393 = arith.mulf %387, %391 : vector<4x32xf32>
    %394 = arith.addf %392, %393 : vector<4x32xf32>
    %395 = math.tanh %394 : vector<4x32xf32>
    %396 = arith.mulf %389, %395 : vector<4x32xf32>
    %397 = tpu.concatenate %396, %396 in 1 : vector<4x32xf32>, vector<4x32xf32> -> vector<4x64xf32>
    %398 = arith.mulf %397, %16 : vector<4x64xf32>
    %399 = vector.extract_strided_slice %247 {offsets = [12, 0], sizes = [2, 128], strides = [1, 1]} : vector<16x256xf32> to vector<2x128xf32>
    %400 = vector.extract_strided_slice %247 {offsets = [2, 128], sizes = [2, 128], strides = [1, 1]} : vector<16x256xf32> to vector<2x128xf32>
    %401 = tpu.concatenate %399, %400 in 0 : vector<2x128xf32>, vector<2x128xf32> -> vector<4x128xf32>
    %cst_59 = arith.constant dense<0.000000e+00> : vector<4x128xf32>
    %402 = tpu.matmul %398, %248, %cst_59 {dimension_numbers = #tpu.dot_dimension_numbers<[1], [0], [0], [1], [0, 0, 1, 1], [], []>} : vector<4x64xf32>, vector<64x128xf32>, vector<4x128xf32> -> vector<4x128xf32>
    %403 = arith.addf %401, %402 : vector<4x128xf32>
    %404 = vector.extract_strided_slice %403 {offsets = [0, 0], sizes = [4, 96], strides = [1, 1]} : vector<4x128xf32> to vector<4x96xf32>
    %405 = arith.negf %404 : vector<4x96xf32>
    %406 = math.exp %405 : vector<4x96xf32>
    %cst_60 = arith.constant 1.000000e+00 : f32
    %407 = vector.broadcast %cst_60 : f32 to vector<4x96xf32>
    %408 = arith.addf %407, %406 : vector<4x96xf32>
    %409 = arith.divf %407, %408 : vector<4x96xf32>
    %410 = vector.extract_strided_slice %409 {offsets = [0, 0], sizes = [4, 32], strides = [1, 1]} : vector<4x96xf32> to vector<4x32xf32>
    %411 = vector.extract_strided_slice %409 {offsets = [0, 32], sizes = [4, 32], strides = [1, 1]} : vector<4x96xf32> to vector<4x32xf32>
    %412 = vector.extract_strided_slice %409 {offsets = [0, 64], sizes = [4, 32], strides = [1, 1]} : vector<4x96xf32> to vector<4x32xf32>
    %413 = vector.extract_strided_slice %403 {offsets = [0, 96], sizes = [4, 32], strides = [1, 1]} : vector<4x128xf32> to vector<4x32xf32>
    %414 = math.tanh %413 : vector<4x32xf32>
    %415 = arith.mulf %411, %394 : vector<4x32xf32>
    %416 = arith.mulf %410, %414 : vector<4x32xf32>
    %417 = arith.addf %415, %416 : vector<4x32xf32>
    %418 = math.tanh %417 : vector<4x32xf32>
    %419 = arith.mulf %412, %418 : vector<4x32xf32>
    %420 = tpu.concatenate %419, %419 in 1 : vector<4x32xf32>, vector<4x32xf32> -> vector<4x64xf32>
    %421 = arith.mulf %420, %16 : vector<4x64xf32>
    %422 = vector.extract_strided_slice %247 {offsets = [14, 0], sizes = [2, 128], strides = [1, 1]} : vector<16x256xf32> to vector<2x128xf32>
    %423 = vector.extract_strided_slice %247 {offsets = [0, 128], sizes = [2, 128], strides = [1, 1]} : vector<16x256xf32> to vector<2x128xf32>
    %424 = tpu.concatenate %422, %423 in 0 : vector<2x128xf32>, vector<2x128xf32> -> vector<4x128xf32>
    %cst_61 = arith.constant dense<0.000000e+00> : vector<4x128xf32>
    %425 = tpu.matmul %421, %248, %cst_61 {dimension_numbers = #tpu.dot_dimension_numbers<[1], [0], [0], [1], [0, 0, 1, 1], [], []>} : vector<4x64xf32>, vector<64x128xf32>, vector<4x128xf32> -> vector<4x128xf32>
    %426 = arith.addf %424, %425 : vector<4x128xf32>
    %427 = vector.extract_strided_slice %426 {offsets = [0, 0], sizes = [4, 96], strides = [1, 1]} : vector<4x128xf32> to vector<4x96xf32>
    %428 = arith.negf %427 : vector<4x96xf32>
    %429 = math.exp %428 : vector<4x96xf32>
    %cst_62 = arith.constant 1.000000e+00 : f32
    %430 = vector.broadcast %cst_62 : f32 to vector<4x96xf32>
    %431 = arith.addf %430, %429 : vector<4x96xf32>
    %432 = arith.divf %430, %431 : vector<4x96xf32>
    %433 = vector.extract_strided_slice %432 {offsets = [0, 0], sizes = [4, 32], strides = [1, 1]} : vector<4x96xf32> to vector<4x32xf32>
    %434 = vector.extract_strided_slice %432 {offsets = [0, 32], sizes = [4, 32], strides = [1, 1]} : vector<4x96xf32> to vector<4x32xf32>
    %435 = vector.extract_strided_slice %432 {offsets = [0, 64], sizes = [4, 32], strides = [1, 1]} : vector<4x96xf32> to vector<4x32xf32>
    %436 = vector.extract_strided_slice %426 {offsets = [0, 96], sizes = [4, 32], strides = [1, 1]} : vector<4x128xf32> to vector<4x32xf32>
    %437 = math.tanh %436 : vector<4x32xf32>
    %438 = arith.mulf %434, %417 : vector<4x32xf32>
    %439 = arith.mulf %433, %437 : vector<4x32xf32>
    %440 = arith.addf %438, %439 : vector<4x32xf32>
    %441 = math.tanh %440 : vector<4x32xf32>
    %442 = arith.mulf %435, %441 : vector<4x32xf32>
    %443 = vector.extract_strided_slice %281 {offsets = [0, 0], sizes = [2, 32], strides = [1, 1]} : vector<4x32xf32> to vector<2x32xf32>
    %444 = vector.extract_strided_slice %442 {offsets = [2, 0], sizes = [2, 32], strides = [1, 1]} : vector<4x32xf32> to vector<2x32xf32>
    %445 = tpu.concatenate %443, %444 in 1 : vector<2x32xf32>, vector<2x32xf32> -> vector<2x64xf32>
    %446 = vector.extract_strided_slice %304 {offsets = [0, 0], sizes = [2, 32], strides = [1, 1]} : vector<4x32xf32> to vector<2x32xf32>
    %447 = vector.extract_strided_slice %419 {offsets = [2, 0], sizes = [2, 32], strides = [1, 1]} : vector<4x32xf32> to vector<2x32xf32>
    %448 = tpu.concatenate %446, %447 in 1 : vector<2x32xf32>, vector<2x32xf32> -> vector<2x64xf32>
    %449 = vector.extract_strided_slice %327 {offsets = [0, 0], sizes = [2, 32], strides = [1, 1]} : vector<4x32xf32> to vector<2x32xf32>
    %450 = vector.extract_strided_slice %396 {offsets = [2, 0], sizes = [2, 32], strides = [1, 1]} : vector<4x32xf32> to vector<2x32xf32>
    %451 = tpu.concatenate %449, %450 in 1 : vector<2x32xf32>, vector<2x32xf32> -> vector<2x64xf32>
    %452 = vector.extract_strided_slice %350 {offsets = [0, 0], sizes = [2, 32], strides = [1, 1]} : vector<4x32xf32> to vector<2x32xf32>
    %453 = vector.extract_strided_slice %373 {offsets = [2, 0], sizes = [2, 32], strides = [1, 1]} : vector<4x32xf32> to vector<2x32xf32>
    %454 = tpu.concatenate %452, %453 in 1 : vector<2x32xf32>, vector<2x32xf32> -> vector<2x64xf32>
    %455 = vector.extract_strided_slice %373 {offsets = [0, 0], sizes = [2, 32], strides = [1, 1]} : vector<4x32xf32> to vector<2x32xf32>
    %456 = vector.extract_strided_slice %350 {offsets = [2, 0], sizes = [2, 32], strides = [1, 1]} : vector<4x32xf32> to vector<2x32xf32>
    %457 = tpu.concatenate %455, %456 in 1 : vector<2x32xf32>, vector<2x32xf32> -> vector<2x64xf32>
    %458 = vector.extract_strided_slice %396 {offsets = [0, 0], sizes = [2, 32], strides = [1, 1]} : vector<4x32xf32> to vector<2x32xf32>
    %459 = vector.extract_strided_slice %327 {offsets = [2, 0], sizes = [2, 32], strides = [1, 1]} : vector<4x32xf32> to vector<2x32xf32>
    %460 = tpu.concatenate %458, %459 in 1 : vector<2x32xf32>, vector<2x32xf32> -> vector<2x64xf32>
    %461 = vector.extract_strided_slice %419 {offsets = [0, 0], sizes = [2, 32], strides = [1, 1]} : vector<4x32xf32> to vector<2x32xf32>
    %462 = vector.extract_strided_slice %304 {offsets = [2, 0], sizes = [2, 32], strides = [1, 1]} : vector<4x32xf32> to vector<2x32xf32>
    %463 = tpu.concatenate %461, %462 in 1 : vector<2x32xf32>, vector<2x32xf32> -> vector<2x64xf32>
    %464 = vector.extract_strided_slice %442 {offsets = [0, 0], sizes = [2, 32], strides = [1, 1]} : vector<4x32xf32> to vector<2x32xf32>
    %465 = vector.extract_strided_slice %281 {offsets = [2, 0], sizes = [2, 32], strides = [1, 1]} : vector<4x32xf32> to vector<2x32xf32>
    %466 = tpu.concatenate %464, %465 in 1 : vector<2x32xf32>, vector<2x32xf32> -> vector<2x64xf32>
    %467 = vector.extract_strided_slice %445 {offsets = [0, 0], sizes = [1, 64], strides = [1, 1]} : vector<2x64xf32> to vector<1x64xf32>
    %468 = vector.extract_strided_slice %445 {offsets = [1, 0], sizes = [1, 64], strides = [1, 1]} : vector<2x64xf32> to vector<1x64xf32>
    %469 = tpu.concatenate %467, %468 in 1 : vector<1x64xf32>, vector<1x64xf32> -> vector<1x128xf32>
    %470 = vector.extract_strided_slice %448 {offsets = [0, 0], sizes = [1, 64], strides = [1, 1]} : vector<2x64xf32> to vector<1x64xf32>
    %471 = vector.extract_strided_slice %448 {offsets = [1, 0], sizes = [1, 64], strides = [1, 1]} : vector<2x64xf32> to vector<1x64xf32>
    %472 = tpu.concatenate %470, %471 in 1 : vector<1x64xf32>, vector<1x64xf32> -> vector<1x128xf32>
    %473 = vector.extract_strided_slice %451 {offsets = [0, 0], sizes = [1, 64], strides = [1, 1]} : vector<2x64xf32> to vector<1x64xf32>
    %474 = vector.extract_strided_slice %451 {offsets = [1, 0], sizes = [1, 64], strides = [1, 1]} : vector<2x64xf32> to vector<1x64xf32>
    %475 = tpu.concatenate %473, %474 in 1 : vector<1x64xf32>, vector<1x64xf32> -> vector<1x128xf32>
    %476 = vector.extract_strided_slice %454 {offsets = [0, 0], sizes = [1, 64], strides = [1, 1]} : vector<2x64xf32> to vector<1x64xf32>
    %477 = vector.extract_strided_slice %454 {offsets = [1, 0], sizes = [1, 64], strides = [1, 1]} : vector<2x64xf32> to vector<1x64xf32>
    %478 = tpu.concatenate %476, %477 in 1 : vector<1x64xf32>, vector<1x64xf32> -> vector<1x128xf32>
    %479 = vector.extract_strided_slice %457 {offsets = [0, 0], sizes = [1, 64], strides = [1, 1]} : vector<2x64xf32> to vector<1x64xf32>
    %480 = vector.extract_strided_slice %457 {offsets = [1, 0], sizes = [1, 64], strides = [1, 1]} : vector<2x64xf32> to vector<1x64xf32>
    %481 = tpu.concatenate %479, %480 in 1 : vector<1x64xf32>, vector<1x64xf32> -> vector<1x128xf32>
    %482 = vector.extract_strided_slice %460 {offsets = [0, 0], sizes = [1, 64], strides = [1, 1]} : vector<2x64xf32> to vector<1x64xf32>
    %483 = vector.extract_strided_slice %460 {offsets = [1, 0], sizes = [1, 64], strides = [1, 1]} : vector<2x64xf32> to vector<1x64xf32>
    %484 = tpu.concatenate %482, %483 in 1 : vector<1x64xf32>, vector<1x64xf32> -> vector<1x128xf32>
    %485 = vector.extract_strided_slice %463 {offsets = [0, 0], sizes = [1, 64], strides = [1, 1]} : vector<2x64xf32> to vector<1x64xf32>
    %486 = vector.extract_strided_slice %463 {offsets = [1, 0], sizes = [1, 64], strides = [1, 1]} : vector<2x64xf32> to vector<1x64xf32>
    %487 = tpu.concatenate %485, %486 in 1 : vector<1x64xf32>, vector<1x64xf32> -> vector<1x128xf32>
    %488 = vector.extract_strided_slice %466 {offsets = [0, 0], sizes = [1, 64], strides = [1, 1]} : vector<2x64xf32> to vector<1x64xf32>
    %489 = vector.extract_strided_slice %466 {offsets = [1, 0], sizes = [1, 64], strides = [1, 1]} : vector<2x64xf32> to vector<1x64xf32>
    %490 = tpu.concatenate %488, %489 in 1 : vector<1x64xf32>, vector<1x64xf32> -> vector<1x128xf32>
    %491 = tpu.concatenate %469, %472, %475, %478, %481, %484, %487, %490 in 0 : vector<1x128xf32>, vector<1x128xf32>, vector<1x128xf32>, vector<1x128xf32>, vector<1x128xf32>, vector<1x128xf32>, vector<1x128xf32>, vector<1x128xf32> -> vector<8x128xf32>
    %c0_63 = arith.constant 0 : index
    %c0_64 = arith.constant 0 : index
    %492 = vector.load %arg6[%c0_63, %c0_64] : memref<8x128xf32, #tpu.memory_space<vmem>>, vector<8x128xf32>
    tpu.vector_store %arg6[%c0_63, %c0_64], %491 {strides = array<i32>} : memref<8x128xf32, #tpu.memory_space<vmem>>, vector<8x128xf32>,
    %c2_65 = arith.constant 2 : index
    %c0_66 = arith.constant 0 : index
    %493 = vector.load %arg4[%c2_65, %c0_66] : memref<3x256xf32, #tpu.memory_space<vmem>>, vector<1x64xf32>
    %c2_67 = arith.constant 2 : index
    %c64_68 = arith.constant 64 : index
    %494 = vector.load %arg4[%c2_67, %c64_68] : memref<3x256xf32, #tpu.memory_space<vmem>>, vector<1x1xf32>
    %495 = tpu.concatenate %493, %493 in 1 : vector<1x64xf32>, vector<1x64xf32> -> vector<1x128xf32>
    %496 = vector.broadcast %495 : vector<1x128xf32> to vector<8x128xf32>
    %497 = arith.mulf %491, %496 : vector<8x128xf32>
    %498 = vector.extract_strided_slice %497 {offsets = [0, 0], sizes = [8, 64], strides = [1, 1]} : vector<8x128xf32> to vector<8x64xf32>
    %cst_69 = arith.constant dense<0.000000e+00> : vector<8xf32>
    %499 = vector.multi_reduction <add>, %498, %cst_69 [1] : vector<8x64xf32> to vector<8xf32>
    %500 = vector.shape_cast %499 : vector<8xf32> to vector<8x1xf32>
    %501 = vector.extract_strided_slice %497 {offsets = [0, 64], sizes = [8, 64], strides = [1, 1]} : vector<8x128xf32> to vector<8x64xf32>
    %cst_70 = arith.constant dense<0.000000e+00> : vector<8xf32>
    %502 = vector.multi_reduction <add>, %501, %cst_70 [1] : vector<8x64xf32> to vector<8xf32>
    %503 = vector.shape_cast %502 : vector<8xf32> to vector<8x1xf32>
    %504 = tpu.concatenate %500, %503 in 1 : vector<8x1xf32>, vector<8x1xf32> -> vector<8x2xf32>
    %505 = vector.broadcast %494 : vector<1x1xf32> to vector<8x2xf32>
    %506 = arith.addf %504, %505 : vector<8x2xf32>
    %507 = arith.negf %506 : vector<8x2xf32>
    %508 = math.exp %507 : vector<8x2xf32>
    %cst_71 = arith.constant 1.000000e+00 : f32
    %509 = vector.broadcast %cst_71 : f32 to vector<8x2xf32>
    %510 = arith.addf %509, %508 : vector<8x2xf32>
    %511 = arith.divf %509, %510 : vector<8x2xf32>
    %cst_72 = arith.constant dense<0.000000e+00> : vector<2xf32>
    %512 = vector.multi_reduction <add>, %511, %cst_72 [0] : vector<8x2xf32> to vector<2xf32>
    %513 = vector.shape_cast %512 : vector<2xf32> to vector<1x2xf32>
    %cst_73 = arith.constant 1.250000e-01 : f32
    %514 = vector.broadcast %cst_73 : f32 to vector<1x2xf32>
    %515 = arith.mulf %513, %514 : vector<1x2xf32>
    %c0_74 = arith.constant 0 : index
    %c0_75 = arith.constant 0 : index
    %516 = vector.load %arg5[%c0_74, %c0_75] : memref<1x2xf32, #tpu.memory_space<vmem>>, vector<1x2xf32>
    tpu.vector_store %arg5[%c0_74, %c0_75], %515 {strides = array<i32>} : memref<1x2xf32, #tpu.memory_space<vmem>>, vector<1x2xf32>,
    %517 = vector.extract_strided_slice %217 {offsets = [0, 0], sizes = [2, 32], strides = [1, 1]} : vector<4x32xf32> to vector<2x32xf32>
    %518 = vector.extract_strided_slice %517 {offsets = [0, 0], sizes = [1, 32], strides = [1, 1]} : vector<2x32xf32> to vector<1x32xf32>
    %519 = vector.extract_strided_slice %517 {offsets = [1, 0], sizes = [1, 32], strides = [1, 1]} : vector<2x32xf32> to vector<1x32xf32>
    %520 = tpu.concatenate %518, %519 in 1 : vector<1x32xf32>, vector<1x32xf32> -> vector<1x64xf32>
    %521 = vector.extract_strided_slice %215 {offsets = [0, 0], sizes = [2, 32], strides = [1, 1]} : vector<4x32xf32> to vector<2x32xf32>
    %522 = vector.extract_strided_slice %521 {offsets = [0, 0], sizes = [1, 32], strides = [1, 1]} : vector<2x32xf32> to vector<1x32xf32>
    %523 = vector.extract_strided_slice %521 {offsets = [1, 0], sizes = [1, 32], strides = [1, 1]} : vector<2x32xf32> to vector<1x32xf32>
    %524 = tpu.concatenate %522, %523 in 1 : vector<1x32xf32>, vector<1x32xf32> -> vector<1x64xf32>
    %525 = tpu.concatenate %520, %524 in 1 : vector<1x64xf32>, vector<1x64xf32> -> vector<1x128xf32>
    %526 = vector.extract_strided_slice %217 {offsets = [2, 0], sizes = [2, 32], strides = [1, 1]} : vector<4x32xf32> to vector<2x32xf32>
    %527 = vector.extract_strided_slice %526 {offsets = [0, 0], sizes = [1, 32], strides = [1, 1]} : vector<2x32xf32> to vector<1x32xf32>
    %528 = vector.extract_strided_slice %526 {offsets = [1, 0], sizes = [1, 32], strides = [1, 1]} : vector<2x32xf32> to vector<1x32xf32>
    %529 = tpu.concatenate %527, %528 in 1 : vector<1x32xf32>, vector<1x32xf32> -> vector<1x64xf32>
    %530 = vector.extract_strided_slice %215 {offsets = [2, 0], sizes = [2, 32], strides = [1, 1]} : vector<4x32xf32> to vector<2x32xf32>
    %531 = vector.extract_strided_slice %530 {offsets = [0, 0], sizes = [1, 32], strides = [1, 1]} : vector<2x32xf32> to vector<1x32xf32>
    %532 = vector.extract_strided_slice %530 {offsets = [1, 0], sizes = [1, 32], strides = [1, 1]} : vector<2x32xf32> to vector<1x32xf32>
    %533 = tpu.concatenate %531, %532 in 1 : vector<1x32xf32>, vector<1x32xf32> -> vector<1x64xf32>
    %534 = tpu.concatenate %529, %533 in 1 : vector<1x64xf32>, vector<1x64xf32> -> vector<1x128xf32>
    %535 = vector.extract_strided_slice %442 {offsets = [0, 0], sizes = [2, 32], strides = [1, 1]} : vector<4x32xf32> to vector<2x32xf32>
    %536 = vector.extract_strided_slice %535 {offsets = [0, 0], sizes = [1, 32], strides = [1, 1]} : vector<2x32xf32> to vector<1x32xf32>
    %537 = vector.extract_strided_slice %535 {offsets = [1, 0], sizes = [1, 32], strides = [1, 1]} : vector<2x32xf32> to vector<1x32xf32>
    %538 = tpu.concatenate %536, %537 in 1 : vector<1x32xf32>, vector<1x32xf32> -> vector<1x64xf32>
    %539 = vector.extract_strided_slice %440 {offsets = [0, 0], sizes = [2, 32], strides = [1, 1]} : vector<4x32xf32> to vector<2x32xf32>
    %540 = vector.extract_strided_slice %539 {offsets = [0, 0], sizes = [1, 32], strides = [1, 1]} : vector<2x32xf32> to vector<1x32xf32>
    %541 = vector.extract_strided_slice %539 {offsets = [1, 0], sizes = [1, 32], strides = [1, 1]} : vector<2x32xf32> to vector<1x32xf32>
    %542 = tpu.concatenate %540, %541 in 1 : vector<1x32xf32>, vector<1x32xf32> -> vector<1x64xf32>
    %543 = tpu.concatenate %538, %542 in 1 : vector<1x64xf32>, vector<1x64xf32> -> vector<1x128xf32>
    %544 = vector.extract_strided_slice %442 {offsets = [2, 0], sizes = [2, 32], strides = [1, 1]} : vector<4x32xf32> to vector<2x32xf32>
    %545 = vector.extract_strided_slice %544 {offsets = [0, 0], sizes = [1, 32], strides = [1, 1]} : vector<2x32xf32> to vector<1x32xf32>
    %546 = vector.extract_strided_slice %544 {offsets = [1, 0], sizes = [1, 32], strides = [1, 1]} : vector<2x32xf32> to vector<1x32xf32>
    %547 = tpu.concatenate %545, %546 in 1 : vector<1x32xf32>, vector<1x32xf32> -> vector<1x64xf32>
    %548 = vector.extract_strided_slice %440 {offsets = [2, 0], sizes = [2, 32], strides = [1, 1]} : vector<4x32xf32> to vector<2x32xf32>
    %549 = vector.extract_strided_slice %548 {offsets = [0, 0], sizes = [1, 32], strides = [1, 1]} : vector<2x32xf32> to vector<1x32xf32>
    %550 = vector.extract_strided_slice %548 {offsets = [1, 0], sizes = [1, 32], strides = [1, 1]} : vector<2x32xf32> to vector<1x32xf32>
    %551 = tpu.concatenate %549, %550 in 1 : vector<1x32xf32>, vector<1x32xf32> -> vector<1x64xf32>
    %552 = tpu.concatenate %547, %551 in 1 : vector<1x64xf32>, vector<1x64xf32> -> vector<1x128xf32>
    %553 = tpu.concatenate %525, %534, %543, %552 in 0 : vector<1x128xf32>, vector<1x128xf32>, vector<1x128xf32>, vector<1x128xf32> -> vector<4x128xf32>
    %c0_76 = arith.constant 0 : index
    %c0_77 = arith.constant 0 : index
    %554 = vector.load %arg7[%c0_76, %c0_77] : memref<4x128xf32, #tpu.memory_space<vmem>>, vector<4x128xf32>
    tpu.vector_store %arg7[%c0_76, %c0_77], %553 {strides = array<i32>} : memref<4x128xf32, #tpu.memory_space<vmem>>, vector<4x128xf32>,
    return
  }
}

</mosaic_0001>

<llo_original>
// kernel: discriminator_crnn_forward.1
$region0: #{discriminator_crnn_forward.1}
  #allocation0 [shape = 'u32[]', space=smem, size = 0x4, offset = 0x4, fixed_abs, tag = 'smem constant byte address 0x4 - core index']
  #allocation1 [shape = 'u32[144,128]{1,0:T(1,128)}', space=vmem, size = 0x12000, scoped, tag = 'internal scratch']
  %s0 = inlined_call_operand.vmem [shape: f32[16,4], index: 0, kind: input, shape index: {}]
  %s1 = inlined_call_operand.vmem [shape: f32[8,2,32], index: 1, kind: input, shape index: {}]
  %s2 = inlined_call_operand.vmem [shape: f32[72,256], index: 2, kind: input, shape index: {}]
  %s3 = inlined_call_operand.vmem [shape: f32[128,128], index: 3, kind: input, shape index: {}]
  %s4 = inlined_call_operand.vmem [shape: f32[3,256], index: 4, kind: input, shape index: {}]
  %s5 = inlined_call_operand.hbm [shape: f32[1,2], index: 5, kind: output, shape index: {0}]
  %s6 = inlined_call_operand.vmem [shape: f32[8,128], index: 6, kind: output, shape index: {1}]
  %s7 = inlined_call_operand.vmem [shape: f32[4,128], index: 7, kind: output, shape index: {2}]
  %8 = xla_tuple %s5, %s6, %s7
  %s9 = sld [smem:[#allocation0]]
  $region46: #{discriminator_crnn_forward.1} parent=0
    _
  %s11 = ssub.s32 1, %s9
  %s12 = scalar_select 0, %s11, %s9
  $region1: #{discriminator_crnn_forward.1} parent=0
    #allocation2 [shape = 'u8[512]{0}', space=vmem, size = 0x400, scoped, tag = 'output window, operand 0, single buffered']
    #allocation3 [shape = 's32[1]{0}', space=sflag, size = 0x4, scoped, tag = 'scoped memory for discriminator_crnn_forward.1']
    %13 = vsyncpa [#allocation3], 0
    // Predicated region
    $region2: #{discriminator_crnn_forward.1} parent=1 // pred_check
      _
    $region3: #{discriminator_crnn_forward.1} parent=1 // pred_check_branch
      %15 = sbr.rel (0) target = $region5
    $region4: #{discriminator_crnn_forward.1} parent=1 // pred_region
      _
    $region5: #{discriminator_crnn_forward.1} parent=1 // pred_fallthru
      _
    // Predicated region
    $region6: #{discriminator_crnn_forward.1} parent=1 // pred_check
      _
    $region7: #{discriminator_crnn_forward.1} parent=1 // pred_check_branch
      %17 = sbr.rel (0) target = $region9
    $region8: #{discriminator_crnn_forward.1} parent=1 // pred_region
      _
    $region9: #{discriminator_crnn_forward.1} parent=1 // pred_fallthru
      _
    // Predicated region
    $region10: #{discriminator_crnn_forward.1} parent=1 // pred_check
      _
    $region11: #{discriminator_crnn_forward.1} parent=1 // pred_check_branch
      %19 = sbr.rel (0) target = $region13
    $region12: #{discriminator_crnn_forward.1} parent=1 // pred_region
      _
    $region13: #{discriminator_crnn_forward.1} parent=1 // pred_fallthru
      _
    // Predicated region
    $region14: #{discriminator_crnn_forward.1} parent=1 // pred_check
      _
    $region15: #{discriminator_crnn_forward.1} parent=1 // pred_check_branch
      %21 = sbr.rel (0) target = $region17
    $region16: #{discriminator_crnn_forward.1} parent=1 // pred_region
      _
    $region17: #{discriminator_crnn_forward.1} parent=1 // pred_fallthru
      _
    // Predicated region
    $region18: #{discriminator_crnn_forward.1} parent=1 // pred_check
      _
    $region19: #{discriminator_crnn_forward.1} parent=1 // pred_check_branch
      %23 = sbr.rel (0) target = $region21
    $region20: #{discriminator_crnn_forward.1} parent=1 // pred_region
      _
    $region21: #{discriminator_crnn_forward.1} parent=1 // pred_fallthru
      _
    %v24 = vlaneseq
    %v25 = vshrl.u32 %v24, 7
    %v26 = vlaneseq
    %v27 = vand.u32 %v26, 127
    %vm28 = vcmp.lt.s32.totalorder %v25, 2
    %v29 = vsel %vm28, 1, 0
    %v30 = vcvt.s32.f32 %v29
    %vm31 = vcmp.lt.s32.totalorder %v27, 32
    %v32 = vsel %vm31, 1, 0
    %v33 = vcvt.s32.f32 %v32
    %v34 = vmul.f32 %v30, %v33
    %v35 = vsub.f32 1.0, %v30
    %v36 = vsub.f32 1.0, %v33
    %v37 = vmul.f32 %v35, %v36
    %v38 = vadd.f32 %v34, %v37
    %v39 = vld [vmem:[%s0] sm:$0xff]
    %v40 = vld [vmem:[%s0 + $0x8] sm:$0xff]
    %v41 = vld [vmem:[%s2] sm:$0xf]
    %v42 = vld [vmem:[%s2 + $0x8] sm:$0xf]
    %v43 = vld [vmem:[%s4] ss:$4 sm:$0x3]
    %v45 = vlaneseq
    %v46 = vshrl.u32 %v45, 7
    %v47 = vsub.s32 0, %v46
    %v48 = vrot.slane %v43, %v47
    %v49 = vlaneseq
    %v50 = vshrl.u32 %v49, 7
    %v51 = vsub.s32 1, %v50
    %v52 = vrot.slane %v43, %v51
    %vm55 = vcmask 31744
    %v57 = vsel %vm55, %v39, 0
    %v60 = vsel %vm55, %v40, 0
    %vm62 = vcmask 1043456
    %v64 = vsel %vm62, %v41, 0
    %v67 = vsel %vm62, %v42, 0
    %69 = vmatprep.subr.mxu0 %v67
    %70 = vmatpush1.msra.mxu0 %v64
    %71 = vmatprep.subr.mxu0 0.0
    %72 = vmatpush1.msra.mxu0 0.0
    %73 = vmatprep.subr.mxu0 0.0
    %74 = vmatpush1.msra.mxu0 0.0
    %75 = vmatprep.subr.mxu0 0.0
    %76 = vmatpush1.msra.mxu0 0.0
    %77 = vmatprep.subr.mxu0 0.0
    %78 = vmatpush1.msra.mxu0 0.0
    %79 = vmatprep.subr.mxu0 0.0
    %80 = vmatpush1.msra.mxu0 0.0
    %81 = vmatprep.subr.mxu0 0.0
    %82 = vmatpush1.msra.mxu0 0.0
    %83 = vmatprep.subr.mxu0 0.0
    %84 = vmatpush1.msra.mxu0 0.0
    %85 = vmatprep.subr.mxu0 0.0
    %86 = vmatpush1.msra.mxu0 0.0
    %87 = vmatprep.subr.mxu0 0.0
    %88 = vmatpush1.msra.mxu0 0.0
    %89 = vmatprep.subr.mxu0 0.0
    %90 = vmatpush1.msra.mxu0 0.0
    %91 = vmatprep.subr.mxu0 0.0
    %92 = vmatpush1.msra.mxu0 0.0
    %93 = vmatprep.subr.mxu0 0.0
    %94 = vmatpush1.msra.mxu0 0.0
    %95 = vmatprep.subr.mxu0 0.0
    %96 = vmatpush1.msra.mxu0 0.0
    %97 = vmatprep.subr.mxu0 0.0
    %98 = vmatpush1.msra.mxu0 0.0
    %99 = vmatprep.subr.mxu0 0.0
    %100 = vmatpush1.msra.mxu0 0.0
    %101 = vmatprep.subr.mxu0 0.0
    %102 = vmatpush1.msra.mxu0 0.0
    %103 = vmatprep.subr.mxu0 0.0
    %104 = vmatpush1.msra.mxu0 0.0
    %105 = vmatprep.subr.mxu0 0.0
    %106 = vmatpush1.msra.mxu0 0.0
    %107 = vmatprep.subr.mxu0 0.0
    %108 = vmatpush1.msra.mxu0 0.0
    %109 = vmatprep.subr.mxu0 0.0
    %110 = vmatpush1.msra.mxu0 0.0
    %111 = vmatprep.subr.mxu0 0.0
    %112 = vmatpush1.msra.mxu0 0.0
    %113 = vmatprep.subr.mxu0 0.0
    %114 = vmatpush1.msra.mxu0 0.0
    %115 = vmatprep.subr.mxu0 0.0
    %116 = vmatpush1.msra.mxu0 0.0
    %117 = vmatprep.subr.mxu0 0.0
    %118 = vmatpush1.msra.mxu0 0.0
    %119 = vmatprep.subr.mxu0 0.0
    %120 = vmatpush1.msra.mxu0 0.0
    %121 = vmatprep.subr.mxu0 0.0
    %122 = vmatpush1.msra.mxu0 0.0
    %123 = vmatprep.subr.mxu0 0.0
    %124 = vmatpush1.msra.mxu0 0.0
    %125 = vmatprep.subr.mxu0 0.0
    %126 = vmatpush1.msra.mxu0 0.0
    %127 = vmatprep.subr.mxu0 0.0
    %128 = vmatpush1.msra.mxu0 0.0
    %129 = vmatprep.subr.mxu0 0.0
    %130 = vmatpush1.msra.mxu0 0.0
    %131 = vmatprep.subr.mxu0 0.0
    %132 = vmatpush1.msra.mxu0 0.0
    %133 = vmatprep.mubr.f32.mxu0 0.0
    %134 = vmatmul.mubr.f32.gmra.mrb[0].mxu0 %v57
    %v135 = vpop.f32.mrb[0].mxu0
    %v136 = vadd.f32 %v48, %v135
    %v137 = vpop.f32.mrb[0].mxu0
    %v138 = vadd.f32 %v52, %v137
    %139 = vmatprep.mubr.f32.mxu0 0.0
    %140 = vmatmul.mubr.f32.gmra.mrb[0].mxu0 %v60
    %v141 = vpop.f32.mrb[0].mxu0
    %v142 = vadd.f32 %v48, %v141
    %v143 = vpop.f32.mrb[0].mxu0
    %v144 = vadd.f32 %v52, %v143
    %145 = vdwg.mxu0
    %v146 = vld [vmem:[%s3] sm:$0xff]
    %v147 = vld [vmem:[%s3 + $0x8] sm:$0xff]
    %v148 = vld [vmem:[%s3 + $0x10] sm:$0xff]
    %v149 = vld [vmem:[%s3 + $0x18] sm:$0xff]
    %v150 = vld [vmem:[%s3 + $0x20] sm:$0xff]
    %v151 = vld [vmem:[%s3 + $0x28] sm:$0xff]
    %v152 = vld [vmem:[%s3 + $0x30] sm:$0xff]
    %v153 = vld [vmem:[%s3 + $0x38] sm:$0xff]
    %v154 = vld [vmem:[%s1] sm:$0x3]
    %s155 = scalar_lea.vmem %s1, 2
    %v156 = vld [vmem:[%s155] sm:$0x3]
    %s157 = scalar_lea.vmem %s1, 8
    %v158 = vld [vmem:[%s157] sm:$0x3]
    %s159 = scalar_lea.vmem %s1, 10
    %v160 = vld [vmem:[%s159] sm:$0x3]
    %v162 = vrot.slane %v156, 6
    %vm164 = vcmask 1041408
    %v165 = vsel %vm164, %v154, %v162
    %v167 = vrot.slane %v160, 6
    %v169 = vsel %vm164, %v158, %v167
    %171 = vrot.lane.b32.xlu0 %v165, 32
    %v172 = vpop.permute.xlu0 %171
    %vm174 = vcmask 261120
    %v175 = vsel %vm174, %v165, %v172
    %v176 = vmul.f32 %v175, %v38
    %v178 = vrot.slane %v144, 4
    %v180 = vsel %vm164, %v136, %v178
    %vm181 = vcmask 523264
    %v183 = vsel %vm181, %v176, 0
    %185 = vmatprep.subr.mxu0 0.0
    %186 = vmatpush1.msra.mxu0 %v146
    %187 = vmatprep.subr.mxu0 0.0
    %188 = vmatpush1.msra.mxu0 %v147
    %189 = vmatprep.subr.mxu0 0.0
    %190 = vmatpush1.msra.mxu0 %v148
    %191 = vmatprep.subr.mxu0 0.0
    %192 = vmatpush1.msra.mxu0 %v149
    %193 = vmatprep.subr.mxu0 0.0
    %194 = vmatpush1.msra.mxu0 %v150
    %195 = vmatprep.subr.mxu0 0.0
    %196 = vmatpush1.msra.mxu0 %v151
    %197 = vmatprep.subr.mxu0 0.0
    %198 = vmatpush1.msra.mxu0 %v152
    %199 = vmatprep.subr.mxu0 0.0
    %200 = vmatpush1.msra.mxu0 %v153
    %201 = vmatprep.subr.mxu0 0.0
    %202 = vmatpush1.msra.mxu0 0.0
    %203 = vmatprep.subr.mxu0 0.0
    %204 = vmatpush1.msra.mxu0 0.0
    %205 = vmatprep.subr.mxu0 0.0
    %206 = vmatpush1.msra.mxu0 0.0
    %207 = vmatprep.subr.mxu0 0.0
    %208 = vmatpush1.msra.mxu0 0.0
    %209 = vmatprep.subr.mxu0 0.0
    %210 = vmatpush1.msra.mxu0 0.0
    %211 = vmatprep.subr.mxu0 0.0
    %212 = vmatpush1.msra.mxu0 0.0
    %213 = vmatprep.subr.mxu0 0.0
    %214 = vmatpush1.msra.mxu0 0.0
    %215 = vmatprep.subr.mxu0 0.0
    %216 = vmatpush1.msra.mxu0 0.0
    %217 = vmatprep.subr.mxu0 0.0
    %218 = vmatpush1.msra.mxu0 0.0
    %219 = vmatprep.subr.mxu0 0.0
    %220 = vmatpush1.msra.mxu0 0.0
    %221 = vmatprep.subr.mxu0 0.0
    %222 = vmatpush1.msra.mxu0 0.0
    %223 = vmatprep.subr.mxu0 0.0
    %224 = vmatpush1.msra.mxu0 0.0
    %225 = vmatprep.subr.mxu0 0.0
    %226 = vmatpush1.msra.mxu0 0.0
    %227 = vmatprep.subr.mxu0 0.0
    %228 = vmatpush1.msra.mxu0 0.0
    %229 = vmatprep.subr.mxu0 0.0
    %230 = vmatpush1.msra.mxu0 0.0
    %231 = vmatprep.subr.mxu0 0.0
    %232 = vmatpush1.msra.mxu0 0.0
    %233 = vmatprep.subr.mxu0 0.0
    %234 = vmatpush1.msra.mxu0 0.0
    %235 = vmatprep.subr.mxu0 0.0
    %236 = vmatpush1.msra.mxu0 0.0
    %237 = vmatprep.subr.mxu0 0.0
    %238 = vmatpush1.msra.mxu0 0.0
    %239 = vmatprep.subr.mxu0 0.0
    %240 = vmatpush1.msra.mxu0 0.0
    %241 = vmatprep.subr.mxu0 0.0
    %242 = vmatpush1.msra.mxu0 0.0
    %243 = vmatprep.subr.mxu0 0.0
    %244 = vmatpush1.msra.mxu0 0.0
    %245 = vmatprep.subr.mxu0 0.0
    %246 = vmatpush1.msra.mxu0 0.0
    %247 = vmatprep.subr.mxu0 0.0
    %248 = vmatpush1.msra.mxu0 0.0
    %249 = vmatprep.mubr.f32.mxu0 0.0
    %250 = vmatmul.mubr.f32.gmra.mrb[0].mxu0 %v183
    %v251 = vpop.f32.mrb[0].mxu0
    %v252 = vadd.f32 0.0, %v251
    %v253 = vpop.f32.mrb[0].mxu0
    %254 = vdwg.mxu0
    %v255 = vadd.f32 %v180, %v252
    %v256 = vxor.u32 %v255, 2147483648
    %v257 = vmul.f32 %v256, 1.442695
    %v258 = vpow.pop %v257
    %v259 = vadd.f32 %v258, 1.0
    %v260 = vrcp.pop %v259
    %v261 = vmul.f32 1.0, %v260
    %v262 = vtanh.pop %v255
    %264 = vrot.lane.b32.xlu0 %v169, 32
    %v265 = vpop.permute.xlu0 %264
    %v267 = vmul.f32 %v261, %v265
    %269 = vrot.lane.b32.xlu0 %v262, 32
    %v270 = vpop.permute.xlu0 %269
    %v272 = vmul.f32 %v261, %v270
    %274 = vrot.lane.b32.xlu0 %v272, 32
    %v275 = vpop.permute.xlu0 %274
    %v277 = vadd.f32 %v267, %v275
    %v278 = vtanh.pop %v277
    %280 = vrot.lane.b32.xlu0 %v278, 32
    %v281 = vpop.permute.xlu0 %280
    %v283 = vmul.f32 %v261, %v281
    %285 = vrot.lane.b32.xlu0 %v283, 64
    %v286 = vpop.permute.xlu0 %285
    %288 = vrot.lane.b32.xlu0 %v283, 96
    %v289 = vpop.permute.xlu0 %288
    %v291 = vsel %vm174, %v286, %v289
    %v292 = vmul.f32 %v291, %v38
    %v294 = vrot.slane %v136, 2
    %v296 = vrot.slane %v144, 2
    %v298 = vsel %vm164, %v294, %v296
    %v300 = vsel %vm181, %v292, 0
    %302 = vmatprep.subr.mxu0 0.0
    %303 = vmatpush1.msra.mxu0 %v146
    %304 = vmatprep.subr.mxu0 0.0
    %305 = vmatpush1.msra.mxu0 %v147
    %306 = vmatprep.subr.mxu0 0.0
    %307 = vmatpush1.msra.mxu0 %v148
    %308 = vmatprep.subr.mxu0 0.0
    %309 = vmatpush1.msra.mxu0 %v149
    %310 = vmatprep.subr.mxu0 0.0
    %311 = vmatpush1.msra.mxu0 %v150
    %312 = vmatprep.subr.mxu0 0.0
    %313 = vmatpush1.msra.mxu0 %v151
    %314 = vmatprep.subr.mxu0 0.0
    %315 = vmatpush1.msra.mxu0 %v152
    %316 = vmatprep.subr.mxu0 0.0
    %317 = vmatpush1.msra.mxu0 %v153
    %318 = vmatprep.subr.mxu0 0.0
    %319 = vmatpush1.msra.mxu0 0.0
    %320 = vmatprep.subr.mxu0 0.0
    %321 = vmatpush1.msra.mxu0 0.0
    %322 = vmatprep.subr.mxu0 0.0
    %323 = vmatpush1.msra.mxu0 0.0
    %324 = vmatprep.subr.mxu0 0.0
    %325 = vmatpush1.msra.mxu0 0.0
    %326 = vmatprep.subr.mxu0 0.0
    %327 = vmatpush1.msra.mxu0 0.0
    %328 = vmatprep.subr.mxu0 0.0
    %329 = vmatpush1.msra.mxu0 0.0
    %330 = vmatprep.subr.mxu0 0.0
    %331 = vmatpush1.msra.mxu0 0.0
    %332 = vmatprep.subr.mxu0 0.0
    %333 = vmatpush1.msra.mxu0 0.0
    %334 = vmatprep.subr.mxu0 0.0
    %335 = vmatpush1.msra.mxu0 0.0
    %336 = vmatprep.subr.mxu0 0.0
    %337 = vmatpush1.msra.mxu0 0.0
    %338 = vmatprep.subr.mxu0 0.0
    %339 = vmatpush1.msra.mxu0 0.0
    %340 = vmatprep.subr.mxu0 0.0
    %341 = vmatpush1.msra.mxu0 0.0
    %342 = vmatprep.subr.mxu0 0.0
    %343 = vmatpush1.msra.mxu0 0.0
    %344 = vmatprep.subr.mxu0 0.0
    %345 = vmatpush1.msra.mxu0 0.0
    %346 = vmatprep.subr.mxu0 0.0
    %347 = vmatpush1.msra.mxu0 0.0
    %348 = vmatprep.subr.mxu0 0.0
    %349 = vmatpush1.msra.mxu0 0.0
    %350 = vmatprep.subr.mxu0 0.0
    %351 = vmatpush1.msra.mxu0 0.0
    %352 = vmatprep.subr.mxu0 0.0
    %353 = vmatpush1.msra.mxu0 0.0
    %354 = vmatprep.subr.mxu0 0.0
    %355 = vmatpush1.msra.mxu0 0.0
    %356 = vmatprep.subr.mxu0 0.0
    %357 = vmatpush1.msra.mxu0 0.0
    %358 = vmatprep.subr.mxu0 0.0
    %359 = vmatpush1.msra.mxu0 0.0
    %360 = vmatprep.subr.mxu0 0.0
    %361 = vmatpush1.msra.mxu0 0.0
    %362 = vmatprep.subr.mxu0 0.0
    %363 = vmatpush1.msra.mxu0 0.0
    %364 = vmatprep.subr.mxu0 0.0
    %365 = vmatpush1.msra.mxu0 0.0
    %366 = vmatprep.mubr.f32.mxu0 0.0
    %367 = vmatmul.mubr.f32.gmra.mrb[0].mxu0 %v300
    %v368 = vpop.f32.mrb[0].mxu0
    %v369 = vadd.f32 0.0, %v368
    %v370 = vpop.f32.mrb[0].mxu0
    %371 = vdwg.mxu0
    %v372 = vadd.f32 %v298, %v369
    %v373 = vxor.u32 %v372, 2147483648
    %v374 = vmul.f32 %v373, 1.442695
    %v375 = vpow.pop %v374
    %v376 = vadd.f32 %v375, 1.0
    %v377 = vrcp.pop %v376
    %v378 = vmul.f32 1.0, %v377
    %v379 = vtanh.pop %v372
    %v380 = vmul.f32 %v378, %v277
    %382 = vrot.lane.b32.xlu0 %v379, 32
    %v383 = vpop.permute.xlu0 %382
    %v385 = vmul.f32 %v378, %v383
    %387 = vrot.lane.b32.xlu0 %v385, 32
    %v388 = vpop.permute.xlu0 %387
    %v390 = vadd.f32 %v380, %v388
    %v391 = vtanh.pop %v390
    %393 = vrot.lane.b32.xlu0 %v391, 32
    %v394 = vpop.permute.xlu0 %393
    %v396 = vmul.f32 %v378, %v394
    %398 = vrot.lane.b32.xlu0 %v396, 64
    %v399 = vpop.permute.xlu0 %398
    %401 = vrot.lane.b32.xlu0 %v396, 96
    %v402 = vpop.permute.xlu0 %401
    %v404 = vsel %vm174, %v399, %v402
    %v405 = vmul.f32 %v404, %v38
    %v406 = vrot.slane %v136, 4
    %v408 = vsel %vm164, %v406, %v144
    %v410 = vsel %vm181, %v405, 0
    %412 = vmatprep.subr.mxu0 0.0
    %413 = vmatpush1.msra.mxu0 %v146
    %414 = vmatprep.subr.mxu0 0.0
    %415 = vmatpush1.msra.mxu0 %v147
    %416 = vmatprep.subr.mxu0 0.0
    %417 = vmatpush1.msra.mxu0 %v148
    %418 = vmatprep.subr.mxu0 0.0
    %419 = vmatpush1.msra.mxu0 %v149
    %420 = vmatprep.subr.mxu0 0.0
    %421 = vmatpush1.msra.mxu0 %v150
    %422 = vmatprep.subr.mxu0 0.0
    %423 = vmatpush1.msra.mxu0 %v151
    %424 = vmatprep.subr.mxu0 0.0
    %425 = vmatpush1.msra.mxu0 %v152
    %426 = vmatprep.subr.mxu0 0.0
    %427 = vmatpush1.msra.mxu0 %v153
    %428 = vmatprep.subr.mxu0 0.0
    %429 = vmatpush1.msra.mxu0 0.0
    %430 = vmatprep.subr.mxu0 0.0
    %431 = vmatpush1.msra.mxu0 0.0
    %432 = vmatprep.subr.mxu0 0.0
    %433 = vmatpush1.msra.mxu0 0.0
    %434 = vmatprep.subr.mxu0 0.0
    %435 = vmatpush1.msra.mxu0 0.0
    %436 = vmatprep.subr.mxu0 0.0
    %437 = vmatpush1.msra.mxu0 0.0
    %438 = vmatprep.subr.mxu0 0.0
    %439 = vmatpush1.msra.mxu0 0.0
    %440 = vmatprep.subr.mxu0 0.0
    %441 = vmatpush1.msra.mxu0 0.0
    %442 = vmatprep.subr.mxu0 0.0
    %443 = vmatpush1.msra.mxu0 0.0
    %444 = vmatprep.subr.mxu0 0.0
    %445 = vmatpush1.msra.mxu0 0.0
    %446 = vmatprep.subr.mxu0 0.0
    %447 = vmatpush1.msra.mxu0 0.0
    %448 = vmatprep.subr.mxu0 0.0
    %449 = vmatpush1.msra.mxu0 0.0
    %450 = vmatprep.subr.mxu0 0.0
    %451 = vmatpush1.msra.mxu0 0.0
    %452 = vmatprep.subr.mxu0 0.0
    %453 = vmatpush1.msra.mxu0 0.0
    %454 = vmatprep.subr.mxu0 0.0
    %455 = vmatpush1.msra.mxu0 0.0
    %456 = vmatprep.subr.mxu0 0.0
    %457 = vmatpush1.msra.mxu0 0.0
    %458 = vmatprep.subr.mxu0 0.0
    %459 = vmatpush1.msra.mxu0 0.0
    %460 = vmatprep.subr.mxu0 0.0
    %461 = vmatpush1.msra.mxu0 0.0
    %462 = vmatprep.subr.mxu0 0.0
    %463 = vmatpush1.msra.mxu0 0.0
    %464 = vmatprep.subr.mxu0 0.0
    %465 = vmatpush1.msra.mxu0 0.0
    %466 = vmatprep.subr.mxu0 0.0
    %467 = vmatpush1.msra.mxu0 0.0
    %468 = vmatprep.subr.mxu0 0.0
    %469 = vmatpush1.msra.mxu0 0.0
    %470 = vmatprep.subr.mxu0 0.0
    %471 = vmatpush1.msra.mxu0 0.0
    %472 = vmatprep.subr.mxu0 0.0
    %473 = vmatpush1.msra.mxu0 0.0
    %474 = vmatprep.subr.mxu0 0.0
    %475 = vmatpush1.msra.mxu0 0.0
    %476 = vmatprep.mubr.f32.mxu0 0.0
    %477 = vmatmul.mubr.f32.gmra.mrb[0].mxu0 %v410
    %v478 = vpop.f32.mrb[0].mxu0
    %v479 = vadd.f32 0.0, %v478
    %v480 = vpop.f32.mrb[0].mxu0
    %481 = vdwg.mxu0
    %v482 = vadd.f32 %v408, %v479
    %v483 = vxor.u32 %v482, 2147483648
    %v484 = vmul.f32 %v483, 1.442695
    %v485 = vpow.pop %v484
    %v486 = vadd.f32 %v485, 1.0
    %v487 = vrcp.pop %v486
    %v488 = vmul.f32 1.0, %v487
    %v489 = vtanh.pop %v482
    %v490 = vmul.f32 %v488, %v390
    %492 = vrot.lane.b32.xlu0 %v489, 32
    %v493 = vpop.permute.xlu0 %492
    %v495 = vmul.f32 %v488, %v493
    %497 = vrot.lane.b32.xlu0 %v495, 32
    %v498 = vpop.permute.xlu0 %497
    %v500 = vadd.f32 %v490, %v498
    %v501 = vtanh.pop %v500
    %503 = vrot.lane.b32.xlu0 %v501, 32
    %v504 = vpop.permute.xlu0 %503
    %v506 = vmul.f32 %v488, %v504
    %508 = vrot.lane.b32.xlu0 %v506, 64
    %v509 = vpop.permute.xlu0 %508
    %511 = vrot.lane.b32.xlu0 %v506, 96
    %v512 = vpop.permute.xlu0 %511
    %v514 = vsel %vm174, %v509, %v512
    %v515 = vmul.f32 %v514, %v38
    %v516 = vrot.slane %v136, 6
    %v518 = vrot.slane %v144, 6
    %v520 = vsel %vm164, %v516, %v518
    %v522 = vsel %vm181, %v515, 0
    %524 = vmatprep.subr.mxu0 0.0
    %525 = vmatpush1.msra.mxu0 %v146
    %526 = vmatprep.subr.mxu0 0.0
    %527 = vmatpush1.msra.mxu0 %v147
    %528 = vmatprep.subr.mxu0 0.0
    %529 = vmatpush1.msra.mxu0 %v148
    %530 = vmatprep.subr.mxu0 0.0
    %531 = vmatpush1.msra.mxu0 %v149
    %532 = vmatprep.subr.mxu0 0.0
    %533 = vmatpush1.msra.mxu0 %v150
    %534 = vmatprep.subr.mxu0 0.0
    %535 = vmatpush1.msra.mxu0 %v151
    %536 = vmatprep.subr.mxu0 0.0
    %537 = vmatpush1.msra.mxu0 %v152
    %538 = vmatprep.subr.mxu0 0.0
    %539 = vmatpush1.msra.mxu0 %v153
    %540 = vmatprep.subr.mxu0 0.0
    %541 = vmatpush1.msra.mxu0 0.0
    %542 = vmatprep.subr.mxu0 0.0
    %543 = vmatpush1.msra.mxu0 0.0
    %544 = vmatprep.subr.mxu0 0.0
    %545 = vmatpush1.msra.mxu0 0.0
    %546 = vmatprep.subr.mxu0 0.0
    %547 = vmatpush1.msra.mxu0 0.0
    %548 = vmatprep.subr.mxu0 0.0
    %549 = vmatpush1.msra.mxu0 0.0
    %550 = vmatprep.subr.mxu0 0.0
    %551 = vmatpush1.msra.mxu0 0.0
    %552 = vmatprep.subr.mxu0 0.0
    %553 = vmatpush1.msra.mxu0 0.0
    %554 = vmatprep.subr.mxu0 0.0
    %555 = vmatpush1.msra.mxu0 0.0
    %556 = vmatprep.subr.mxu0 0.0
    %557 = vmatpush1.msra.mxu0 0.0
    %558 = vmatprep.subr.mxu0 0.0
    %559 = vmatpush1.msra.mxu0 0.0
    %560 = vmatprep.subr.mxu0 0.0
    %561 = vmatpush1.msra.mxu0 0.0
    %562 = vmatprep.subr.mxu0 0.0
    %563 = vmatpush1.msra.mxu0 0.0
    %564 = vmatprep.subr.mxu0 0.0
    %565 = vmatpush1.msra.mxu0 0.0
    %566 = vmatprep.subr.mxu0 0.0
    %567 = vmatpush1.msra.mxu0 0.0
    %568 = vmatprep.subr.mxu0 0.0
    %569 = vmatpush1.msra.mxu0 0.0
    %570 = vmatprep.subr.mxu0 0.0
    %571 = vmatpush1.msra.mxu0 0.0
    %572 = vmatprep.subr.mxu0 0.0
    %573 = vmatpush1.msra.mxu0 0.0
    %574 = vmatprep.subr.mxu0 0.0
    %575 = vmatpush1.msra.mxu0 0.0
    %576 = vmatprep.subr.mxu0 0.0
    %577 = vmatpush1.msra.mxu0 0.0
    %578 = vmatprep.subr.mxu0 0.0
    %579 = vmatpush1.msra.mxu0 0.0
    %580 = vmatprep.subr.mxu0 0.0
    %581 = vmatpush1.msra.mxu0 0.0
    %582 = vmatprep.subr.mxu0 0.0
    %583 = vmatpush1.msra.mxu0 0.0
    %584 = vmatprep.subr.mxu0 0.0
    %585 = vmatpush1.msra.mxu0 0.0
    %586 = vmatprep.subr.mxu0 0.0
    %587 = vmatpush1.msra.mxu0 0.0
    %588 = vmatprep.mubr.f32.mxu0 0.0
    %589 = vmatmul.mubr.f32.gmra.mrb[0].mxu0 %v522
    %v590 = vpop.f32.mrb[0].mxu0
    %v591 = vadd.f32 0.0, %v590
    %v592 = vpop.f32.mrb[0].mxu0
    %593 = vdwg.mxu0
    %v594 = vadd.f32 %v520, %v591
    %v595 = vxor.u32 %v594, 2147483648
    %v596 = vmul.f32 %v595, 1.442695
    %v597 = vpow.pop %v596
    %v598 = vadd.f32 %v597, 1.0
    %v599 = vrcp.pop %v598
    %v600 = vmul.f32 1.0, %v599
    %v601 = vtanh.pop %v594
    %v602 = vmul.f32 %v600, %v500
    %604 = vrot.lane.b32.xlu0 %v601, 32
    %v605 = vpop.permute.xlu0 %604
    %v607 = vmul.f32 %v600, %v605
    %609 = vrot.lane.b32.xlu0 %v607, 32
    %v610 = vpop.permute.xlu0 %609
    %v612 = vadd.f32 %v602, %v610
    %v613 = vtanh.pop %v612
    %615 = vrot.lane.b32.xlu0 %v613, 32
    %v616 = vpop.permute.xlu0 %615
    %v618 = vmul.f32 %v600, %v616
    %620 = vrot.lane.b32.xlu0 %v618, 64
    %v621 = vpop.permute.xlu0 %620
    %623 = vrot.lane.b32.xlu0 %v618, 96
    %v624 = vpop.permute.xlu0 %623
    %v626 = vsel %vm174, %v621, %v624
    %v627 = vmul.f32 %v626, %v38
    %v629 = vrot.slane %v138, 4
    %v631 = vsel %vm164, %v142, %v629
    %v633 = vsel %vm181, %v627, 0
    %635 = vmatprep.subr.mxu0 0.0
    %636 = vmatpush1.msra.mxu0 %v146
    %637 = vmatprep.subr.mxu0 0.0
    %638 = vmatpush1.msra.mxu0 %v147
    %639 = vmatprep.subr.mxu0 0.0
    %640 = vmatpush1.msra.mxu0 %v148
    %641 = vmatprep.subr.mxu0 0.0
    %642 = vmatpush1.msra.mxu0 %v149
    %643 = vmatprep.subr.mxu0 0.0
    %644 = vmatpush1.msra.mxu0 %v150
    %645 = vmatprep.subr.mxu0 0.0
    %646 = vmatpush1.msra.mxu0 %v151
    %647 = vmatprep.subr.mxu0 0.0
    %648 = vmatpush1.msra.mxu0 %v152
    %649 = vmatprep.subr.mxu0 0.0
    %650 = vmatpush1.msra.mxu0 %v153
    %651 = vmatprep.subr.mxu0 0.0
    %652 = vmatpush1.msra.mxu0 0.0
    %653 = vmatprep.subr.mxu0 0.0
    %654 = vmatpush1.msra.mxu0 0.0
    %655 = vmatprep.subr.mxu0 0.0
    %656 = vmatpush1.msra.mxu0 0.0
    %657 = vmatprep.subr.mxu0 0.0
    %658 = vmatpush1.msra.mxu0 0.0
    %659 = vmatprep.subr.mxu0 0.0
    %660 = vmatpush1.msra.mxu0 0.0
    %661 = vmatprep.subr.mxu0 0.0
    %662 = vmatpush1.msra.mxu0 0.0
    %663 = vmatprep.subr.mxu0 0.0
    %664 = vmatpush1.msra.mxu0 0.0
    %665 = vmatprep.subr.mxu0 0.0
    %666 = vmatpush1.msra.mxu0 0.0
    %667 = vmatprep.subr.mxu0 0.0
    %668 = vmatpush1.msra.mxu0 0.0
    %669 = vmatprep.subr.mxu0 0.0
    %670 = vmatpush1.msra.mxu0 0.0
    %671 = vmatprep.subr.mxu0 0.0
    %672 = vmatpush1.msra.mxu0 0.0
    %673 = vmatprep.subr.mxu0 0.0
    %674 = vmatpush1.msra.mxu0 0.0
    %675 = vmatprep.subr.mxu0 0.0
    %676 = vmatpush1.msra.mxu0 0.0
    %677 = vmatprep.subr.mxu0 0.0
    %678 = vmatpush1.msra.mxu0 0.0
    %679 = vmatprep.subr.mxu0 0.0
    %680 = vmatpush1.msra.mxu0 0.0
    %681 = vmatprep.subr.mxu0 0.0
    %682 = vmatpush1.msra.mxu0 0.0
    %683 = vmatprep.subr.mxu0 0.0
    %684 = vmatpush1.msra.mxu0 0.0
    %685 = vmatprep.subr.mxu0 0.0
    %686 = vmatpush1.msra.mxu0 0.0
    %687 = vmatprep.subr.mxu0 0.0
    %688 = vmatpush1.msra.mxu0 0.0
    %689 = vmatprep.subr.mxu0 0.0
    %690 = vmatpush1.msra.mxu0 0.0
    %691 = vmatprep.subr.mxu0 0.0
    %692 = vmatpush1.msra.mxu0 0.0
    %693 = vmatprep.subr.mxu0 0.0
    %694 = vmatpush1.msra.mxu0 0.0
    %695 = vmatprep.subr.mxu0 0.0
    %696 = vmatpush1.msra.mxu0 0.0
    %697 = vmatprep.subr.mxu0 0.0
    %698 = vmatpush1.msra.mxu0 0.0
    %699 = vmatprep.mubr.f32.mxu0 0.0
    %700 = vmatmul.mubr.f32.gmra.mrb[0].mxu0 %v633
    %v701 = vpop.f32.mrb[0].mxu0
    %v702 = vadd.f32 0.0, %v701
    %v703 = vpop.f32.mrb[0].mxu0
    %704 = vdwg.mxu0
    %v705 = vadd.f32 %v631, %v702
    %v706 = vxor.u32 %v705, 2147483648
    %v707 = vmul.f32 %v706, 1.442695
    %v708 = vpow.pop %v707
    %v709 = vadd.f32 %v708, 1.0
    %v710 = vrcp.pop %v709
    %v711 = vmul.f32 1.0, %v710
    %v712 = vtanh.pop %v705
    %v713 = vmul.f32 %v711, %v612
    %715 = vrot.lane.b32.xlu0 %v712, 32
    %v716 = vpop.permute.xlu0 %715
    %v718 = vmul.f32 %v711, %v716
    %720 = vrot.lane.b32.xlu0 %v718, 32
    %v721 = vpop.permute.xlu0 %720
    %v723 = vadd.f32 %v713, %v721
    %v724 = vtanh.pop %v723
    %726 = vrot.lane.b32.xlu0 %v724, 32
    %v727 = vpop.permute.xlu0 %726
    %v729 = vmul.f32 %v711, %v727
    %731 = vrot.lane.b32.xlu0 %v729, 64
    %v732 = vpop.permute.xlu0 %731
    %734 = vrot.lane.b32.xlu0 %v729, 96
    %v735 = vpop.permute.xlu0 %734
    %v737 = vsel %vm174, %v732, %v735
    %v738 = vmul.f32 %v737, %v38
    %v740 = vrot.slane %v142, 2
    %v742 = vrot.slane %v138, 2
    %v744 = vsel %vm164, %v740, %v742
    %v746 = vsel %vm181, %v738, 0
    %748 = vmatprep.subr.mxu0 0.0
    %749 = vmatpush1.msra.mxu0 %v146
    %750 = vmatprep.subr.mxu0 0.0
    %751 = vmatpush1.msra.mxu0 %v147
    %752 = vmatprep.subr.mxu0 0.0
    %753 = vmatpush1.msra.mxu0 %v148
    %754 = vmatprep.subr.mxu0 0.0
    %755 = vmatpush1.msra.mxu0 %v149
    %756 = vmatprep.subr.mxu0 0.0
    %757 = vmatpush1.msra.mxu0 %v150
    %758 = vmatprep.subr.mxu0 0.0
    %759 = vmatpush1.msra.mxu0 %v151
    %760 = vmatprep.subr.mxu0 0.0
    %761 = vmatpush1.msra.mxu0 %v152
    %762 = vmatprep.subr.mxu0 0.0
    %763 = vmatpush1.msra.mxu0 %v153
    %764 = vmatprep.subr.mxu0 0.0
    %765 = vmatpush1.msra.mxu0 0.0
    %766 = vmatprep.subr.mxu0 0.0
    %767 = vmatpush1.msra.mxu0 0.0
    %768 = vmatprep.subr.mxu0 0.0
    %769 = vmatpush1.msra.mxu0 0.0
    %770 = vmatprep.subr.mxu0 0.0
    %771 = vmatpush1.msra.mxu0 0.0
    %772 = vmatprep.subr.mxu0 0.0
    %773 = vmatpush1.msra.mxu0 0.0
    %774 = vmatprep.subr.mxu0 0.0
    %775 = vmatpush1.msra.mxu0 0.0
    %776 = vmatprep.subr.mxu0 0.0
    %777 = vmatpush1.msra.mxu0 0.0
    %778 = vmatprep.subr.mxu0 0.0
    %779 = vmatpush1.msra.mxu0 0.0
    %780 = vmatprep.subr.mxu0 0.0
    %781 = vmatpush1.msra.mxu0 0.0
    %782 = vmatprep.subr.mxu0 0.0
    %783 = vmatpush1.msra.mxu0 0.0
    %784 = vmatprep.subr.mxu0 0.0
    %785 = vmatpush1.msra.mxu0 0.0
    %786 = vmatprep.subr.mxu0 0.0
    %787 = vmatpush1.msra.mxu0 0.0
    %788 = vmatprep.subr.mxu0 0.0
    %789 = vmatpush1.msra.mxu0 0.0
    %790 = vmatprep.subr.mxu0 0.0
    %791 = vmatpush1.msra.mxu0 0.0
    %792 = vmatprep.subr.mxu0 0.0
    %793 = vmatpush1.msra.mxu0 0.0
    %794 = vmatprep.subr.mxu0 0.0
    %795 = vmatpush1.msra.mxu0 0.0
    %796 = vmatprep.subr.mxu0 0.0
    %797 = vmatpush1.msra.mxu0 0.0
    %798 = vmatprep.subr.mxu0 0.0
    %799 = vmatpush1.msra.mxu0 0.0
    %800 = vmatprep.subr.mxu0 0.0
    %801 = vmatpush1.msra.mxu0 0.0
    %802 = vmatprep.subr.mxu0 0.0
    %803 = vmatpush1.msra.mxu0 0.0
    %804 = vmatprep.subr.mxu0 0.0
    %805 = vmatpush1.msra.mxu0 0.0
    %806 = vmatprep.subr.mxu0 0.0
    %807 = vmatpush1.msra.mxu0 0.0
    %808 = vmatprep.subr.mxu0 0.0
    %809 = vmatpush1.msra.mxu0 0.0
    %810 = vmatprep.subr.mxu0 0.0
    %811 = vmatpush1.msra.mxu0 0.0
    %812 = vmatprep.mubr.f32.mxu0 0.0
    %813 = vmatmul.mubr.f32.gmra.mrb[0].mxu0 %v746
    %v814 = vpop.f32.mrb[0].mxu0
    %v815 = vadd.f32 0.0, %v814
    %v816 = vpop.f32.mrb[0].mxu0
    %817 = vdwg.mxu0
    %v818 = vadd.f32 %v744, %v815
    %v819 = vxor.u32 %v818, 2147483648
    %v820 = vmul.f32 %v819, 1.442695
    %v821 = vpow.pop %v820
    %v822 = vadd.f32 %v821, 1.0
    %v823 = vrcp.pop %v822
    %v824 = vmul.f32 1.0, %v823
    %v825 = vtanh.pop %v818
    %v826 = vmul.f32 %v824, %v723
    %828 = vrot.lane.b32.xlu0 %v825, 32
    %v829 = vpop.permute.xlu0 %828
    %v831 = vmul.f32 %v824, %v829
    %833 = vrot.lane.b32.xlu0 %v831, 32
    %v834 = vpop.permute.xlu0 %833
    %v836 = vadd.f32 %v826, %v834
    %v837 = vtanh.pop %v836
    %839 = vrot.lane.b32.xlu0 %v837, 32
    %v840 = vpop.permute.xlu0 %839
    %v842 = vmul.f32 %v824, %v840
    %844 = vrot.lane.b32.xlu0 %v842, 64
    %v845 = vpop.permute.xlu0 %844
    %847 = vrot.lane.b32.xlu0 %v842, 96
    %v848 = vpop.permute.xlu0 %847
    %v850 = vsel %vm174, %v845, %v848
    %v851 = vmul.f32 %v850, %v38
    %v852 = vrot.slane %v142, 4
    %v854 = vsel %vm164, %v852, %v138
    %v856 = vsel %vm181, %v851, 0
    %858 = vmatprep.subr.mxu0 0.0
    %859 = vmatpush1.msra.mxu0 %v146
    %860 = vmatprep.subr.mxu0 0.0
    %861 = vmatpush1.msra.mxu0 %v147
    %862 = vmatprep.subr.mxu0 0.0
    %863 = vmatpush1.msra.mxu0 %v148
    %864 = vmatprep.subr.mxu0 0.0
    %865 = vmatpush1.msra.mxu0 %v149
    %866 = vmatprep.subr.mxu0 0.0
    %867 = vmatpush1.msra.mxu0 %v150
    %868 = vmatprep.subr.mxu0 0.0
    %869 = vmatpush1.msra.mxu0 %v151
    %870 = vmatprep.subr.mxu0 0.0
    %871 = vmatpush1.msra.mxu0 %v152
    %872 = vmatprep.subr.mxu0 0.0
    %873 = vmatpush1.msra.mxu0 %v153
    %874 = vmatprep.subr.mxu0 0.0
    %875 = vmatpush1.msra.mxu0 0.0
    %876 = vmatprep.subr.mxu0 0.0
    %877 = vmatpush1.msra.mxu0 0.0
    %878 = vmatprep.subr.mxu0 0.0
    %879 = vmatpush1.msra.mxu0 0.0
    %880 = vmatprep.subr.mxu0 0.0
    %881 = vmatpush1.msra.mxu0 0.0
    %882 = vmatprep.subr.mxu0 0.0
    %883 = vmatpush1.msra.mxu0 0.0
    %884 = vmatprep.subr.mxu0 0.0
    %885 = vmatpush1.msra.mxu0 0.0
    %886 = vmatprep.subr.mxu0 0.0
    %887 = vmatpush1.msra.mxu0 0.0
    %888 = vmatprep.subr.mxu0 0.0
    %889 = vmatpush1.msra.mxu0 0.0
    %890 = vmatprep.subr.mxu0 0.0
    %891 = vmatpush1.msra.mxu0 0.0
    %892 = vmatprep.subr.mxu0 0.0
    %893 = vmatpush1.msra.mxu0 0.0
    %894 = vmatprep.subr.mxu0 0.0
    %895 = vmatpush1.msra.mxu0 0.0
    %896 = vmatprep.subr.mxu0 0.0
    %897 = vmatpush1.msra.mxu0 0.0
    %898 = vmatprep.subr.mxu0 0.0
    %899 = vmatpush1.msra.mxu0 0.0
    %900 = vmatprep.subr.mxu0 0.0
    %901 = vmatpush1.msra.mxu0 0.0
    %902 = vmatprep.subr.mxu0 0.0
    %903 = vmatpush1.msra.mxu0 0.0
    %904 = vmatprep.subr.mxu0 0.0
    %905 = vmatpush1.msra.mxu0 0.0
    %906 = vmatprep.subr.mxu0 0.0
    %907 = vmatpush1.msra.mxu0 0.0
    %908 = vmatprep.subr.mxu0 0.0
    %909 = vmatpush1.msra.mxu0 0.0
    %910 = vmatprep.subr.mxu0 0.0
    %911 = vmatpush1.msra.mxu0 0.0
    %912 = vmatprep.subr.mxu0 0.0
    %913 = vmatpush1.msra.mxu0 0.0
    %914 = vmatprep.subr.mxu0 0.0
    %915 = vmatpush1.msra.mxu0 0.0
    %916 = vmatprep.subr.mxu0 0.0
    %917 = vmatpush1.msra.mxu0 0.0
    %918 = vmatprep.subr.mxu0 0.0
    %919 = vmatpush1.msra.mxu0 0.0
    %920 = vmatprep.subr.mxu0 0.0
    %921 = vmatpush1.msra.mxu0 0.0
    %922 = vmatprep.mubr.f32.mxu0 0.0
    %923 = vmatmul.mubr.f32.gmra.mrb[0].mxu0 %v856
    %v924 = vpop.f32.mrb[0].mxu0
    %v925 = vadd.f32 0.0, %v924
    %v926 = vpop.f32.mrb[0].mxu0
    %927 = vdwg.mxu0
    %v928 = vadd.f32 %v854, %v925
    %v929 = vxor.u32 %v928, 2147483648
    %v930 = vmul.f32 %v929, 1.442695
    %v931 = vpow.pop %v930
    %v932 = vadd.f32 %v931, 1.0
    %v933 = vrcp.pop %v932
    %v934 = vmul.f32 1.0, %v933
    %v935 = vtanh.pop %v928
    %v936 = vmul.f32 %v934, %v836
    %938 = vrot.lane.b32.xlu0 %v935, 32
    %v939 = vpop.permute.xlu0 %938
    %v941 = vmul.f32 %v934, %v939
    %943 = vrot.lane.b32.xlu0 %v941, 32
    %v944 = vpop.permute.xlu0 %943
    %v946 = vadd.f32 %v936, %v944
    %v947 = vtanh.pop %v946
    %949 = vrot.lane.b32.xlu0 %v947, 32
    %v950 = vpop.permute.xlu0 %949
    %v952 = vmul.f32 %v934, %v950
    %954 = vrot.lane.b32.xlu0 %v952, 64
    %v955 = vpop.permute.xlu0 %954
    %957 = vrot.lane.b32.xlu0 %v952, 96
    %v958 = vpop.permute.xlu0 %957
    %v960 = vsel %vm174, %v955, %v958
    %v961 = vmul.f32 %v960, %v38
    %v962 = vrot.slane %v142, 6
    %v964 = vrot.slane %v138, 6
    %v966 = vsel %vm164, %v962, %v964
    %v968 = vsel %vm181, %v961, 0
    %970 = vmatprep.subr.mxu0 0.0
    %971 = vmatpush1.msra.mxu0 %v146
    %972 = vmatprep.subr.mxu0 0.0
    %973 = vmatpush1.msra.mxu0 %v147
    %974 = vmatprep.subr.mxu0 0.0
    %975 = vmatpush1.msra.mxu0 %v148
    %976 = vmatprep.subr.mxu0 0.0
    %977 = vmatpush1.msra.mxu0 %v149
    %978 = vmatprep.subr.mxu0 0.0
    %979 = vmatpush1.msra.mxu0 %v150
    %980 = vmatprep.subr.mxu0 0.0
    %981 = vmatpush1.msra.mxu0 %v151
    %982 = vmatprep.subr.mxu0 0.0
    %983 = vmatpush1.msra.mxu0 %v152
    %984 = vmatprep.subr.mxu0 0.0
    %985 = vmatpush1.msra.mxu0 %v153
    %986 = vmatprep.subr.mxu0 0.0
    %987 = vmatpush1.msra.mxu0 0.0
    %988 = vmatprep.subr.mxu0 0.0
    %989 = vmatpush1.msra.mxu0 0.0
    %990 = vmatprep.subr.mxu0 0.0
    %991 = vmatpush1.msra.mxu0 0.0
    %992 = vmatprep.subr.mxu0 0.0
    %993 = vmatpush1.msra.mxu0 0.0
    %994 = vmatprep.subr.mxu0 0.0
    %995 = vmatpush1.msra.mxu0 0.0
    %996 = vmatprep.subr.mxu0 0.0
    %997 = vmatpush1.msra.mxu0 0.0
    %998 = vmatprep.subr.mxu0 0.0
    %999 = vmatpush1.msra.mxu0 0.0
    %1000 = vmatprep.subr.mxu0 0.0
    %1001 = vmatpush1.msra.mxu0 0.0
    %1002 = vmatprep.subr.mxu0 0.0
    %1003 = vmatpush1.msra.mxu0 0.0
    %1004 = vmatprep.subr.mxu0 0.0
    %1005 = vmatpush1.msra.mxu0 0.0
    %1006 = vmatprep.subr.mxu0 0.0
    %1007 = vmatpush1.msra.mxu0 0.0
    %1008 = vmatprep.subr.mxu0 0.0
    %1009 = vmatpush1.msra.mxu0 0.0
    %1010 = vmatprep.subr.mxu0 0.0
    %1011 = vmatpush1.msra.mxu0 0.0
    %1012 = vmatprep.subr.mxu0 0.0
    %1013 = vmatpush1.msra.mxu0 0.0
    %1014 = vmatprep.subr.mxu0 0.0
    %1015 = vmatpush1.msra.mxu0 0.0
    %1016 = vmatprep.subr.mxu0 0.0
    %1017 = vmatpush1.msra.mxu0 0.0
    %1018 = vmatprep.subr.mxu0 0.0
    %1019 = vmatpush1.msra.mxu0 0.0
    %1020 = vmatprep.subr.mxu0 0.0
    %1021 = vmatpush1.msra.mxu0 0.0
    %1022 = vmatprep.subr.mxu0 0.0
    %1023 = vmatpush1.msra.mxu0 0.0
    %1024 = vmatprep.subr.mxu0 0.0
    %1025 = vmatpush1.msra.mxu0 0.0
    %1026 = vmatprep.subr.mxu0 0.0
    %1027 = vmatpush1.msra.mxu0 0.0
    %1028 = vmatprep.subr.mxu0 0.0
    %1029 = vmatpush1.msra.mxu0 0.0
    %1030 = vmatprep.subr.mxu0 0.0
    %1031 = vmatpush1.msra.mxu0 0.0
    %1032 = vmatprep.subr.mxu0 0.0
    %1033 = vmatpush1.msra.mxu0 0.0
    %1034 = vmatprep.mubr.f32.mxu0 0.0
    %1035 = vmatmul.mubr.f32.gmra.mrb[0].mxu0 %v968
    %v1036 = vpop.f32.mrb[0].mxu0
    %v1037 = vadd.f32 0.0, %v1036
    %v1038 = vpop.f32.mrb[0].mxu0
    %1039 = vdwg.mxu0
    %v1040 = vadd.f32 %v966, %v1037
    %v1041 = vxor.u32 %v1040, 2147483648
    %v1042 = vmul.f32 %v1041, 1.442695
    %v1043 = vpow.pop %v1042
    %v1044 = vadd.f32 %v1043, 1.0
    %v1045 = vrcp.pop %v1044
    %v1046 = vmul.f32 1.0, %v1045
    %v1047 = vtanh.pop %v1040
    %v1048 = vmul.f32 %v1046, %v946
    %1050 = vrot.lane.b32.xlu0 %v1047, 32
    %v1051 = vpop.permute.xlu0 %1050
    %v1053 = vmul.f32 %v1046, %v1051
    %1055 = vrot.lane.b32.xlu0 %v1053, 32
    %v1056 = vpop.permute.xlu0 %1055
    %v1058 = vadd.f32 %v1048, %v1056
    %v1059 = vtanh.pop %v1058
    %1061 = vrot.lane.b32.xlu0 %v1059, 32
    %v1062 = vpop.permute.xlu0 %1061
    %v1064 = vmul.f32 %v1046, %v1062
    %v1066 = vrot.slane %v1064, 2
    %1067 = vrot.lane.b32.xlu0 %v1066, 96
    %v1068 = vpop.permute.xlu0 %1067
    %v1070 = vsel %vm174, %v286, %v1068
    %v1071 = vrot.slane %v952, 2
    %1072 = vrot.lane.b32.xlu0 %v1071, 96
    %v1073 = vpop.permute.xlu0 %1072
    %v1075 = vsel %vm174, %v399, %v1073
    %v1076 = vrot.slane %v842, 2
    %1077 = vrot.lane.b32.xlu0 %v1076, 96
    %v1078 = vpop.permute.xlu0 %1077
    %v1080 = vsel %vm174, %v509, %v1078
    %v1081 = vrot.slane %v729, 2
    %1082 = vrot.lane.b32.xlu0 %v1081, 96
    %v1083 = vpop.permute.xlu0 %1082
    %v1085 = vsel %vm174, %v621, %v1083
    %v1086 = vrot.slane %v618, 2
    %1087 = vrot.lane.b32.xlu0 %v1086, 96
    %v1088 = vpop.permute.xlu0 %1087
    %v1090 = vsel %vm174, %v732, %v1088
    %v1091 = vrot.slane %v506, 2
    %1092 = vrot.lane.b32.xlu0 %v1091, 96
    %v1093 = vpop.permute.xlu0 %1092
    %v1095 = vsel %vm174, %v845, %v1093
    %v1096 = vrot.slane %v396, 2
    %1097 = vrot.lane.b32.xlu0 %v1096, 96
    %v1098 = vpop.permute.xlu0 %1097
    %v1100 = vsel %vm174, %v955, %v1098
    %1101 = vrot.lane.b32.xlu0 %v1064, 64
    %v1102 = vpop.permute.xlu0 %1101
    %v1104 = vrot.slane %v283, 2
    %1105 = vrot.lane.b32.xlu0 %v1104, 96
    %v1106 = vpop.permute.xlu0 %1105
    %v1108 = vsel %vm174, %v1102, %v1106
    %v1110 = vrot.slane %v1075, 6
    %v1113 = vrot.slane %v1080, 4
    %v1116 = vrot.slane %v1085, 2
    %v1119 = vrot.slane %v1095, 6
    %v1122 = vrot.slane %v1100, 4
    %v1125 = vrot.slane %v1108, 2
    %v1127 = vsel %vm164, %v1070, %v1110
    %v1128 = vsel %vm62, %v1127, %v1113
    %vm1129 = vcmask 1045504
    %v1130 = vsel %vm1129, %v1128, %v1116
    %v1131 = vsel %vm164, %v1090, %v1119
    %v1132 = vsel %vm62, %v1131, %v1122
    %v1133 = vsel %vm1129, %v1132, %v1125
    %v1134 = vld [vmem:[%s2 + $0x10] sm:$0xff]
    %v1135 = vld [vmem:[%s2 + $0x18] sm:$0xff]
    %v1136 = vld [vmem:[%s2 + $0x20] sm:$0xff]
    %v1137 = vld [vmem:[%s2 + $0x28] sm:$0xff]
    %v1138 = vld [vmem:[%s2 + $0x30] sm:$0xff]
    %v1139 = vld [vmem:[%s2 + $0x38] sm:$0xff]
    %v1140 = vld [vmem:[%s2 + $0x40] sm:$0xff]
    %v1141 = vld [vmem:[%s2 + $0x48] sm:$0xff]
    %v1142 = vld [vmem:[%s2 + $0x50] sm:$0xff]
    %v1143 = vld [vmem:[%s2 + $0x58] sm:$0xff]
    %v1144 = vld [vmem:[%s2 + $0x60] sm:$0xff]
    %v1145 = vld [vmem:[%s2 + $0x68] sm:$0xff]
    %v1146 = vld [vmem:[%s2 + $0x70] sm:$0xff]
    %v1147 = vld [vmem:[%s2 + $0x78] sm:$0xff]
    %v1148 = vld [vmem:[%s2 + $0x80] sm:$0xff]
    %v1149 = vld [vmem:[%s2 + $0x88] sm:$0xff]
    %s1150 = scalar_lea.vmem %s4, 1
    %v1151 = vld [vmem:[%s1150] ss:$4 sm:$0x3]
    %v1153 = vlaneseq
    %v1154 = vshrl.u32 %v1153, 7
    %v1155 = vsub.s32 0, %v1154
    %v1156 = vrot.slane %v1151, %v1155
    %v1157 = vlaneseq
    %v1158 = vshrl.u32 %v1157, 7
    %v1159 = vsub.s32 1, %v1158
    %v1160 = vrot.slane %v1151, %v1159
    %v1164 = vsel %vm181, %v1130, 0
    %v1167 = vsel %vm181, %v1133, 0
    %1169 = vmatprep.subr.mxu0 %v1135
    %1170 = vmatpush1.msra.mxu0 %v1134
    %1171 = vmatprep.subr.mxu0 %v1137
    %1172 = vmatpush1.msra.mxu0 %v1136
    %1173 = vmatprep.subr.mxu0 %v1139
    %1174 = vmatpush1.msra.mxu0 %v1138
    %1175 = vmatprep.subr.mxu0 %v1141
    %1176 = vmatpush1.msra.mxu0 %v1140
    %1177 = vmatprep.subr.mxu0 %v1143
    %1178 = vmatpush1.msra.mxu0 %v1142
    %1179 = vmatprep.subr.mxu0 %v1145
    %1180 = vmatpush1.msra.mxu0 %v1144
    %1181 = vmatprep.subr.mxu0 %v1147
    %1182 = vmatpush1.msra.mxu0 %v1146
    %1183 = vmatprep.subr.mxu0 %v1149
    %1184 = vmatpush1.msra.mxu0 %v1148
    %1185 = vmatprep.subr.mxu0 0.0
    %1186 = vmatpush1.msra.mxu0 0.0
    %1187 = vmatprep.subr.mxu0 0.0
    %1188 = vmatpush1.msra.mxu0 0.0
    %1189 = vmatprep.subr.mxu0 0.0
    %1190 = vmatpush1.msra.mxu0 0.0
    %1191 = vmatprep.subr.mxu0 0.0
    %1192 = vmatpush1.msra.mxu0 0.0
    %1193 = vmatprep.subr.mxu0 0.0
    %1194 = vmatpush1.msra.mxu0 0.0
    %1195 = vmatprep.subr.mxu0 0.0
    %1196 = vmatpush1.msra.mxu0 0.0
    %1197 = vmatprep.subr.mxu0 0.0
    %1198 = vmatpush1.msra.mxu0 0.0
    %1199 = vmatprep.subr.mxu0 0.0
    %1200 = vmatpush1.msra.mxu0 0.0
    %1201 = vmatprep.subr.mxu0 0.0
    %1202 = vmatpush1.msra.mxu0 0.0
    %1203 = vmatprep.subr.mxu0 0.0
    %1204 = vmatpush1.msra.mxu0 0.0
    %1205 = vmatprep.subr.mxu0 0.0
    %1206 = vmatpush1.msra.mxu0 0.0
    %1207 = vmatprep.subr.mxu0 0.0
    %1208 = vmatpush1.msra.mxu0 0.0
    %1209 = vmatprep.subr.mxu0 0.0
    %1210 = vmatpush1.msra.mxu0 0.0
    %1211 = vmatprep.subr.mxu0 0.0
    %1212 = vmatpush1.msra.mxu0 0.0
    %1213 = vmatprep.subr.mxu0 0.0
    %1214 = vmatpush1.msra.mxu0 0.0
    %1215 = vmatprep.subr.mxu0 0.0
    %1216 = vmatpush1.msra.mxu0 0.0
    %1217 = vmatprep.subr.mxu0 0.0
    %1218 = vmatpush1.msra.mxu0 0.0
    %1219 = vmatprep.subr.mxu0 0.0
    %1220 = vmatpush1.msra.mxu0 0.0
    %1221 = vmatprep.subr.mxu0 0.0
    %1222 = vmatpush1.msra.mxu0 0.0
    %1223 = vmatprep.subr.mxu0 0.0
    %1224 = vmatpush1.msra.mxu0 0.0
    %1225 = vmatprep.subr.mxu0 0.0
    %1226 = vmatpush1.msra.mxu0 0.0
    %1227 = vmatprep.subr.mxu0 0.0
    %1228 = vmatpush1.msra.mxu0 0.0
    %1229 = vmatprep.subr.mxu0 0.0
    %1230 = vmatpush1.msra.mxu0 0.0
    %1231 = vmatprep.subr.mxu0 0.0
    %1232 = vmatpush1.msra.mxu0 0.0
    %1233 = vmatprep.mubr.f32.mxu0 0.0
    %1234 = vmatmul.mubr.f32.gmra.mrb[0].mxu0 %v1164
    %v1235 = vpop.f32.mrb[0].mxu0
    %v1236 = vadd.f32 %v1156, %v1235
    %v1237 = vpop.f32.mrb[0].mxu0
    %v1238 = vadd.f32 %v1160, %v1237
    %1239 = vmatprep.mubr.f32.mxu0 0.0
    %1240 = vmatmul.mubr.f32.gmra.mrb[0].mxu0 %v1167
    %v1241 = vpop.f32.mrb[0].mxu0
    %v1242 = vadd.f32 %v1156, %v1241
    %v1243 = vpop.f32.mrb[0].mxu0
    %v1244 = vadd.f32 %v1160, %v1243
    %1245 = vdwg.mxu0
    %v1246 = vld [vmem:[%s3 + $0x40] sm:$0xff]
    %v1247 = vld [vmem:[%s3 + $0x48] sm:$0xff]
    %v1248 = vld [vmem:[%s3 + $0x50] sm:$0xff]
    %v1249 = vld [vmem:[%s3 + $0x58] sm:$0xff]
    %v1250 = vld [vmem:[%s3 + $0x60] sm:$0xff]
    %v1251 = vld [vmem:[%s3 + $0x68] sm:$0xff]
    %v1252 = vld [vmem:[%s3 + $0x70] sm:$0xff]
    %v1253 = vld [vmem:[%s3 + $0x78] sm:$0xff]
    %s1254 = scalar_lea.vmem %s1, 4
    %v1255 = vld [vmem:[%s1254] sm:$0x3]
    %s1256 = scalar_lea.vmem %s1, 6
    %v1257 = vld [vmem:[%s1256] sm:$0x3]
    %s1258 = scalar_lea.vmem %s1, 12
    %v1259 = vld [vmem:[%s1258] sm:$0x3]
    %s1260 = scalar_lea.vmem %s1, 14
    %v1261 = vld [vmem:[%s1260] sm:$0x3]
    %v1263 = vrot.slane %v1257, 6
    %v1265 = vsel %vm164, %v1255, %v1263
    %v1267 = vrot.slane %v1261, 6
    %v1269 = vsel %vm164, %v1259, %v1267
    %1271 = vrot.lane.b32.xlu0 %v1265, 32
    %v1272 = vpop.permute.xlu0 %1271
    %v1274 = vsel %vm174, %v1265, %v1272
    %v1275 = vmul.f32 %v1274, %v38
    %v1277 = vrot.slane %v1244, 4
    %v1279 = vsel %vm164, %v1236, %v1277
    %v1281 = vsel %vm181, %v1275, 0
    %1283 = vmatprep.subr.mxu0 0.0
    %1284 = vmatpush1.msra.mxu0 %v1246
    %1285 = vmatprep.subr.mxu0 0.0
    %1286 = vmatpush1.msra.mxu0 %v1247
    %1287 = vmatprep.subr.mxu0 0.0
    %1288 = vmatpush1.msra.mxu0 %v1248
    %1289 = vmatprep.subr.mxu0 0.0
    %1290 = vmatpush1.msra.mxu0 %v1249
    %1291 = vmatprep.subr.mxu0 0.0
    %1292 = vmatpush1.msra.mxu0 %v1250
    %1293 = vmatprep.subr.mxu0 0.0
    %1294 = vmatpush1.msra.mxu0 %v1251
    %1295 = vmatprep.subr.mxu0 0.0
    %1296 = vmatpush1.msra.mxu0 %v1252
    %1297 = vmatprep.subr.mxu0 0.0
    %1298 = vmatpush1.msra.mxu0 %v1253
    %1299 = vmatprep.subr.mxu0 0.0
    %1300 = vmatpush1.msra.mxu0 0.0
    %1301 = vmatprep.subr.mxu0 0.0
    %1302 = vmatpush1.msra.mxu0 0.0
    %1303 = vmatprep.subr.mxu0 0.0
    %1304 = vmatpush1.msra.mxu0 0.0
    %1305 = vmatprep.subr.mxu0 0.0
    %1306 = vmatpush1.msra.mxu0 0.0
    %1307 = vmatprep.subr.mxu0 0.0
    %1308 = vmatpush1.msra.mxu0 0.0
    %1309 = vmatprep.subr.mxu0 0.0
    %1310 = vmatpush1.msra.mxu0 0.0
    %1311 = vmatprep.subr.mxu0 0.0
    %1312 = vmatpush1.msra.mxu0 0.0
    %1313 = vmatprep.subr.mxu0 0.0
    %1314 = vmatpush1.msra.mxu0 0.0
    %1315 = vmatprep.subr.mxu0 0.0
    %1316 = vmatpush1.msra.mxu0 0.0
    %1317 = vmatprep.subr.mxu0 0.0
    %1318 = vmatpush1.msra.mxu0 0.0
    %1319 = vmatprep.subr.mxu0 0.0
    %1320 = vmatpush1.msra.mxu0 0.0
    %1321 = vmatprep.subr.mxu0 0.0
    %1322 = vmatpush1.msra.mxu0 0.0
    %1323 = vmatprep.subr.mxu0 0.0
    %1324 = vmatpush1.msra.mxu0 0.0
    %1325 = vmatprep.subr.mxu0 0.0
    %1326 = vmatpush1.msra.mxu0 0.0
    %1327 = vmatprep.subr.mxu0 0.0
    %1328 = vmatpush1.msra.mxu0 0.0
    %1329 = vmatprep.subr.mxu0 0.0
    %1330 = vmatpush1.msra.mxu0 0.0
    %1331 = vmatprep.subr.mxu0 0.0
    %1332 = vmatpush1.msra.mxu0 0.0
    %1333 = vmatprep.subr.mxu0 0.0
    %1334 = vmatpush1.msra.mxu0 0.0
    %1335 = vmatprep.subr.mxu0 0.0
    %1336 = vmatpush1.msra.mxu0 0.0
    %1337 = vmatprep.subr.mxu0 0.0
    %1338 = vmatpush1.msra.mxu0 0.0
    %1339 = vmatprep.subr.mxu0 0.0
    %1340 = vmatpush1.msra.mxu0 0.0
    %1341 = vmatprep.subr.mxu0 0.0
    %1342 = vmatpush1.msra.mxu0 0.0
    %1343 = vmatprep.subr.mxu0 0.0
    %1344 = vmatpush1.msra.mxu0 0.0
    %1345 = vmatprep.subr.mxu0 0.0
    %1346 = vmatpush1.msra.mxu0 0.0
    %1347 = vmatprep.mubr.f32.mxu0 0.0
    %1348 = vmatmul.mubr.f32.gmra.mrb[0].mxu0 %v1281
    %v1349 = vpop.f32.mrb[0].mxu0
    %v1350 = vadd.f32 0.0, %v1349
    %v1351 = vpop.f32.mrb[0].mxu0
    %1352 = vdwg.mxu0
    %v1353 = vadd.f32 %v1279, %v1350
    %v1354 = vxor.u32 %v1353, 2147483648
    %v1355 = vmul.f32 %v1354, 1.442695
    %v1356 = vpow.pop %v1355
    %v1357 = vadd.f32 %v1356, 1.0
    %v1358 = vrcp.pop %v1357
    %v1359 = vmul.f32 1.0, %v1358
    %v1360 = vtanh.pop %v1353
    %1362 = vrot.lane.b32.xlu0 %v1269, 32
    %v1363 = vpop.permute.xlu0 %1362
    %v1365 = vmul.f32 %v1359, %v1363
    %1367 = vrot.lane.b32.xlu0 %v1360, 32
    %v1368 = vpop.permute.xlu0 %1367
    %v1370 = vmul.f32 %v1359, %v1368
    %1372 = vrot.lane.b32.xlu0 %v1370, 32
    %v1373 = vpop.permute.xlu0 %1372
    %v1375 = vadd.f32 %v1365, %v1373
    %v1376 = vtanh.pop %v1375
    %1378 = vrot.lane.b32.xlu0 %v1376, 32
    %v1379 = vpop.permute.xlu0 %1378
    %v1381 = vmul.f32 %v1359, %v1379
    %1383 = vrot.lane.b32.xlu0 %v1381, 64
    %v1384 = vpop.permute.xlu0 %1383
    %1386 = vrot.lane.b32.xlu0 %v1381, 96
    %v1387 = vpop.permute.xlu0 %1386
    %v1389 = vsel %vm174, %v1384, %v1387
    %v1390 = vmul.f32 %v1389, %v38
    %v1392 = vrot.slane %v1236, 2
    %v1394 = vrot.slane %v1244, 2
    %v1396 = vsel %vm164, %v1392, %v1394
    %v1398 = vsel %vm181, %v1390, 0
    %1400 = vmatprep.subr.mxu0 0.0
    %1401 = vmatpush1.msra.mxu0 %v1246
    %1402 = vmatprep.subr.mxu0 0.0
    %1403 = vmatpush1.msra.mxu0 %v1247
    %1404 = vmatprep.subr.mxu0 0.0
    %1405 = vmatpush1.msra.mxu0 %v1248
    %1406 = vmatprep.subr.mxu0 0.0
    %1407 = vmatpush1.msra.mxu0 %v1249
    %1408 = vmatprep.subr.mxu0 0.0
    %1409 = vmatpush1.msra.mxu0 %v1250
    %1410 = vmatprep.subr.mxu0 0.0
    %1411 = vmatpush1.msra.mxu0 %v1251
    %1412 = vmatprep.subr.mxu0 0.0
    %1413 = vmatpush1.msra.mxu0 %v1252
    %1414 = vmatprep.subr.mxu0 0.0
    %1415 = vmatpush1.msra.mxu0 %v1253
    %1416 = vmatprep.subr.mxu0 0.0
    %1417 = vmatpush1.msra.mxu0 0.0
    %1418 = vmatprep.subr.mxu0 0.0
    %1419 = vmatpush1.msra.mxu0 0.0
    %1420 = vmatprep.subr.mxu0 0.0
    %1421 = vmatpush1.msra.mxu0 0.0
    %1422 = vmatprep.subr.mxu0 0.0
    %1423 = vmatpush1.msra.mxu0 0.0
    %1424 = vmatprep.subr.mxu0 0.0
    %1425 = vmatpush1.msra.mxu0 0.0
    %1426 = vmatprep.subr.mxu0 0.0
    %1427 = vmatpush1.msra.mxu0 0.0
    %1428 = vmatprep.subr.mxu0 0.0
    %1429 = vmatpush1.msra.mxu0 0.0
    %1430 = vmatprep.subr.mxu0 0.0
    %1431 = vmatpush1.msra.mxu0 0.0
    %1432 = vmatprep.subr.mxu0 0.0
    %1433 = vmatpush1.msra.mxu0 0.0
    %1434 = vmatprep.subr.mxu0 0.0
    %1435 = vmatpush1.msra.mxu0 0.0
    %1436 = vmatprep.subr.mxu0 0.0
    %1437 = vmatpush1.msra.mxu0 0.0
    %1438 = vmatprep.subr.mxu0 0.0
    %1439 = vmatpush1.msra.mxu0 0.0
    %1440 = vmatprep.subr.mxu0 0.0
    %1441 = vmatpush1.msra.mxu0 0.0
    %1442 = vmatprep.subr.mxu0 0.0
    %1443 = vmatpush1.msra.mxu0 0.0
    %1444 = vmatprep.subr.mxu0 0.0
    %1445 = vmatpush1.msra.mxu0 0.0
    %1446 = vmatprep.subr.mxu0 0.0
    %1447 = vmatpush1.msra.mxu0 0.0
    %1448 = vmatprep.subr.mxu0 0.0
    %1449 = vmatpush1.msra.mxu0 0.0
    %1450 = vmatprep.subr.mxu0 0.0
    %1451 = vmatpush1.msra.mxu0 0.0
    %1452 = vmatprep.subr.mxu0 0.0
    %1453 = vmatpush1.msra.mxu0 0.0
    %1454 = vmatprep.subr.mxu0 0.0
    %1455 = vmatpush1.msra.mxu0 0.0
    %1456 = vmatprep.subr.mxu0 0.0
    %1457 = vmatpush1.msra.mxu0 0.0
    %1458 = vmatprep.subr.mxu0 0.0
    %1459 = vmatpush1.msra.mxu0 0.0
    %1460 = vmatprep.subr.mxu0 0.0
    %1461 = vmatpush1.msra.mxu0 0.0
    %1462 = vmatprep.subr.mxu0 0.0
    %1463 = vmatpush1.msra.mxu0 0.0
    %1464 = vmatprep.mubr.f32.mxu0 0.0
    %1465 = vmatmul.mubr.f32.gmra.mrb[0].mxu0 %v1398
    %v1466 = vpop.f32.mrb[0].mxu0
    %v1467 = vadd.f32 0.0, %v1466
    %v1468 = vpop.f32.mrb[0].mxu0
    %1469 = vdwg.mxu0
    %v1470 = vadd.f32 %v1396, %v1467
    %v1471 = vxor.u32 %v1470, 2147483648
    %v1472 = vmul.f32 %v1471, 1.442695
    %v1473 = vpow.pop %v1472
    %v1474 = vadd.f32 %v1473, 1.0
    %v1475 = vrcp.pop %v1474
    %v1476 = vmul.f32 1.0, %v1475
    %v1477 = vtanh.pop %v1470
    %v1478 = vmul.f32 %v1476, %v1375
    %1480 = vrot.lane.b32.xlu0 %v1477, 32
    %v1481 = vpop.permute.xlu0 %1480
    %v1483 = vmul.f32 %v1476, %v1481
    %1485 = vrot.lane.b32.xlu0 %v1483, 32
    %v1486 = vpop.permute.xlu0 %1485
    %v1488 = vadd.f32 %v1478, %v1486
    %v1489 = vtanh.pop %v1488
    %1491 = vrot.lane.b32.xlu0 %v1489, 32
    %v1492 = vpop.permute.xlu0 %1491
    %v1494 = vmul.f32 %v1476, %v1492
    %1496 = vrot.lane.b32.xlu0 %v1494, 64
    %v1497 = vpop.permute.xlu0 %1496
    %1499 = vrot.lane.b32.xlu0 %v1494, 96
    %v1500 = vpop.permute.xlu0 %1499
    %v1502 = vsel %vm174, %v1497, %v1500
    %v1503 = vmul.f32 %v1502, %v38
    %v1504 = vrot.slane %v1236, 4
    %v1506 = vsel %vm164, %v1504, %v1244
    %v1508 = vsel %vm181, %v1503, 0
    %1510 = vmatprep.subr.mxu0 0.0
    %1511 = vmatpush1.msra.mxu0 %v1246
    %1512 = vmatprep.subr.mxu0 0.0
    %1513 = vmatpush1.msra.mxu0 %v1247
    %1514 = vmatprep.subr.mxu0 0.0
    %1515 = vmatpush1.msra.mxu0 %v1248
    %1516 = vmatprep.subr.mxu0 0.0
    %1517 = vmatpush1.msra.mxu0 %v1249
    %1518 = vmatprep.subr.mxu0 0.0
    %1519 = vmatpush1.msra.mxu0 %v1250
    %1520 = vmatprep.subr.mxu0 0.0
    %1521 = vmatpush1.msra.mxu0 %v1251
    %1522 = vmatprep.subr.mxu0 0.0
    %1523 = vmatpush1.msra.mxu0 %v1252
    %1524 = vmatprep.subr.mxu0 0.0
    %1525 = vmatpush1.msra.mxu0 %v1253
    %1526 = vmatprep.subr.mxu0 0.0
    %1527 = vmatpush1.msra.mxu0 0.0
    %1528 = vmatprep.subr.mxu0 0.0
    %1529 = vmatpush1.msra.mxu0 0.0
    %1530 = vmatprep.subr.mxu0 0.0
    %1531 = vmatpush1.msra.mxu0 0.0
    %1532 = vmatprep.subr.mxu0 0.0
    %1533 = vmatpush1.msra.mxu0 0.0
    %1534 = vmatprep.subr.mxu0 0.0
    %1535 = vmatpush1.msra.mxu0 0.0
    %1536 = vmatprep.subr.mxu0 0.0
    %1537 = vmatpush1.msra.mxu0 0.0
    %1538 = vmatprep.subr.mxu0 0.0
    %1539 = vmatpush1.msra.mxu0 0.0
    %1540 = vmatprep.subr.mxu0 0.0
    %1541 = vmatpush1.msra.mxu0 0.0
    %1542 = vmatprep.subr.mxu0 0.0
    %1543 = vmatpush1.msra.mxu0 0.0
    %1544 = vmatprep.subr.mxu0 0.0
    %1545 = vmatpush1.msra.mxu0 0.0
    %1546 = vmatprep.subr.mxu0 0.0
    %1547 = vmatpush1.msra.mxu0 0.0
    %1548 = vmatprep.subr.mxu0 0.0
    %1549 = vmatpush1.msra.mxu0 0.0
    %1550 = vmatprep.subr.mxu0 0.0
    %1551 = vmatpush1.msra.mxu0 0.0
    %1552 = vmatprep.subr.mxu0 0.0
    %1553 = vmatpush1.msra.mxu0 0.0
    %1554 = vmatprep.subr.mxu0 0.0
    %1555 = vmatpush1.msra.mxu0 0.0
    %1556 = vmatprep.subr.mxu0 0.0
    %1557 = vmatpush1.msra.mxu0 0.0
    %1558 = vmatprep.subr.mxu0 0.0
    %1559 = vmatpush1.msra.mxu0 0.0
    %1560 = vmatprep.subr.mxu0 0.0
    %1561 = vmatpush1.msra.mxu0 0.0
    %1562 = vmatprep.subr.mxu0 0.0
    %1563 = vmatpush1.msra.mxu0 0.0
    %1564 = vmatprep.subr.mxu0 0.0
    %1565 = vmatpush1.msra.mxu0 0.0
    %1566 = vmatprep.subr.mxu0 0.0
    %1567 = vmatpush1.msra.mxu0 0.0
    %1568 = vmatprep.subr.mxu0 0.0
    %1569 = vmatpush1.msra.mxu0 0.0
    %1570 = vmatprep.subr.mxu0 0.0
    %1571 = vmatpush1.msra.mxu0 0.0
    %1572 = vmatprep.subr.mxu0 0.0
    %1573 = vmatpush1.msra.mxu0 0.0
    %1574 = vmatprep.mubr.f32.mxu0 0.0
    %1575 = vmatmul.mubr.f32.gmra.mrb[0].mxu0 %v1508
    %v1576 = vpop.f32.mrb[0].mxu0
    %v1577 = vadd.f32 0.0, %v1576
    %v1578 = vpop.f32.mrb[0].mxu0
    %1579 = vdwg.mxu0
    %v1580 = vadd.f32 %v1506, %v1577
    %v1581 = vxor.u32 %v1580, 2147483648
    %v1582 = vmul.f32 %v1581, 1.442695
    %v1583 = vpow.pop %v1582
    %v1584 = vadd.f32 %v1583, 1.0
    %v1585 = vrcp.pop %v1584
    %v1586 = vmul.f32 1.0, %v1585
    %v1587 = vtanh.pop %v1580
    %v1588 = vmul.f32 %v1586, %v1488
    %1590 = vrot.lane.b32.xlu0 %v1587, 32
    %v1591 = vpop.permute.xlu0 %1590
    %v1593 = vmul.f32 %v1586, %v1591
    %1595 = vrot.lane.b32.xlu0 %v1593, 32
    %v1596 = vpop.permute.xlu0 %1595
    %v1598 = vadd.f32 %v1588, %v1596
    %v1599 = vtanh.pop %v1598
    %1601 = vrot.lane.b32.xlu0 %v1599, 32
    %v1602 = vpop.permute.xlu0 %1601
    %v1604 = vmul.f32 %v1586, %v1602
    %1606 = vrot.lane.b32.xlu0 %v1604, 64
    %v1607 = vpop.permute.xlu0 %1606
    %1609 = vrot.lane.b32.xlu0 %v1604, 96
    %v1610 = vpop.permute.xlu0 %1609
    %v1612 = vsel %vm174, %v1607, %v1610
    %v1613 = vmul.f32 %v1612, %v38
    %v1614 = vrot.slane %v1236, 6
    %v1616 = vrot.slane %v1244, 6
    %v1618 = vsel %vm164, %v1614, %v1616
    %v1620 = vsel %vm181, %v1613, 0
    %1622 = vmatprep.subr.mxu0 0.0
    %1623 = vmatpush1.msra.mxu0 %v1246
    %1624 = vmatprep.subr.mxu0 0.0
    %1625 = vmatpush1.msra.mxu0 %v1247
    %1626 = vmatprep.subr.mxu0 0.0
    %1627 = vmatpush1.msra.mxu0 %v1248
    %1628 = vmatprep.subr.mxu0 0.0
    %1629 = vmatpush1.msra.mxu0 %v1249
    %1630 = vmatprep.subr.mxu0 0.0
    %1631 = vmatpush1.msra.mxu0 %v1250
    %1632 = vmatprep.subr.mxu0 0.0
    %1633 = vmatpush1.msra.mxu0 %v1251
    %1634 = vmatprep.subr.mxu0 0.0
    %1635 = vmatpush1.msra.mxu0 %v1252
    %1636 = vmatprep.subr.mxu0 0.0
    %1637 = vmatpush1.msra.mxu0 %v1253
    %1638 = vmatprep.subr.mxu0 0.0
    %1639 = vmatpush1.msra.mxu0 0.0
    %1640 = vmatprep.subr.mxu0 0.0
    %1641 = vmatpush1.msra.mxu0 0.0
    %1642 = vmatprep.subr.mxu0 0.0
    %1643 = vmatpush1.msra.mxu0 0.0
    %1644 = vmatprep.subr.mxu0 0.0
    %1645 = vmatpush1.msra.mxu0 0.0
    %1646 = vmatprep.subr.mxu0 0.0
    %1647 = vmatpush1.msra.mxu0 0.0
    %1648 = vmatprep.subr.mxu0 0.0
    %1649 = vmatpush1.msra.mxu0 0.0
    %1650 = vmatprep.subr.mxu0 0.0
    %1651 = vmatpush1.msra.mxu0 0.0
    %1652 = vmatprep.subr.mxu0 0.0
    %1653 = vmatpush1.msra.mxu0 0.0
    %1654 = vmatprep.subr.mxu0 0.0
    %1655 = vmatpush1.msra.mxu0 0.0
    %1656 = vmatprep.subr.mxu0 0.0
    %1657 = vmatpush1.msra.mxu0 0.0
    %1658 = vmatprep.subr.mxu0 0.0
    %1659 = vmatpush1.msra.mxu0 0.0
    %1660 = vmatprep.subr.mxu0 0.0
    %1661 = vmatpush1.msra.mxu0 0.0
    %1662 = vmatprep.subr.mxu0 0.0
    %1663 = vmatpush1.msra.mxu0 0.0
    %1664 = vmatprep.subr.mxu0 0.0
    %1665 = vmatpush1.msra.mxu0 0.0
    %1666 = vmatprep.subr.mxu0 0.0
    %1667 = vmatpush1.msra.mxu0 0.0
    %1668 = vmatprep.subr.mxu0 0.0
    %1669 = vmatpush1.msra.mxu0 0.0
    %1670 = vmatprep.subr.mxu0 0.0
    %1671 = vmatpush1.msra.mxu0 0.0
    %1672 = vmatprep.subr.mxu0 0.0
    %1673 = vmatpush1.msra.mxu0 0.0
    %1674 = vmatprep.subr.mxu0 0.0
    %1675 = vmatpush1.msra.mxu0 0.0
    %1676 = vmatprep.subr.mxu0 0.0
    %1677 = vmatpush1.msra.mxu0 0.0
    %1678 = vmatprep.subr.mxu0 0.0
    %1679 = vmatpush1.msra.mxu0 0.0
    %1680 = vmatprep.subr.mxu0 0.0
    %1681 = vmatpush1.msra.mxu0 0.0
    %1682 = vmatprep.subr.mxu0 0.0
    %1683 = vmatpush1.msra.mxu0 0.0
    %1684 = vmatprep.subr.mxu0 0.0
    %1685 = vmatpush1.msra.mxu0 0.0
    %1686 = vmatprep.mubr.f32.mxu0 0.0
    %1687 = vmatmul.mubr.f32.gmra.mrb[0].mxu0 %v1620
    %v1688 = vpop.f32.mrb[0].mxu0
    %v1689 = vadd.f32 0.0, %v1688
    %v1690 = vpop.f32.mrb[0].mxu0
    %1691 = vdwg.mxu0
    %v1692 = vadd.f32 %v1618, %v1689
    %v1693 = vxor.u32 %v1692, 2147483648
    %v1694 = vmul.f32 %v1693, 1.442695
    %v1695 = vpow.pop %v1694
    %v1696 = vadd.f32 %v1695, 1.0
    %v1697 = vrcp.pop %v1696
    %v1698 = vmul.f32 1.0, %v1697
    %v1699 = vtanh.pop %v1692
    %v1700 = vmul.f32 %v1698, %v1598
    %1702 = vrot.lane.b32.xlu0 %v1699, 32
    %v1703 = vpop.permute.xlu0 %1702
    %v1705 = vmul.f32 %v1698, %v1703
    %1707 = vrot.lane.b32.xlu0 %v1705, 32
    %v1708 = vpop.permute.xlu0 %1707
    %v1710 = vadd.f32 %v1700, %v1708
    %v1711 = vtanh.pop %v1710
    %1713 = vrot.lane.b32.xlu0 %v1711, 32
    %v1714 = vpop.permute.xlu0 %1713
    %v1716 = vmul.f32 %v1698, %v1714
    %1718 = vrot.lane.b32.xlu0 %v1716, 64
    %v1719 = vpop.permute.xlu0 %1718
    %1721 = vrot.lane.b32.xlu0 %v1716, 96
    %v1722 = vpop.permute.xlu0 %1721
    %v1724 = vsel %vm174, %v1719, %v1722
    %v1725 = vmul.f32 %v1724, %v38
    %v1727 = vrot.slane %v1238, 4
    %v1729 = vsel %vm164, %v1242, %v1727
    %v1731 = vsel %vm181, %v1725, 0
    %1733 = vmatprep.subr.mxu0 0.0
    %1734 = vmatpush1.msra.mxu0 %v1246
    %1735 = vmatprep.subr.mxu0 0.0
    %1736 = vmatpush1.msra.mxu0 %v1247
    %1737 = vmatprep.subr.mxu0 0.0
    %1738 = vmatpush1.msra.mxu0 %v1248
    %1739 = vmatprep.subr.mxu0 0.0
    %1740 = vmatpush1.msra.mxu0 %v1249
    %1741 = vmatprep.subr.mxu0 0.0
    %1742 = vmatpush1.msra.mxu0 %v1250
    %1743 = vmatprep.subr.mxu0 0.0
    %1744 = vmatpush1.msra.mxu0 %v1251
    %1745 = vmatprep.subr.mxu0 0.0
    %1746 = vmatpush1.msra.mxu0 %v1252
    %1747 = vmatprep.subr.mxu0 0.0
    %1748 = vmatpush1.msra.mxu0 %v1253
    %1749 = vmatprep.subr.mxu0 0.0
    %1750 = vmatpush1.msra.mxu0 0.0
    %1751 = vmatprep.subr.mxu0 0.0
    %1752 = vmatpush1.msra.mxu0 0.0
    %1753 = vmatprep.subr.mxu0 0.0
    %1754 = vmatpush1.msra.mxu0 0.0
    %1755 = vmatprep.subr.mxu0 0.0
    %1756 = vmatpush1.msra.mxu0 0.0
    %1757 = vmatprep.subr.mxu0 0.0
    %1758 = vmatpush1.msra.mxu0 0.0
    %1759 = vmatprep.subr.mxu0 0.0
    %1760 = vmatpush1.msra.mxu0 0.0
    %1761 = vmatprep.subr.mxu0 0.0
    %1762 = vmatpush1.msra.mxu0 0.0
    %1763 = vmatprep.subr.mxu0 0.0
    %1764 = vmatpush1.msra.mxu0 0.0
    %1765 = vmatprep.subr.mxu0 0.0
    %1766 = vmatpush1.msra.mxu0 0.0
    %1767 = vmatprep.subr.mxu0 0.0
    %1768 = vmatpush1.msra.mxu0 0.0
    %1769 = vmatprep.subr.mxu0 0.0
    %1770 = vmatpush1.msra.mxu0 0.0
    %1771 = vmatprep.subr.mxu0 0.0
    %1772 = vmatpush1.msra.mxu0 0.0
    %1773 = vmatprep.subr.mxu0 0.0
    %1774 = vmatpush1.msra.mxu0 0.0
    %1775 = vmatprep.subr.mxu0 0.0
    %1776 = vmatpush1.msra.mxu0 0.0
    %1777 = vmatprep.subr.mxu0 0.0
    %1778 = vmatpush1.msra.mxu0 0.0
    %1779 = vmatprep.subr.mxu0 0.0
    %1780 = vmatpush1.msra.mxu0 0.0
    %1781 = vmatprep.subr.mxu0 0.0
    %1782 = vmatpush1.msra.mxu0 0.0
    %1783 = vmatprep.subr.mxu0 0.0
    %1784 = vmatpush1.msra.mxu0 0.0
    %1785 = vmatprep.subr.mxu0 0.0
    %1786 = vmatpush1.msra.mxu0 0.0
    %1787 = vmatprep.subr.mxu0 0.0
    %1788 = vmatpush1.msra.mxu0 0.0
    %1789 = vmatprep.subr.mxu0 0.0
    %1790 = vmatpush1.msra.mxu0 0.0
    %1791 = vmatprep.subr.mxu0 0.0
    %1792 = vmatpush1.msra.mxu0 0.0
    %1793 = vmatprep.subr.mxu0 0.0
    %1794 = vmatpush1.msra.mxu0 0.0
    %1795 = vmatprep.subr.mxu0 0.0
    %1796 = vmatpush1.msra.mxu0 0.0
    %1797 = vmatprep.mubr.f32.mxu0 0.0
    %1798 = vmatmul.mubr.f32.gmra.mrb[0].mxu0 %v1731
    %v1799 = vpop.f32.mrb[0].mxu0
    %v1800 = vadd.f32 0.0, %v1799
    %v1801 = vpop.f32.mrb[0].mxu0
    %1802 = vdwg.mxu0
    %v1803 = vadd.f32 %v1729, %v1800
    %v1804 = vxor.u32 %v1803, 2147483648
    %v1805 = vmul.f32 %v1804, 1.442695
    %v1806 = vpow.pop %v1805
    %v1807 = vadd.f32 %v1806, 1.0
    %v1808 = vrcp.pop %v1807
    %v1809 = vmul.f32 1.0, %v1808
    %v1810 = vtanh.pop %v1803
    %v1811 = vmul.f32 %v1809, %v1710
    %1813 = vrot.lane.b32.xlu0 %v1810, 32
    %v1814 = vpop.permute.xlu0 %1813
    %v1816 = vmul.f32 %v1809, %v1814
    %1818 = vrot.lane.b32.xlu0 %v1816, 32
    %v1819 = vpop.permute.xlu0 %1818
    %v1821 = vadd.f32 %v1811, %v1819
    %v1822 = vtanh.pop %v1821
    %1824 = vrot.lane.b32.xlu0 %v1822, 32
    %v1825 = vpop.permute.xlu0 %1824
    %v1827 = vmul.f32 %v1809, %v1825
    %1829 = vrot.lane.b32.xlu0 %v1827, 64
    %v1830 = vpop.permute.xlu0 %1829
    %1832 = vrot.lane.b32.xlu0 %v1827, 96
    %v1833 = vpop.permute.xlu0 %1832
    %v1835 = vsel %vm174, %v1830, %v1833
    %v1836 = vmul.f32 %v1835, %v38
    %v1838 = vrot.slane %v1242, 2
    %v1840 = vrot.slane %v1238, 2
    %v1842 = vsel %vm164, %v1838, %v1840
    %v1844 = vsel %vm181, %v1836, 0
    %1846 = vmatprep.subr.mxu0 0.0
    %1847 = vmatpush1.msra.mxu0 %v1246
    %1848 = vmatprep.subr.mxu0 0.0
    %1849 = vmatpush1.msra.mxu0 %v1247
    %1850 = vmatprep.subr.mxu0 0.0
    %1851 = vmatpush1.msra.mxu0 %v1248
    %1852 = vmatprep.subr.mxu0 0.0
    %1853 = vmatpush1.msra.mxu0 %v1249
    %1854 = vmatprep.subr.mxu0 0.0
    %1855 = vmatpush1.msra.mxu0 %v1250
    %1856 = vmatprep.subr.mxu0 0.0
    %1857 = vmatpush1.msra.mxu0 %v1251
    %1858 = vmatprep.subr.mxu0 0.0
    %1859 = vmatpush1.msra.mxu0 %v1252
    %1860 = vmatprep.subr.mxu0 0.0
    %1861 = vmatpush1.msra.mxu0 %v1253
    %1862 = vmatprep.subr.mxu0 0.0
    %1863 = vmatpush1.msra.mxu0 0.0
    %1864 = vmatprep.subr.mxu0 0.0
    %1865 = vmatpush1.msra.mxu0 0.0
    %1866 = vmatprep.subr.mxu0 0.0
    %1867 = vmatpush1.msra.mxu0 0.0
    %1868 = vmatprep.subr.mxu0 0.0
    %1869 = vmatpush1.msra.mxu0 0.0
    %1870 = vmatprep.subr.mxu0 0.0
    %1871 = vmatpush1.msra.mxu0 0.0
    %1872 = vmatprep.subr.mxu0 0.0
    %1873 = vmatpush1.msra.mxu0 0.0
    %1874 = vmatprep.subr.mxu0 0.0
    %1875 = vmatpush1.msra.mxu0 0.0
    %1876 = vmatprep.subr.mxu0 0.0
    %1877 = vmatpush1.msra.mxu0 0.0
    %1878 = vmatprep.subr.mxu0 0.0
    %1879 = vmatpush1.msra.mxu0 0.0
    %1880 = vmatprep.subr.mxu0 0.0
    %1881 = vmatpush1.msra.mxu0 0.0
    %1882 = vmatprep.subr.mxu0 0.0
    %1883 = vmatpush1.msra.mxu0 0.0
    %1884 = vmatprep.subr.mxu0 0.0
    %1885 = vmatpush1.msra.mxu0 0.0
    %1886 = vmatprep.subr.mxu0 0.0
    %1887 = vmatpush1.msra.mxu0 0.0
    %1888 = vmatprep.subr.mxu0 0.0
    %1889 = vmatpush1.msra.mxu0 0.0
    %1890 = vmatprep.subr.mxu0 0.0
    %1891 = vmatpush1.msra.mxu0 0.0
    %1892 = vmatprep.subr.mxu0 0.0
    %1893 = vmatpush1.msra.mxu0 0.0
    %1894 = vmatprep.subr.mxu0 0.0
    %1895 = vmatpush1.msra.mxu0 0.0
    %1896 = vmatprep.subr.mxu0 0.0
    %1897 = vmatpush1.msra.mxu0 0.0
    %1898 = vmatprep.subr.mxu0 0.0
    %1899 = vmatpush1.msra.mxu0 0.0
    %1900 = vmatprep.subr.mxu0 0.0
    %1901 = vmatpush1.msra.mxu0 0.0
    %1902 = vmatprep.subr.mxu0 0.0
    %1903 = vmatpush1.msra.mxu0 0.0
    %1904 = vmatprep.subr.mxu0 0.0
    %1905 = vmatpush1.msra.mxu0 0.0
    %1906 = vmatprep.subr.mxu0 0.0
    %1907 = vmatpush1.msra.mxu0 0.0
    %1908 = vmatprep.subr.mxu0 0.0
    %1909 = vmatpush1.msra.mxu0 0.0
    %1910 = vmatprep.mubr.f32.mxu0 0.0
    %1911 = vmatmul.mubr.f32.gmra.mrb[0].mxu0 %v1844
    %v1912 = vpop.f32.mrb[0].mxu0
    %v1913 = vadd.f32 0.0, %v1912
    %v1914 = vpop.f32.mrb[0].mxu0
    %1915 = vdwg.mxu0
    %v1916 = vadd.f32 %v1842, %v1913
    %v1917 = vxor.u32 %v1916, 2147483648
    %v1918 = vmul.f32 %v1917, 1.442695
    %v1919 = vpow.pop %v1918
    %v1920 = vadd.f32 %v1919, 1.0
    %v1921 = vrcp.pop %v1920
    %v1922 = vmul.f32 1.0, %v1921
    %v1923 = vtanh.pop %v1916
    %v1924 = vmul.f32 %v1922, %v1821
    %1926 = vrot.lane.b32.xlu0 %v1923, 32
    %v1927 = vpop.permute.xlu0 %1926
    %v1929 = vmul.f32 %v1922, %v1927
    %1931 = vrot.lane.b32.xlu0 %v1929, 32
    %v1932 = vpop.permute.xlu0 %1931
    %v1934 = vadd.f32 %v1924, %v1932
    %v1935 = vtanh.pop %v1934
    %1937 = vrot.lane.b32.xlu0 %v1935, 32
    %v1938 = vpop.permute.xlu0 %1937
    %v1940 = vmul.f32 %v1922, %v1938
    %1942 = vrot.lane.b32.xlu0 %v1940, 64
    %v1943 = vpop.permute.xlu0 %1942
    %1945 = vrot.lane.b32.xlu0 %v1940, 96
    %v1946 = vpop.permute.xlu0 %1945
    %v1948 = vsel %vm174, %v1943, %v1946
    %v1949 = vmul.f32 %v1948, %v38
    %v1950 = vrot.slane %v1242, 4
    %v1952 = vsel %vm164, %v1950, %v1238
    %v1954 = vsel %vm181, %v1949, 0
    %1956 = vmatprep.subr.mxu0 0.0
    %1957 = vmatpush1.msra.mxu0 %v1246
    %1958 = vmatprep.subr.mxu0 0.0
    %1959 = vmatpush1.msra.mxu0 %v1247
    %1960 = vmatprep.subr.mxu0 0.0
    %1961 = vmatpush1.msra.mxu0 %v1248
    %1962 = vmatprep.subr.mxu0 0.0
    %1963 = vmatpush1.msra.mxu0 %v1249
    %1964 = vmatprep.subr.mxu0 0.0
    %1965 = vmatpush1.msra.mxu0 %v1250
    %1966 = vmatprep.subr.mxu0 0.0
    %1967 = vmatpush1.msra.mxu0 %v1251
    %1968 = vmatprep.subr.mxu0 0.0
    %1969 = vmatpush1.msra.mxu0 %v1252
    %1970 = vmatprep.subr.mxu0 0.0
    %1971 = vmatpush1.msra.mxu0 %v1253
    %1972 = vmatprep.subr.mxu0 0.0
    %1973 = vmatpush1.msra.mxu0 0.0
    %1974 = vmatprep.subr.mxu0 0.0
    %1975 = vmatpush1.msra.mxu0 0.0
    %1976 = vmatprep.subr.mxu0 0.0
    %1977 = vmatpush1.msra.mxu0 0.0
    %1978 = vmatprep.subr.mxu0 0.0
    %1979 = vmatpush1.msra.mxu0 0.0
    %1980 = vmatprep.subr.mxu0 0.0
    %1981 = vmatpush1.msra.mxu0 0.0
    %1982 = vmatprep.subr.mxu0 0.0
    %1983 = vmatpush1.msra.mxu0 0.0
    %1984 = vmatprep.subr.mxu0 0.0
    %1985 = vmatpush1.msra.mxu0 0.0
    %1986 = vmatprep.subr.mxu0 0.0
    %1987 = vmatpush1.msra.mxu0 0.0
    %1988 = vmatprep.subr.mxu0 0.0
    %1989 = vmatpush1.msra.mxu0 0.0
    %1990 = vmatprep.subr.mxu0 0.0
    %1991 = vmatpush1.msra.mxu0 0.0
    %1992 = vmatprep.subr.mxu0 0.0
    %1993 = vmatpush1.msra.mxu0 0.0
    %1994 = vmatprep.subr.mxu0 0.0
    %1995 = vmatpush1.msra.mxu0 0.0
    %1996 = vmatprep.subr.mxu0 0.0
    %1997 = vmatpush1.msra.mxu0 0.0
    %1998 = vmatprep.subr.mxu0 0.0
    %1999 = vmatpush1.msra.mxu0 0.0
    %2000 = vmatprep.subr.mxu0 0.0
    %2001 = vmatpush1.msra.mxu0 0.0
    %2002 = vmatprep.subr.mxu0 0.0
    %2003 = vmatpush1.msra.mxu0 0.0
    %2004 = vmatprep.subr.mxu0 0.0
    %2005 = vmatpush1.msra.mxu0 0.0
    %2006 = vmatprep.subr.mxu0 0.0
    %2007 = vmatpush1.msra.mxu0 0.0
    %2008 = vmatprep.subr.mxu0 0.0
    %2009 = vmatpush1.msra.mxu0 0.0
    %2010 = vmatprep.subr.mxu0 0.0
    %2011 = vmatpush1.msra.mxu0 0.0
    %2012 = vmatprep.subr.mxu0 0.0
    %2013 = vmatpush1.msra.mxu0 0.0
    %2014 = vmatprep.subr.mxu0 0.0
    %2015 = vmatpush1.msra.mxu0 0.0
    %2016 = vmatprep.subr.mxu0 0.0
    %2017 = vmatpush1.msra.mxu0 0.0
    %2018 = vmatprep.subr.mxu0 0.0
    %2019 = vmatpush1.msra.mxu0 0.0
    %2020 = vmatprep.mubr.f32.mxu0 0.0
    %2021 = vmatmul.mubr.f32.gmra.mrb[0].mxu0 %v1954
    %v2022 = vpop.f32.mrb[0].mxu0
    %v2023 = vadd.f32 0.0, %v2022
    %v2024 = vpop.f32.mrb[0].mxu0
    %2025 = vdwg.mxu0
    %v2026 = vadd.f32 %v1952, %v2023
    %v2027 = vxor.u32 %v2026, 2147483648
    %v2028 = vmul.f32 %v2027, 1.442695
    %v2029 = vpow.pop %v2028
    %v2030 = vadd.f32 %v2029, 1.0
    %v2031 = vrcp.pop %v2030
    %v2032 = vmul.f32 1.0, %v2031
    %v2033 = vtanh.pop %v2026
    %v2034 = vmul.f32 %v2032, %v1934
    %2036 = vrot.lane.b32.xlu0 %v2033, 32
    %v2037 = vpop.permute.xlu0 %2036
    %v2039 = vmul.f32 %v2032, %v2037
    %2041 = vrot.lane.b32.xlu0 %v2039, 32
    %v2042 = vpop.permute.xlu0 %2041
    %v2044 = vadd.f32 %v2034, %v2042
    %v2045 = vtanh.pop %v2044
    %2047 = vrot.lane.b32.xlu0 %v2045, 32
    %v2048 = vpop.permute.xlu0 %2047
    %v2050 = vmul.f32 %v2032, %v2048
    %2052 = vrot.lane.b32.xlu0 %v2050, 64
    %v2053 = vpop.permute.xlu0 %2052
    %2055 = vrot.lane.b32.xlu0 %v2050, 96
    %v2056 = vpop.permute.xlu0 %2055
    %v2058 = vsel %vm174, %v2053, %v2056
    %v2059 = vmul.f32 %v2058, %v38
    %v2060 = vrot.slane %v1242, 6
    %v2062 = vrot.slane %v1238, 6
    %v2064 = vsel %vm164, %v2060, %v2062
    %v2066 = vsel %vm181, %v2059, 0
    %2068 = vmatprep.subr.mxu0 0.0
    %2069 = vmatpush1.msra.mxu0 %v1246
    %2070 = vmatprep.subr.mxu0 0.0
    %2071 = vmatpush1.msra.mxu0 %v1247
    %2072 = vmatprep.subr.mxu0 0.0
    %2073 = vmatpush1.msra.mxu0 %v1248
    %2074 = vmatprep.subr.mxu0 0.0
    %2075 = vmatpush1.msra.mxu0 %v1249
    %2076 = vmatprep.subr.mxu0 0.0
    %2077 = vmatpush1.msra.mxu0 %v1250
    %2078 = vmatprep.subr.mxu0 0.0
    %2079 = vmatpush1.msra.mxu0 %v1251
    %2080 = vmatprep.subr.mxu0 0.0
    %2081 = vmatpush1.msra.mxu0 %v1252
    %2082 = vmatprep.subr.mxu0 0.0
    %2083 = vmatpush1.msra.mxu0 %v1253
    %2084 = vmatprep.subr.mxu0 0.0
    %2085 = vmatpush1.msra.mxu0 0.0
    %2086 = vmatprep.subr.mxu0 0.0
    %2087 = vmatpush1.msra.mxu0 0.0
    %2088 = vmatprep.subr.mxu0 0.0
    %2089 = vmatpush1.msra.mxu0 0.0
    %2090 = vmatprep.subr.mxu0 0.0
    %2091 = vmatpush1.msra.mxu0 0.0
    %2092 = vmatprep.subr.mxu0 0.0
    %2093 = vmatpush1.msra.mxu0 0.0
    %2094 = vmatprep.subr.mxu0 0.0
    %2095 = vmatpush1.msra.mxu0 0.0
    %2096 = vmatprep.subr.mxu0 0.0
    %2097 = vmatpush1.msra.mxu0 0.0
    %2098 = vmatprep.subr.mxu0 0.0
    %2099 = vmatpush1.msra.mxu0 0.0
    %2100 = vmatprep.subr.mxu0 0.0
    %2101 = vmatpush1.msra.mxu0 0.0
    %2102 = vmatprep.subr.mxu0 0.0
    %2103 = vmatpush1.msra.mxu0 0.0
    %2104 = vmatprep.subr.mxu0 0.0
    %2105 = vmatpush1.msra.mxu0 0.0
    %2106 = vmatprep.subr.mxu0 0.0
    %2107 = vmatpush1.msra.mxu0 0.0
    %2108 = vmatprep.subr.mxu0 0.0
    %2109 = vmatpush1.msra.mxu0 0.0
    %2110 = vmatprep.subr.mxu0 0.0
    %2111 = vmatpush1.msra.mxu0 0.0
    %2112 = vmatprep.subr.mxu0 0.0
    %2113 = vmatpush1.msra.mxu0 0.0
    %2114 = vmatprep.subr.mxu0 0.0
    %2115 = vmatpush1.msra.mxu0 0.0
    %2116 = vmatprep.subr.mxu0 0.0
    %2117 = vmatpush1.msra.mxu0 0.0
    %2118 = vmatprep.subr.mxu0 0.0
    %2119 = vmatpush1.msra.mxu0 0.0
    %2120 = vmatprep.subr.mxu0 0.0
    %2121 = vmatpush1.msra.mxu0 0.0
    %2122 = vmatprep.subr.mxu0 0.0
    %2123 = vmatpush1.msra.mxu0 0.0
    %2124 = vmatprep.subr.mxu0 0.0
    %2125 = vmatpush1.msra.mxu0 0.0
    %2126 = vmatprep.subr.mxu0 0.0
    %2127 = vmatpush1.msra.mxu0 0.0
    %2128 = vmatprep.subr.mxu0 0.0
    %2129 = vmatpush1.msra.mxu0 0.0
    %2130 = vmatprep.subr.mxu0 0.0
    %2131 = vmatpush1.msra.mxu0 0.0
    %2132 = vmatprep.mubr.f32.mxu0 0.0
    %2133 = vmatmul.mubr.f32.gmra.mrb[0].mxu0 %v2066
    %v2134 = vpop.f32.mrb[0].mxu0
    %v2135 = vadd.f32 0.0, %v2134
    %v2136 = vpop.f32.mrb[0].mxu0
    %2137 = vdwg.mxu0
    %v2138 = vadd.f32 %v2064, %v2135
    %v2139 = vxor.u32 %v2138, 2147483648
    %v2140 = vmul.f32 %v2139, 1.442695
    %v2141 = vpow.pop %v2140
    %v2142 = vadd.f32 %v2141, 1.0
    %v2143 = vrcp.pop %v2142
    %v2144 = vmul.f32 1.0, %v2143
    %v2145 = vtanh.pop %v2138
    %v2146 = vmul.f32 %v2144, %v2044
    %2148 = vrot.lane.b32.xlu0 %v2145, 32
    %v2149 = vpop.permute.xlu0 %2148
    %v2151 = vmul.f32 %v2144, %v2149
    %2153 = vrot.lane.b32.xlu0 %v2151, 32
    %v2154 = vpop.permute.xlu0 %2153
    %v2156 = vadd.f32 %v2146, %v2154
    %v2157 = vtanh.pop %v2156
    %2159 = vrot.lane.b32.xlu0 %v2157, 32
    %v2160 = vpop.permute.xlu0 %2159
    %v2162 = vmul.f32 %v2144, %v2160
    %v2164 = vrot.slane %v2162, 2
    %2165 = vrot.lane.b32.xlu0 %v2164, 96
    %v2166 = vpop.permute.xlu0 %2165
    %v2168 = vsel %vm174, %v1384, %v2166
    %v2169 = vrot.slane %v2050, 2
    %2170 = vrot.lane.b32.xlu0 %v2169, 96
    %v2171 = vpop.permute.xlu0 %2170
    %v2173 = vsel %vm174, %v1497, %v2171
    %v2174 = vrot.slane %v1940, 2
    %2175 = vrot.lane.b32.xlu0 %v2174, 96
    %v2176 = vpop.permute.xlu0 %2175
    %v2178 = vsel %vm174, %v1607, %v2176
    %v2179 = vrot.slane %v1827, 2
    %2180 = vrot.lane.b32.xlu0 %v2179, 96
    %v2181 = vpop.permute.xlu0 %2180
    %v2183 = vsel %vm174, %v1719, %v2181
    %v2184 = vrot.slane %v1716, 2
    %2185 = vrot.lane.b32.xlu0 %v2184, 96
    %v2186 = vpop.permute.xlu0 %2185
    %v2188 = vsel %vm174, %v1830, %v2186
    %v2189 = vrot.slane %v1604, 2
    %2190 = vrot.lane.b32.xlu0 %v2189, 96
    %v2191 = vpop.permute.xlu0 %2190
    %v2193 = vsel %vm174, %v1943, %v2191
    %v2194 = vrot.slane %v1494, 2
    %2195 = vrot.lane.b32.xlu0 %v2194, 96
    %v2196 = vpop.permute.xlu0 %2195
    %v2198 = vsel %vm174, %v2053, %v2196
    %2199 = vrot.lane.b32.xlu0 %v2162, 64
    %v2200 = vpop.permute.xlu0 %2199
    %v2202 = vrot.slane %v1381, 2
    %2203 = vrot.lane.b32.xlu0 %v2202, 96
    %v2204 = vpop.permute.xlu0 %2203
    %v2206 = vsel %vm174, %v2200, %v2204
    %v2208 = vrot.slane %v2168, 1
    %2209 = vrot.lane.b32.xlu0 %v2208, 64
    %v2210 = vpop.permute.xlu0 %2209
    %v2212 = vsel %vm181, %v2168, %v2210
    %v2214 = vrot.slane %v2173, 1
    %2215 = vrot.lane.b32.xlu0 %v2214, 64
    %v2216 = vpop.permute.xlu0 %2215
    %v2218 = vsel %vm181, %v2173, %v2216
    %v2220 = vrot.slane %v2178, 1
    %2221 = vrot.lane.b32.xlu0 %v2220, 64
    %v2222 = vpop.permute.xlu0 %2221
    %v2224 = vsel %vm181, %v2178, %v2222
    %v2226 = vrot.slane %v2183, 1
    %2227 = vrot.lane.b32.xlu0 %v2226, 64
    %v2228 = vpop.permute.xlu0 %2227
    %v2230 = vsel %vm181, %v2183, %v2228
    %v2232 = vrot.slane %v2188, 1
    %2233 = vrot.lane.b32.xlu0 %v2232, 64
    %v2234 = vpop.permute.xlu0 %2233
    %v2236 = vsel %vm181, %v2188, %v2234
    %v2238 = vrot.slane %v2193, 1
    %2239 = vrot.lane.b32.xlu0 %v2238, 64
    %v2240 = vpop.permute.xlu0 %2239
    %v2242 = vsel %vm181, %v2193, %v2240
    %v2244 = vrot.slane %v2198, 1
    %2245 = vrot.lane.b32.xlu0 %v2244, 64
    %v2246 = vpop.permute.xlu0 %2245
    %v2248 = vsel %vm181, %v2198, %v2246
    %v2250 = vrot.slane %v2206, 1
    %2251 = vrot.lane.b32.xlu0 %v2250, 64
    %v2252 = vpop.permute.xlu0 %2251
    %v2254 = vsel %vm181, %v2206, %v2252
    %v2256 = vrot.slane %v2218, 7
    %v2259 = vrot.slane %v2224, 6
    %v2262 = vrot.slane %v2230, 5
    %v2265 = vrot.slane %v2236, 4
    %v2268 = vrot.slane %v2242, 3
    %v2271 = vrot.slane %v2248, 2
    %v2274 = vrot.slane %v2254, 1
    %vm2276 = vcmask 1040384
    %v2277 = vsel %vm2276, %v2212, %v2256
    %v2278 = vsel %vm164, %v2277, %v2259
    %vm2279 = vcmask 1042432
    %v2280 = vsel %vm2279, %v2278, %v2262
    %v2281 = vsel %vm62, %v2280, %v2265
    %vm2282 = vcmask 1044480
    %v2283 = vsel %vm2282, %v2281, %v2268
    %v2284 = vsel %vm1129, %v2283, %v2271
    %vm2285 = vcmask 1046528
    %v2286 = vsel %vm2285, %v2284, %v2274
    %2287 = vst [vmem:[%s6] sm:$0xff] %v2286
    %v2288 = vld [vmem:[%s4 + $0x2] sm:$0x1]
    %v2290 = vlaneseq
    %v2291 = vshrl.u32 %v2290, 7
    %v2292 = vsub.s32 0, %v2291
    %v2293 = vrot.slane %v2288, %v2292
    %2294 = vrot.lane.b32.xlu0 %v2293, 64
    %v2295 = vpop.permute.xlu0 %2294
    %v2297 = vsel %vm181, %v2288, %v2295
    %v2298 = vlaneseq
    %v2299 = vshrl.u32 %v2298, 7
    %v2300 = vsub.s32 0, %v2299
    %v2301 = vrot.slane %v2297, %v2300
    %v2302 = vmul.f32 %v2286, %v2301
    %v2303 = vsel %vm181, %v2302, 0.0
    %2304 = vadd.xlane.f32.xlu0 %v2303
    %v2305 = vpop.xlane.xlu0 %2304
    %2307 = vrot.lane.b32.xlu0 %v2302, 64
    %v2308 = vpop.permute.xlu0 %2307
    %v2310 = vsel %vm181, %v2308, 0.0
    %2311 = vadd.xlane.f32.xlu0 %v2310
    %v2312 = vpop.xlane.xlu0 %2311
    %vm2313 = vcmask 7168
    %v2314 = vsel %vm2313, %v2305, %v2312
    %s2315 = vtos %v2295
    %v2316 = vstv %s2315
    %v2318 = vadd.f32 %v2314, %v2316
    %v2319 = vxor.u32 %v2318, 2147483648
    %v2320 = vmul.f32 %v2319, 1.442695
    %v2321 = vpow.pop %v2320
    %v2322 = vadd.f32 %v2321, 1.0
    %v2323 = vrcp.pop %v2322
    %v2324 = vmul.f32 1.0, %v2323
    %vm2325 = vcmask 15360
    %v2326 = vsel %vm2325, %v2324, 0.0
    %v2327 = vrot.slane %v2326, 4
    %v2328 = vadd.f32 %v2326, %v2327
    %v2329 = vrot.slane %v2328, 2
    %v2330 = vadd.f32 %v2328, %v2329
    %v2331 = vrot.slane %v2330, 1
    %v2332 = vadd.f32 %v2330, %v2331
    %v2333 = vmul.f32 %v2332, 0.125
    %vm2334 = vcmask 8192
    %2335 = vst.msk [vmem:[#allocation2] sm:$0x1] %vm2334, %v2333
    %v2336 = vrot.slane %v1064, 1
    %2337 = vrot.lane.b32.xlu0 %v2336, 96
    %v2338 = vpop.permute.xlu0 %2337
    %v2340 = vsel %vm174, %v1102, %v2338
    %2342 = vrot.lane.b32.xlu0 %v1058, 96
    %v2343 = vpop.permute.xlu0 %2342
    %v2345 = vrot.slane %v1058, 1
    %v2347 = vsel %vm174, %v2343, %v2345
    %2349 = vrot.lane.b32.xlu0 %v2347, 64
    %v2350 = vpop.permute.xlu0 %2349
    %v2352 = vsel %vm181, %v2340, %v2350
    %v2353 = vrot.slane %v2162, 1
    %2354 = vrot.lane.b32.xlu0 %v2353, 96
    %v2355 = vpop.permute.xlu0 %2354
    %v2357 = vsel %vm174, %v2200, %v2355
    %2359 = vrot.lane.b32.xlu0 %v2156, 96
    %v2360 = vpop.permute.xlu0 %2359
    %v2362 = vrot.slane %v2156, 1
    %v2364 = vsel %vm174, %v2360, %v2362
    %2366 = vrot.lane.b32.xlu0 %v2364, 64
    %v2367 = vpop.permute.xlu0 %2366
    %v2369 = vsel %vm181, %v2357, %v2367
    %v2371 = vrot.slane %v2352, 1
    %v2374 = vrot.slane %v2369, 6
    %v2376 = vrot.slane %v2369, 7
    %v2378 = vsel %vm2276, %v2352, %v2371
    %v2379 = vsel %vm164, %v2378, %v2374
    %v2380 = vsel %vm2279, %v2379, %v2376
    %2381 = vst [vmem:[%s7] sm:$0xf] %v2380
    // Predicated region
    $region22: #{discriminator_crnn_forward.1} parent=1 // pred_check
      _
    $region23: #{discriminator_crnn_forward.1} parent=1 // pred_check_branch
      %2383 = sbr.rel (0) target = $region25
    $region24: #{discriminator_crnn_forward.1} parent=1 // pred_region
      %s2385 = ssub.s32 16, 16
      %2386 = vsyncadd [#allocation3], %s2385
      %s2388 = sshll.u32 [#allocation2], 4
      %s2389 = int_to_ptr.vmem [resolvable:$true] %s2388
      %2391 = dma.vmem_to_hbm [thread:$0]  %s2389, 16, %s5, [#allocation3]
    $region25: #{discriminator_crnn_forward.1} parent=1 // pred_fallthru
      _
    // Predicated region
    $region26: #{discriminator_crnn_forward.1} parent=1 // pred_check
      _
    $region27: #{discriminator_crnn_forward.1} parent=1 // pred_check_branch
      %2393 = sbr.rel (0) target = $region29
    $region28: #{discriminator_crnn_forward.1} parent=1 // pred_region
      _
    $region29: #{discriminator_crnn_forward.1} parent=1 // pred_fallthru
      _
    // Predicated region
    $region30: #{discriminator_crnn_forward.1} parent=1 // pred_check
      _
    $region31: #{discriminator_crnn_forward.1} parent=1 // pred_check_branch
      %2395 = sbr.rel (0) target = $region33
    $region32: #{discriminator_crnn_forward.1} parent=1 // pred_region
      _
    $region33: #{discriminator_crnn_forward.1} parent=1 // pred_fallthru
      _
    // Predicated region
    $region34: #{discriminator_crnn_forward.1} parent=1 // pred_check
      _
    $region35: #{discriminator_crnn_forward.1} parent=1 // pred_check_branch
      %2397 = sbr.rel (0) target = $region37
    $region36: #{discriminator_crnn_forward.1} parent=1 // pred_region
      %2398 = dma.done [#allocation3], 16
    $region37: #{discriminator_crnn_forward.1} parent=1 // pred_fallthru
      _
    // Predicated region
    $region38: #{discriminator_crnn_forward.1} parent=1 // pred_check
      _
    $region39: #{discriminator_crnn_forward.1} parent=1 // pred_check_branch
      %2400 = sbr.rel (0) target = $region41
    $region40: #{discriminator_crnn_forward.1} parent=1 // pred_region
      _
    $region41: #{discriminator_crnn_forward.1} parent=1 // pred_fallthru
      _
    // Predicated region
    $region42: #{discriminator_crnn_forward.1} parent=1 // pred_check
      _
    $region43: #{discriminator_crnn_forward.1} parent=1 // pred_check_branch
      %2402 = sbr.rel (0) target = $region45
    $region44: #{discriminator_crnn_forward.1} parent=1 // pred_region
      _
    $region45: #{discriminator_crnn_forward.1} parent=1 // pred_fallthru
      _
    %2403 = vsyncpa [#allocation3], 1

</llo_original>
